<compile_context>
chip_gen: v7x
topology: tpu7x:2x2x1
jax: 0.10.0
libtpu: 0.0.40
codegen_flags: <defaults>
</compile_context>

<pallas_src>
import math

import jax
import jax.numpy as jnp
from jax.experimental import pallas as pl
from jax.experimental.pallas import tpu as pltpu

# ---------------- model hyper-parameters (small, consistent with the module) ----
D_MODEL = 32
N_HEADS = 4
D_HEAD = D_MODEL // N_HEADS
D_FF = 64
NUM_CLASSES = 16
MAX_TOKEN_LEN = 16
NUM_LAYERS = 2
LN_EPS = 1e-5
LANE = 128  # TPU lane width; logits output is padded to a multiple of this


# ---------------- in-kernel helpers ---------------------------------------------
def _layer_norm(x, gamma, beta):
    mean = jnp.mean(x, axis=-1, keepdims=True)
    var = jnp.mean((x - mean) ** 2, axis=-1, keepdims=True)
    return (x - mean) * jax.lax.rsqrt(var + LN_EPS) * gamma + beta


def _softmax_rows(s):
    s = s - jnp.max(s, axis=-1, keepdims=True)
    p = jnp.exp(s)
    return p * pl.reciprocal(jnp.sum(p, axis=-1, keepdims=True), approx=True)


# ---------------- fused per-example forward kernel -------------------------------
def fwd_kernel(seq_ref, emb_ref, pos_ref,
               wq_ref, wk_ref, wv_ref, bqkv_ref,
               wo_ref, wff1_ref, bff1_ref, wff2_ref, vecd_ref,
               hvec_ref, hw_ref,
               feat_ref, logits_ref):
    S = seq_ref.shape[1]                      # tokens of this example
    C = emb_ref.shape[0]                      # num classes
    L, H, _, Dh = wq_ref.shape                # layers, heads, d_model, d_head
    mm_dtype = wq_ref.dtype                   # matmul operand dtype (f32 or bf16)
    scale = 1.0 / math.sqrt(Dh)

    # ---- embedding gather as one-hot matmul + broadcast positional add ----------
    seq = seq_ref[0]                                                # (S, 1) int32
    lane_ids = jax.lax.broadcasted_iota(jnp.int32, (S, C), 1)
    onehot = (seq == lane_ids).astype(jnp.float32)                  # (S, C)
    h = jnp.dot(onehot, emb_ref[...],
                preferred_element_type=jnp.float32) + pos_ref[...]  # (S, D)
    # Dropout(0.1): identity in eval mode.

    # ---- post-LN transformer encoder layers (static unroll) ---------------------
    for l in range(L):
        vec = vecd_ref[l]            # (6, D): [b_o, ln1_g, ln1_b, b_ff2, ln2_g, ln2_b]
        h_mm = h.astype(mm_dtype)

        ctx_heads = []
        for hd in range(H):          # static unroll over heads, no lane extracts
            b3 = bqkv_ref[l, hd]     # (3, Dh): [b_q, b_k, b_v]
            qh = jnp.dot(h_mm, wq_ref[l, hd],
                         preferred_element_type=jnp.float32) + b3[0:1]    # (S, Dh)
            kh = jnp.dot(h_mm, wk_ref[l, hd],
                         preferred_element_type=jnp.float32) + b3[1:2]
            vh = jnp.dot(h_mm, wv_ref[l, hd],
                         preferred_element_type=jnp.float32) + b3[2:3]
            # per-example attention: lookahead=True -> full bidirectional, no mask
            s = pl.dot(qh, kh, trans_b=True) * scale                       # (S, S)
            p = _softmax_rows(s)
            ctx_heads.append(jnp.dot(p, vh,
                                     preferred_element_type=jnp.float32))  # (S, Dh)

        ctx = jnp.concatenate(ctx_heads, axis=-1)                          # (S, D)
        attn = jnp.dot(ctx.astype(mm_dtype), wo_ref[l],
                       preferred_element_type=jnp.float32) + vec[0:1]

        h1 = _layer_norm(h + attn, vec[1:2], vec[2:3])
        ff = jnp.dot(h1.astype(mm_dtype), wff1_ref[l],
                     preferred_element_type=jnp.float32) + bff1_ref[l]
        ff = jnp.maximum(ff, 0.0)
        ff = jnp.dot(ff.astype(mm_dtype), wff2_ref[l],
                     preferred_element_type=jnp.float32) + vec[3:4]
        h = _layer_norm(h1 + ff, vec[4:5], vec[5:6])

    # ---- outputs: backbone features + head (LayerNorm + Linear, no bias) --------
    feat_ref[0] = h
    hn = _layer_norm(h, hvec_ref[0:1], hvec_ref[1:2])
    # head_w is lane-padded with zero columns -> dense (S, 128) store
    logits_ref[0] = jnp.dot(hn.astype(mm_dtype), hw_ref[...],
                            preferred_element_type=jnp.float32)


# ---------------- wrapper ---------------------------------------------------------
def _default_matmul_dtype():
    """bf16 matmul operands on bf16-native 256-wide MXUs (v6e / v7x); f32 elsewhere."""
    try:
        kind = jax.devices()[0].device_kind.lower()
    except Exception:
        return jnp.float32
    if ('v6' in kind) or ('v7' in kind) or ('7x' in kind):
        return jnp.bfloat16
    return jnp.float32


def categorical_transformer_forward(seq, params, matmul_dtype=None):
    """seq: (B, S) int32 -> {'logits': (B, S, C), 'feat': (B, S, D)}"""
    if matmul_dtype is None:
        matmul_dtype = _default_matmul_dtype()

    B, S = seq.shape
    C, D = params['cat_emb'].shape
    L, H, _, Dh = params['wq_h'].shape
    F = params['w_ff1'].shape[2]
    C_out = params['head_w'].shape[1]
    C_pad = max(LANE, ((C_out + LANE - 1) // LANE) * LANE)   # lane-dense logits store

    seq3d = seq.reshape(B, S, 1).astype(jnp.int32)
    pos_s = params['pos_emb'][:S]                                        # (S, D)
    head_w_pad = jnp.zeros((D, C_pad), jnp.float32).at[:, :C_out].set(params['head_w'])

    mm = lambda x: x.astype(matmul_dtype)

    def const(shape):  # full-array block, same block index every grid step -> resident
        return pl.BlockSpec(shape, lambda b, _s=shape: (0,) * len(_s))

    in_specs = [
        pl.BlockSpec((1, S, 1), lambda b: (b, 0, 0)),    # seq (streamed per example)
        const((C, D)),                                   # cat_emb
        const((S, D)),                                   # pos_emb[:S]
        const((L, H, D, Dh)),                            # w_q (head-major)
        const((L, H, D, Dh)),                            # w_k (head-major)
        const((L, H, D, Dh)),                            # w_v (head-major)
        const((L, H, 3, Dh)),                            # [b_q, b_k, b_v] per head
        const((L, D, D)),                                # w_o
        const((L, D, F)),                                # w_ff1
        const((L, 1, F)),                                # b_ff1
        const((L, F, D)),                                # w_ff2
        const((L, 6, D)),                                # per-layer small vectors
        const((2, D)),                                   # head LayerNorm gamma/beta
        const((D, C_pad)),                               # head_w, lane-padded
    ]
    out_specs = [
        pl.BlockSpec((1, S, D), lambda b: (b, 0, 0)),        # feat
        pl.BlockSpec((1, S, C_pad), lambda b: (b, 0, 0)),    # logits (padded lanes)
    ]

    feat, logits_pad = pl.pallas_call(
        fwd_kernel,
        out_shape=(jax.ShapeDtypeStruct((B, S, D), jnp.float32),
                   jax.ShapeDtypeStruct((B, S, C_pad), jnp.float32)),
        grid_spec=pltpu.PrefetchScalarGridSpec(
            num_scalar_prefetch=0,
            grid=(B,),
            in_specs=in_specs,
            out_specs=out_specs),
        compiler_params=pltpu.CompilerParams(
            dimension_semantics=("parallel",),      # batch axis: shard across TCs (v7x)
            vmem_limit_bytes=32 * 1024 * 1024),
    )(seq3d, params['cat_emb'], pos_s,
      mm(params['wq_h']), mm(params['wk_h']), mm(params['wv_h']), params['bqkv_h'],
      mm(params['w_o']), mm(params['w_ff1']), params['b_ff1'], mm(params['w_ff2']),
      params['vec_d'], params['head_vec'], mm(head_w_pad))

    return {'logits': logits_pad[:, :, :C_out], 'feat': feat}


# ---------------- parameter init (deterministic, packed head-major slabs) ---------
def init_params(key):
    ks = iter(jax.random.split(key, 64))

    def uni(shape, fan_in):
        bound = 1.0 / math.sqrt(fan_in)
        return jax.random.uniform(next(ks), shape, jnp.float32, -bound, bound)

    def head_major(w):  # (D, D) -> (H, D, Dh)
        return jnp.transpose(w.reshape(D_MODEL, N_HEADS, D_HEAD), (1, 0, 2))

    params = {
        # nn.Embedding default init: N(0, 1)
        'cat_emb': jax.random.normal(next(ks), (NUM_CLASSES, D_MODEL), jnp.float32),
        # PositionalEmbedding: torch.rand (uniform [0, 1))
        'pos_emb': jax.random.uniform(next(ks), (MAX_TOKEN_LEN, D_MODEL), jnp.float32),
        # head LayerNorm gamma / beta packed as rows of one (2, D) slab
        'head_vec': jnp.stack([jnp.ones((D_MODEL,), jnp.float32),
                               jnp.zeros((D_MODEL,), jnp.float32)]),
        'head_w': uni((D_MODEL, NUM_CLASSES), D_MODEL),
    }

    wq_h, wk_h, wv_h, bqkv_h = [], [], [], []
    w_o, w_ff1, b_ff1, w_ff2, vec_d = [], [], [], [], []
    ones_d = jnp.ones((D_MODEL,), jnp.float32)
    zeros_d = jnp.zeros((D_MODEL,), jnp.float32)
    for _ in range(NUM_LAYERS):
        wq, bq = uni((D_MODEL, D_MODEL), D_MODEL), uni((D_MODEL,), D_MODEL)
        wk, bk = uni((D_MODEL, D_MODEL), D_MODEL), uni((D_MODEL,), D_MODEL)
        wv, bv = uni((D_MODEL, D_MODEL), D_MODEL), uni((D_MODEL,), D_MODEL)
        wo, bo = uni((D_MODEL, D_MODEL), D_MODEL), uni((D_MODEL,), D_MODEL)
        w1, b1 = uni((D_MODEL, D_FF), D_MODEL), uni((D_FF,), D_MODEL)
        w2, b2 = uni((D_FF, D_MODEL), D_FF), uni((D_MODEL,), D_FF)

        wq_h.append(head_major(wq))                              # (H, D, Dh)
        wk_h.append(head_major(wk))
        wv_h.append(head_major(wv))
        bqkv_h.append(jnp.stack([jnp.stack([b.reshape(N_HEADS, D_HEAD)[h]
                                            for b in (bq, bk, bv)])
                                 for h in range(N_HEADS)]))      # (H, 3, Dh)
        w_o.append(wo)
        w_ff1.append(w1)
        b_ff1.append(b1[None, :])                                # (1, F)
        w_ff2.append(w2)
        # per-layer vector slab: [b_o, ln1_g, ln1_b, b_ff2, ln2_g, ln2_b]
        vec_d.append(jnp.stack([bo, ones_d, zeros_d, b2, ones_d, zeros_d]))

    params.update(
        wq_h=jnp.stack(wq_h), wk_h=jnp.stack(wk_h), wv_h=jnp.stack(wv_h),
        bqkv_h=jnp.stack(bqkv_h), w_o=jnp.stack(w_o),
        w_ff1=jnp.stack(w_ff1), b_ff1=jnp.stack(b_ff1), w_ff2=jnp.stack(w_ff2),
        vec_d=jnp.stack(vec_d))
    return params


# ---------------- main -------------------------------------------------------------
if __name__ == "__main__":
    key = jax.random.PRNGKey(0)
    pkey, skey = jax.random.split(key)
    params = init_params(pkey)

    B, S = 2, 8
    seq = jax.random.randint(skey, (B, S), 0, NUM_CLASSES, dtype=jnp.int32)

    fwd = jax.jit(categorical_transformer_forward)
    out = fwd(seq, params)
    jax.block_until_ready(out['logits'])
    jax.block_until_ready(out['feat'])

    assert out['logits'].shape == (B, S, NUM_CLASSES)
    assert out['feat'].shape == (B, S, D_MODEL)
    assert bool(jnp.all(jnp.isfinite(out['logits'])))
    assert bool(jnp.all(jnp.isfinite(out['feat'])))
    print("KERNEL_OK")
</pallas_src>

<mosaic_0001>
module attributes {stable_mosaic.version = 11 : i64} {
  func.func @fwd_kernel(%arg0: i32, %arg1: memref<1x8x1xi32, #tpu.memory_space<vmem>>, %arg2: memref<16x32xf32, #tpu.memory_space<vmem>>, %arg3: memref<8x32xf32, #tpu.memory_space<vmem>>, %arg4: memref<2x4x32x8xf32, #tpu.memory_space<vmem>>, %arg5: memref<2x4x32x8xf32, #tpu.memory_space<vmem>>, %arg6: memref<2x4x32x8xf32, #tpu.memory_space<vmem>>, %arg7: memref<2x4x3x8xf32, #tpu.memory_space<vmem>>, %arg8: memref<2x32x32xf32, #tpu.memory_space<vmem>>, %arg9: memref<2x32x64xf32, #tpu.memory_space<vmem>>, %arg10: memref<2x1x64xf32, #tpu.memory_space<vmem>>, %arg11: memref<2x64x32xf32, #tpu.memory_space<vmem>>, %arg12: memref<2x6x32xf32, #tpu.memory_space<vmem>>, %arg13: memref<2x32xf32, #tpu.memory_space<vmem>>, %arg14: memref<32x128xf32, #tpu.memory_space<vmem>>, %arg15: memref<1x8x32xf32, #tpu.memory_space<vmem>>, %arg16: memref<1x8x128xf32, #tpu.memory_space<vmem>>) attributes {dimension_semantics = [#tpu.dimension_semantics<parallel>], iteration_bounds = array<i64: 2>, scalar_prefetch = 0 : i64, scratch_operands = 0 : i64, tpu.core_type = #tpu.core_type<tc>, window_params = [{transform_indices = @transform_0, window_bounds = array<i64: 1, 8, 1>}, {pipeline_mode = #tpu.pipeline_mode<synchronous>, transform_indices = @transform_1, window_bounds = array<i64: 16, 32>}, {pipeline_mode = #tpu.pipeline_mode<synchronous>, transform_indices = @transform_2, window_bounds = array<i64: 8, 32>}, {pipeline_mode = #tpu.pipeline_mode<synchronous>, transform_indices = @transform_3, window_bounds = array<i64: 2, 4, 32, 8>}, {pipeline_mode = #tpu.pipeline_mode<synchronous>, transform_indices = @transform_4, window_bounds = array<i64: 2, 4, 32, 8>}, {pipeline_mode = #tpu.pipeline_mode<synchronous>, transform_indices = @transform_5, window_bounds = array<i64: 2, 4, 32, 8>}, {pipeline_mode = #tpu.pipeline_mode<synchronous>, transform_indices = @transform_6, window_bounds = array<i64: 2, 4, 3, 8>}, {pipeline_mode = #tpu.pipeline_mode<synchronous>, transform_indices = @transform_7, window_bounds = array<i64: 2, 32, 32>}, {pipeline_mode = #tpu.pipeline_mode<synchronous>, transform_indices = @transform_8, window_bounds = array<i64: 2, 32, 64>}, {pipeline_mode = #tpu.pipeline_mode<synchronous>, transform_indices = @transform_9, window_bounds = array<i64: 2, 1, 64>}, {pipeline_mode = #tpu.pipeline_mode<synchronous>, transform_indices = @transform_10, window_bounds = array<i64: 2, 64, 32>}, {pipeline_mode = #tpu.pipeline_mode<synchronous>, transform_indices = @transform_11, window_bounds = array<i64: 2, 6, 32>}, {pipeline_mode = #tpu.pipeline_mode<synchronous>, transform_indices = @transform_12, window_bounds = array<i64: 2, 32>}, {pipeline_mode = #tpu.pipeline_mode<synchronous>, transform_indices = @transform_13, window_bounds = array<i64: 32, 128>}, {transform_indices = @transform_14, window_bounds = array<i64: 1, 8, 32>}, {transform_indices = @transform_15, window_bounds = array<i64: 1, 8, 128>}]} {
    %c0 = arith.constant 0 : index
    %c0_0 = arith.constant 0 : index
    %c0_1 = arith.constant 0 : index
    %0 = vector.load %arg1[%c0, %c0_0, %c0_1] : memref<1x8x1xi32, #tpu.memory_space<vmem>>, vector<1x8x1xi32>
    %1 = vector.shape_cast %0 : vector<1x8x1xi32> to vector<8x1xi32>
    %2 = tpu.iota {dimensions = array<i32: 1>} : vector<8x16xi32>
    %3 = vector.broadcast %1 : vector<8x1xi32> to vector<8x16xi32>
    %4 = arith.cmpi eq, %3, %2 : vector<8x16xi32>
    %5 = arith.extui %4 : vector<8x16xi1> to vector<8x16xi32>
    %6 = arith.sitofp %5 : vector<8x16xi32> to vector<8x16xf32>
    %c0_2 = arith.constant 0 : index
    %c0_3 = arith.constant 0 : index
    %7 = vector.load %arg2[%c0_2, %c0_3] : memref<16x32xf32, #tpu.memory_space<vmem>>, vector<16x32xf32>
    %cst = arith.constant dense<0.000000e+00> : vector<8x32xf32>
    %8 = tpu.matmul %6, %7, %cst {dimension_numbers = #tpu.dot_dimension_numbers<[1], [0], [0], [1], [0, 0, 1, 1], [], []>} : vector<8x16xf32>, vector<16x32xf32>, vector<8x32xf32> -> vector<8x32xf32>
    %c0_4 = arith.constant 0 : index
    %c0_5 = arith.constant 0 : index
    %9 = vector.load %arg3[%c0_4, %c0_5] : memref<8x32xf32, #tpu.memory_space<vmem>>, vector<8x32xf32>
    %10 = arith.addf %8, %9 : vector<8x32xf32>
    %c0_6 = arith.constant 0 : index
    %c0_7 = arith.constant 0 : index
    %c0_8 = arith.constant 0 : index
    %11 = vector.load %arg12[%c0_6, %c0_7, %c0_8] : memref<2x6x32xf32, #tpu.memory_space<vmem>>, vector<1x6x32xf32>
    %12 = vector.shape_cast %11 : vector<1x6x32xf32> to vector<6x32xf32>
    %c0_9 = arith.constant 0 : index
    %c0_10 = arith.constant 0 : index
    %c0_11 = arith.constant 0 : index
    %c0_12 = arith.constant 0 : index
    %13 = vector.load %arg7[%c0_9, %c0_10, %c0_11, %c0_12] : memref<2x4x3x8xf32, #tpu.memory_space<vmem>>, vector<1x1x3x8xf32>
    %14 = vector.shape_cast %13 : vector<1x1x3x8xf32> to vector<3x8xf32>
    %c0_13 = arith.constant 0 : index
    %c0_14 = arith.constant 0 : index
    %c0_15 = arith.constant 0 : index
    %c0_16 = arith.constant 0 : index
    %15 = vector.load %arg4[%c0_13, %c0_14, %c0_15, %c0_16] : memref<2x4x32x8xf32, #tpu.memory_space<vmem>>, vector<1x1x32x8xf32>
    %16 = vector.shape_cast %15 : vector<1x1x32x8xf32> to vector<32x8xf32>
    %cst_17 = arith.constant dense<0.000000e+00> : vector<8x8xf32>
    %17 = tpu.matmul %10, %16, %cst_17 {dimension_numbers = #tpu.dot_dimension_numbers<[1], [0], [0], [1], [0, 0, 1, 1], [], []>} : vector<8x32xf32>, vector<32x8xf32>, vector<8x8xf32> -> vector<8x8xf32>
    %18 = vector.extract_strided_slice %14 {offsets = [0, 0], sizes = [1, 8], strides = [1, 1]} : vector<3x8xf32> to vector<1x8xf32>
    %19 = vector.broadcast %18 : vector<1x8xf32> to vector<8x8xf32>
    %20 = arith.addf %17, %19 : vector<8x8xf32>
    %c0_18 = arith.constant 0 : index
    %c0_19 = arith.constant 0 : index
    %c0_20 = arith.constant 0 : index
    %c0_21 = arith.constant 0 : index
    %21 = vector.load %arg5[%c0_18, %c0_19, %c0_20, %c0_21] : memref<2x4x32x8xf32, #tpu.memory_space<vmem>>, vector<1x1x32x8xf32>
    %22 = vector.shape_cast %21 : vector<1x1x32x8xf32> to vector<32x8xf32>
    %cst_22 = arith.constant dense<0.000000e+00> : vector<8x8xf32>
    %23 = tpu.matmul %10, %22, %cst_22 {dimension_numbers = #tpu.dot_dimension_numbers<[1], [0], [0], [1], [0, 0, 1, 1], [], []>} : vector<8x32xf32>, vector<32x8xf32>, vector<8x8xf32> -> vector<8x8xf32>
    %24 = vector.extract_strided_slice %14 {offsets = [1, 0], sizes = [1, 8], strides = [1, 1]} : vector<3x8xf32> to vector<1x8xf32>
    %25 = vector.broadcast %24 : vector<1x8xf32> to vector<8x8xf32>
    %26 = arith.addf %23, %25 : vector<8x8xf32>
    %c0_23 = arith.constant 0 : index
    %c0_24 = arith.constant 0 : index
    %c0_25 = arith.constant 0 : index
    %c0_26 = arith.constant 0 : index
    %27 = vector.load %arg6[%c0_23, %c0_24, %c0_25, %c0_26] : memref<2x4x32x8xf32, #tpu.memory_space<vmem>>, vector<1x1x32x8xf32>
    %28 = vector.shape_cast %27 : vector<1x1x32x8xf32> to vector<32x8xf32>
    %cst_27 = arith.constant dense<0.000000e+00> : vector<8x8xf32>
    %29 = tpu.matmul %10, %28, %cst_27 {dimension_numbers = #tpu.dot_dimension_numbers<[1], [0], [0], [1], [0, 0, 1, 1], [], []>} : vector<8x32xf32>, vector<32x8xf32>, vector<8x8xf32> -> vector<8x8xf32>
    %30 = vector.extract_strided_slice %14 {offsets = [2, 0], sizes = [1, 8], strides = [1, 1]} : vector<3x8xf32> to vector<1x8xf32>
    %31 = vector.broadcast %30 : vector<1x8xf32> to vector<8x8xf32>
    %32 = arith.addf %29, %31 : vector<8x8xf32>
    %cst_28 = arith.constant dense<0.000000e+00> : vector<8x8xf32>
    %33 = tpu.matmul %20, %26, %cst_28 {dimension_numbers = #tpu.dot_dimension_numbers<[1], [1], [0], [0], [0, 0, 1, 0], [], []>} : vector<8x8xf32>, vector<8x8xf32>, vector<8x8xf32> -> vector<8x8xf32>
    %cst_29 = arith.constant 0.353553385 : f32
    %34 = vector.broadcast %cst_29 : f32 to vector<8x8xf32>
    %35 = arith.mulf %33, %34 : vector<8x8xf32>
    %cst_30 = arith.constant dense<0xFF800000> : vector<8xf32>
    %36 = vector.multi_reduction <maximumf>, %35, %cst_30 [1] : vector<8x8xf32> to vector<8xf32>
    %37 = vector.shape_cast %36 : vector<8xf32> to vector<8x1xf32>
    %38 = vector.broadcast %37 : vector<8x1xf32> to vector<8x8xf32>
    %39 = arith.subf %35, %38 : vector<8x8xf32>
    %40 = math.exp %39 : vector<8x8xf32>
    %cst_31 = arith.constant dense<0.000000e+00> : vector<8xf32>
    %41 = vector.multi_reduction <add>, %40, %cst_31 [1] : vector<8x8xf32> to vector<8xf32>
    %42 = vector.shape_cast %41 : vector<8xf32> to vector<8x1xf32>
    %43 = tpu.reciprocal %42 {approx = true} : vector<8x1xf32> -> vector<8x1xf32>
    %44 = vector.broadcast %43 : vector<8x1xf32> to vector<8x8xf32>
    %45 = arith.mulf %40, %44 : vector<8x8xf32>
    %cst_32 = arith.constant dense<0.000000e+00> : vector<8x8xf32>
    %46 = tpu.matmul %45, %32, %cst_32 {dimension_numbers = #tpu.dot_dimension_numbers<[1], [0], [0], [1], [0, 0, 1, 1], [], []>} : vector<8x8xf32>, vector<8x8xf32>, vector<8x8xf32> -> vector<8x8xf32>
    %c0_33 = arith.constant 0 : index
    %c1 = arith.constant 1 : index
    %c0_34 = arith.constant 0 : index
    %c0_35 = arith.constant 0 : index
    %47 = vector.load %arg7[%c0_33, %c1, %c0_34, %c0_35] : memref<2x4x3x8xf32, #tpu.memory_space<vmem>>, vector<1x1x3x8xf32>
    %48 = vector.shape_cast %47 : vector<1x1x3x8xf32> to vector<3x8xf32>
    %c0_36 = arith.constant 0 : index
    %c1_37 = arith.constant 1 : index
    %c0_38 = arith.constant 0 : index
    %c0_39 = arith.constant 0 : index
    %49 = vector.load %arg4[%c0_36, %c1_37, %c0_38, %c0_39] : memref<2x4x32x8xf32, #tpu.memory_space<vmem>>, vector<1x1x32x8xf32>
    %50 = vector.shape_cast %49 : vector<1x1x32x8xf32> to vector<32x8xf32>
    %cst_40 = arith.constant dense<0.000000e+00> : vector<8x8xf32>
    %51 = tpu.matmul %10, %50, %cst_40 {dimension_numbers = #tpu.dot_dimension_numbers<[1], [0], [0], [1], [0, 0, 1, 1], [], []>} : vector<8x32xf32>, vector<32x8xf32>, vector<8x8xf32> -> vector<8x8xf32>
    %52 = vector.extract_strided_slice %48 {offsets = [0, 0], sizes = [1, 8], strides = [1, 1]} : vector<3x8xf32> to vector<1x8xf32>
    %53 = vector.broadcast %52 : vector<1x8xf32> to vector<8x8xf32>
    %54 = arith.addf %51, %53 : vector<8x8xf32>
    %c0_41 = arith.constant 0 : index
    %c1_42 = arith.constant 1 : index
    %c0_43 = arith.constant 0 : index
    %c0_44 = arith.constant 0 : index
    %55 = vector.load %arg5[%c0_41, %c1_42, %c0_43, %c0_44] : memref<2x4x32x8xf32, #tpu.memory_space<vmem>>, vector<1x1x32x8xf32>
    %56 = vector.shape_cast %55 : vector<1x1x32x8xf32> to vector<32x8xf32>
    %cst_45 = arith.constant dense<0.000000e+00> : vector<8x8xf32>
    %57 = tpu.matmul %10, %56, %cst_45 {dimension_numbers = #tpu.dot_dimension_numbers<[1], [0], [0], [1], [0, 0, 1, 1], [], []>} : vector<8x32xf32>, vector<32x8xf32>, vector<8x8xf32> -> vector<8x8xf32>
    %58 = vector.extract_strided_slice %48 {offsets = [1, 0], sizes = [1, 8], strides = [1, 1]} : vector<3x8xf32> to vector<1x8xf32>
    %59 = vector.broadcast %58 : vector<1x8xf32> to vector<8x8xf32>
    %60 = arith.addf %57, %59 : vector<8x8xf32>
    %c0_46 = arith.constant 0 : index
    %c1_47 = arith.constant 1 : index
    %c0_48 = arith.constant 0 : index
    %c0_49 = arith.constant 0 : index
    %61 = vector.load %arg6[%c0_46, %c1_47, %c0_48, %c0_49] : memref<2x4x32x8xf32, #tpu.memory_space<vmem>>, vector<1x1x32x8xf32>
    %62 = vector.shape_cast %61 : vector<1x1x32x8xf32> to vector<32x8xf32>
    %cst_50 = arith.constant dense<0.000000e+00> : vector<8x8xf32>
    %63 = tpu.matmul %10, %62, %cst_50 {dimension_numbers = #tpu.dot_dimension_numbers<[1], [0], [0], [1], [0, 0, 1, 1], [], []>} : vector<8x32xf32>, vector<32x8xf32>, vector<8x8xf32> -> vector<8x8xf32>
    %64 = vector.extract_strided_slice %48 {offsets = [2, 0], sizes = [1, 8], strides = [1, 1]} : vector<3x8xf32> to vector<1x8xf32>
    %65 = vector.broadcast %64 : vector<1x8xf32> to vector<8x8xf32>
    %66 = arith.addf %63, %65 : vector<8x8xf32>
    %cst_51 = arith.constant dense<0.000000e+00> : vector<8x8xf32>
    %67 = tpu.matmul %54, %60, %cst_51 {dimension_numbers = #tpu.dot_dimension_numbers<[1], [1], [0], [0], [0, 0, 1, 0], [], []>} : vector<8x8xf32>, vector<8x8xf32>, vector<8x8xf32> -> vector<8x8xf32>
    %cst_52 = arith.constant 0.353553385 : f32
    %68 = vector.broadcast %cst_52 : f32 to vector<8x8xf32>
    %69 = arith.mulf %67, %68 : vector<8x8xf32>
    %cst_53 = arith.constant dense<0xFF800000> : vector<8xf32>
    %70 = vector.multi_reduction <maximumf>, %69, %cst_53 [1] : vector<8x8xf32> to vector<8xf32>
    %71 = vector.shape_cast %70 : vector<8xf32> to vector<8x1xf32>
    %72 = vector.broadcast %71 : vector<8x1xf32> to vector<8x8xf32>
    %73 = arith.subf %69, %72 : vector<8x8xf32>
    %74 = math.exp %73 : vector<8x8xf32>
    %cst_54 = arith.constant dense<0.000000e+00> : vector<8xf32>
    %75 = vector.multi_reduction <add>, %74, %cst_54 [1] : vector<8x8xf32> to vector<8xf32>
    %76 = vector.shape_cast %75 : vector<8xf32> to vector<8x1xf32>
    %77 = tpu.reciprocal %76 {approx = true} : vector<8x1xf32> -> vector<8x1xf32>
    %78 = vector.broadcast %77 : vector<8x1xf32> to vector<8x8xf32>
    %79 = arith.mulf %74, %78 : vector<8x8xf32>
    %cst_55 = arith.constant dense<0.000000e+00> : vector<8x8xf32>
    %80 = tpu.matmul %79, %66, %cst_55 {dimension_numbers = #tpu.dot_dimension_numbers<[1], [0], [0], [1], [0, 0, 1, 1], [], []>} : vector<8x8xf32>, vector<8x8xf32>, vector<8x8xf32> -> vector<8x8xf32>
    %c0_56 = arith.constant 0 : index
    %c2 = arith.constant 2 : index
    %c0_57 = arith.constant 0 : index
    %c0_58 = arith.constant 0 : index
    %81 = vector.load %arg7[%c0_56, %c2, %c0_57, %c0_58] : memref<2x4x3x8xf32, #tpu.memory_space<vmem>>, vector<1x1x3x8xf32>
    %82 = vector.shape_cast %81 : vector<1x1x3x8xf32> to vector<3x8xf32>
    %c0_59 = arith.constant 0 : index
    %c2_60 = arith.constant 2 : index
    %c0_61 = arith.constant 0 : index
    %c0_62 = arith.constant 0 : index
    %83 = vector.load %arg4[%c0_59, %c2_60, %c0_61, %c0_62] : memref<2x4x32x8xf32, #tpu.memory_space<vmem>>, vector<1x1x32x8xf32>
    %84 = vector.shape_cast %83 : vector<1x1x32x8xf32> to vector<32x8xf32>
    %cst_63 = arith.constant dense<0.000000e+00> : vector<8x8xf32>
    %85 = tpu.matmul %10, %84, %cst_63 {dimension_numbers = #tpu.dot_dimension_numbers<[1], [0], [0], [1], [0, 0, 1, 1], [], []>} : vector<8x32xf32>, vector<32x8xf32>, vector<8x8xf32> -> vector<8x8xf32>
    %86 = vector.extract_strided_slice %82 {offsets = [0, 0], sizes = [1, 8], strides = [1, 1]} : vector<3x8xf32> to vector<1x8xf32>
    %87 = vector.broadcast %86 : vector<1x8xf32> to vector<8x8xf32>
    %88 = arith.addf %85, %87 : vector<8x8xf32>
    %c0_64 = arith.constant 0 : index
    %c2_65 = arith.constant 2 : index
    %c0_66 = arith.constant 0 : index
    %c0_67 = arith.constant 0 : index
    %89 = vector.load %arg5[%c0_64, %c2_65, %c0_66, %c0_67] : memref<2x4x32x8xf32, #tpu.memory_space<vmem>>, vector<1x1x32x8xf32>
    %90 = vector.shape_cast %89 : vector<1x1x32x8xf32> to vector<32x8xf32>
    %cst_68 = arith.constant dense<0.000000e+00> : vector<8x8xf32>
    %91 = tpu.matmul %10, %90, %cst_68 {dimension_numbers = #tpu.dot_dimension_numbers<[1], [0], [0], [1], [0, 0, 1, 1], [], []>} : vector<8x32xf32>, vector<32x8xf32>, vector<8x8xf32> -> vector<8x8xf32>
    %92 = vector.extract_strided_slice %82 {offsets = [1, 0], sizes = [1, 8], strides = [1, 1]} : vector<3x8xf32> to vector<1x8xf32>
    %93 = vector.broadcast %92 : vector<1x8xf32> to vector<8x8xf32>
    %94 = arith.addf %91, %93 : vector<8x8xf32>
    %c0_69 = arith.constant 0 : index
    %c2_70 = arith.constant 2 : index
    %c0_71 = arith.constant 0 : index
    %c0_72 = arith.constant 0 : index
    %95 = vector.load %arg6[%c0_69, %c2_70, %c0_71, %c0_72] : memref<2x4x32x8xf32, #tpu.memory_space<vmem>>, vector<1x1x32x8xf32>
    %96 = vector.shape_cast %95 : vector<1x1x32x8xf32> to vector<32x8xf32>
    %cst_73 = arith.constant dense<0.000000e+00> : vector<8x8xf32>
    %97 = tpu.matmul %10, %96, %cst_73 {dimension_numbers = #tpu.dot_dimension_numbers<[1], [0], [0], [1], [0, 0, 1, 1], [], []>} : vector<8x32xf32>, vector<32x8xf32>, vector<8x8xf32> -> vector<8x8xf32>
    %98 = vector.extract_strided_slice %82 {offsets = [2, 0], sizes = [1, 8], strides = [1, 1]} : vector<3x8xf32> to vector<1x8xf32>
    %99 = vector.broadcast %98 : vector<1x8xf32> to vector<8x8xf32>
    %100 = arith.addf %97, %99 : vector<8x8xf32>
    %cst_74 = arith.constant dense<0.000000e+00> : vector<8x8xf32>
    %101 = tpu.matmul %88, %94, %cst_74 {dimension_numbers = #tpu.dot_dimension_numbers<[1], [1], [0], [0], [0, 0, 1, 0], [], []>} : vector<8x8xf32>, vector<8x8xf32>, vector<8x8xf32> -> vector<8x8xf32>
    %cst_75 = arith.constant 0.353553385 : f32
    %102 = vector.broadcast %cst_75 : f32 to vector<8x8xf32>
    %103 = arith.mulf %101, %102 : vector<8x8xf32>
    %cst_76 = arith.constant dense<0xFF800000> : vector<8xf32>
    %104 = vector.multi_reduction <maximumf>, %103, %cst_76 [1] : vector<8x8xf32> to vector<8xf32>
    %105 = vector.shape_cast %104 : vector<8xf32> to vector<8x1xf32>
    %106 = vector.broadcast %105 : vector<8x1xf32> to vector<8x8xf32>
    %107 = arith.subf %103, %106 : vector<8x8xf32>
    %108 = math.exp %107 : vector<8x8xf32>
    %cst_77 = arith.constant dense<0.000000e+00> : vector<8xf32>
    %109 = vector.multi_reduction <add>, %108, %cst_77 [1] : vector<8x8xf32> to vector<8xf32>
    %110 = vector.shape_cast %109 : vector<8xf32> to vector<8x1xf32>
    %111 = tpu.reciprocal %110 {approx = true} : vector<8x1xf32> -> vector<8x1xf32>
    %112 = vector.broadcast %111 : vector<8x1xf32> to vector<8x8xf32>
    %113 = arith.mulf %108, %112 : vector<8x8xf32>
    %cst_78 = arith.constant dense<0.000000e+00> : vector<8x8xf32>
    %114 = tpu.matmul %113, %100, %cst_78 {dimension_numbers = #tpu.dot_dimension_numbers<[1], [0], [0], [1], [0, 0, 1, 1], [], []>} : vector<8x8xf32>, vector<8x8xf32>, vector<8x8xf32> -> vector<8x8xf32>
    %c0_79 = arith.constant 0 : index
    %c3 = arith.constant 3 : index
    %c0_80 = arith.constant 0 : index
    %c0_81 = arith.constant 0 : index
    %115 = vector.load %arg7[%c0_79, %c3, %c0_80, %c0_81] : memref<2x4x3x8xf32, #tpu.memory_space<vmem>>, vector<1x1x3x8xf32>
    %116 = vector.shape_cast %115 : vector<1x1x3x8xf32> to vector<3x8xf32>
    %c0_82 = arith.constant 0 : index
    %c3_83 = arith.constant 3 : index
    %c0_84 = arith.constant 0 : index
    %c0_85 = arith.constant 0 : index
    %117 = vector.load %arg4[%c0_82, %c3_83, %c0_84, %c0_85] : memref<2x4x32x8xf32, #tpu.memory_space<vmem>>, vector<1x1x32x8xf32>
    %118 = vector.shape_cast %117 : vector<1x1x32x8xf32> to vector<32x8xf32>
    %cst_86 = arith.constant dense<0.000000e+00> : vector<8x8xf32>
    %119 = tpu.matmul %10, %118, %cst_86 {dimension_numbers = #tpu.dot_dimension_numbers<[1], [0], [0], [1], [0, 0, 1, 1], [], []>} : vector<8x32xf32>, vector<32x8xf32>, vector<8x8xf32> -> vector<8x8xf32>
    %120 = vector.extract_strided_slice %116 {offsets = [0, 0], sizes = [1, 8], strides = [1, 1]} : vector<3x8xf32> to vector<1x8xf32>
    %121 = vector.broadcast %120 : vector<1x8xf32> to vector<8x8xf32>
    %122 = arith.addf %119, %121 : vector<8x8xf32>
    %c0_87 = arith.constant 0 : index
    %c3_88 = arith.constant 3 : index
    %c0_89 = arith.constant 0 : index
    %c0_90 = arith.constant 0 : index
    %123 = vector.load %arg5[%c0_87, %c3_88, %c0_89, %c0_90] : memref<2x4x32x8xf32, #tpu.memory_space<vmem>>, vector<1x1x32x8xf32>
    %124 = vector.shape_cast %123 : vector<1x1x32x8xf32> to vector<32x8xf32>
    %cst_91 = arith.constant dense<0.000000e+00> : vector<8x8xf32>
    %125 = tpu.matmul %10, %124, %cst_91 {dimension_numbers = #tpu.dot_dimension_numbers<[1], [0], [0], [1], [0, 0, 1, 1], [], []>} : vector<8x32xf32>, vector<32x8xf32>, vector<8x8xf32> -> vector<8x8xf32>
    %126 = vector.extract_strided_slice %116 {offsets = [1, 0], sizes = [1, 8], strides = [1, 1]} : vector<3x8xf32> to vector<1x8xf32>
    %127 = vector.broadcast %126 : vector<1x8xf32> to vector<8x8xf32>
    %128 = arith.addf %125, %127 : vector<8x8xf32>
    %c0_92 = arith.constant 0 : index
    %c3_93 = arith.constant 3 : index
    %c0_94 = arith.constant 0 : index
    %c0_95 = arith.constant 0 : index
    %129 = vector.load %arg6[%c0_92, %c3_93, %c0_94, %c0_95] : memref<2x4x32x8xf32, #tpu.memory_space<vmem>>, vector<1x1x32x8xf32>
    %130 = vector.shape_cast %129 : vector<1x1x32x8xf32> to vector<32x8xf32>
    %cst_96 = arith.constant dense<0.000000e+00> : vector<8x8xf32>
    %131 = tpu.matmul %10, %130, %cst_96 {dimension_numbers = #tpu.dot_dimension_numbers<[1], [0], [0], [1], [0, 0, 1, 1], [], []>} : vector<8x32xf32>, vector<32x8xf32>, vector<8x8xf32> -> vector<8x8xf32>
    %132 = vector.extract_strided_slice %116 {offsets = [2, 0], sizes = [1, 8], strides = [1, 1]} : vector<3x8xf32> to vector<1x8xf32>
    %133 = vector.broadcast %132 : vector<1x8xf32> to vector<8x8xf32>
    %134 = arith.addf %131, %133 : vector<8x8xf32>
    %cst_97 = arith.constant dense<0.000000e+00> : vector<8x8xf32>
    %135 = tpu.matmul %122, %128, %cst_97 {dimension_numbers = #tpu.dot_dimension_numbers<[1], [1], [0], [0], [0, 0, 1, 0], [], []>} : vector<8x8xf32>, vector<8x8xf32>, vector<8x8xf32> -> vector<8x8xf32>
    %cst_98 = arith.constant 0.353553385 : f32
    %136 = vector.broadcast %cst_98 : f32 to vector<8x8xf32>
    %137 = arith.mulf %135, %136 : vector<8x8xf32>
    %cst_99 = arith.constant dense<0xFF800000> : vector<8xf32>
    %138 = vector.multi_reduction <maximumf>, %137, %cst_99 [1] : vector<8x8xf32> to vector<8xf32>
    %139 = vector.shape_cast %138 : vector<8xf32> to vector<8x1xf32>
    %140 = vector.broadcast %139 : vector<8x1xf32> to vector<8x8xf32>
    %141 = arith.subf %137, %140 : vector<8x8xf32>
    %142 = math.exp %141 : vector<8x8xf32>
    %cst_100 = arith.constant dense<0.000000e+00> : vector<8xf32>
    %143 = vector.multi_reduction <add>, %142, %cst_100 [1] : vector<8x8xf32> to vector<8xf32>
    %144 = vector.shape_cast %143 : vector<8xf32> to vector<8x1xf32>
    %145 = tpu.reciprocal %144 {approx = true} : vector<8x1xf32> -> vector<8x1xf32>
    %146 = vector.broadcast %145 : vector<8x1xf32> to vector<8x8xf32>
    %147 = arith.mulf %142, %146 : vector<8x8xf32>
    %cst_101 = arith.constant dense<0.000000e+00> : vector<8x8xf32>
    %148 = tpu.matmul %147, %134, %cst_101 {dimension_numbers = #tpu.dot_dimension_numbers<[1], [0], [0], [1], [0, 0, 1, 1], [], []>} : vector<8x8xf32>, vector<8x8xf32>, vector<8x8xf32> -> vector<8x8xf32>
    %149 = tpu.concatenate %46, %80, %114, %148 in 1 : vector<8x8xf32>, vector<8x8xf32>, vector<8x8xf32>, vector<8x8xf32> -> vector<8x32xf32>
    %c0_102 = arith.constant 0 : index
    %c0_103 = arith.constant 0 : index
    %c0_104 = arith.constant 0 : index
    %150 = vector.load %arg8[%c0_102, %c0_103, %c0_104] : memref<2x32x32xf32, #tpu.memory_space<vmem>>, vector<1x32x32xf32>
    %151 = vector.shape_cast %150 : vector<1x32x32xf32> to vector<32x32xf32>
    %cst_105 = arith.constant dense<0.000000e+00> : vector<8x32xf32>
    %152 = tpu.matmul %149, %151, %cst_105 {dimension_numbers = #tpu.dot_dimension_numbers<[1], [0], [0], [1], [0, 0, 1, 1], [], []>} : vector<8x32xf32>, vector<32x32xf32>, vector<8x32xf32> -> vector<8x32xf32>
    %153 = vector.extract_strided_slice %12 {offsets = [0, 0], sizes = [1, 32], strides = [1, 1]} : vector<6x32xf32> to vector<1x32xf32>
    %154 = vector.broadcast %153 : vector<1x32xf32> to vector<8x32xf32>
    %155 = arith.addf %152, %154 : vector<8x32xf32>
    %156 = arith.addf %10, %155 : vector<8x32xf32>
    %157 = vector.extract_strided_slice %12 {offsets = [1, 0], sizes = [1, 32], strides = [1, 1]} : vector<6x32xf32> to vector<1x32xf32>
    %158 = vector.extract_strided_slice %12 {offsets = [2, 0], sizes = [1, 32], strides = [1, 1]} : vector<6x32xf32> to vector<1x32xf32>
    %cst_106 = arith.constant dense<0.000000e+00> : vector<8xf32>
    %159 = vector.multi_reduction <add>, %156, %cst_106 [1] : vector<8x32xf32> to vector<8xf32>
    %160 = vector.shape_cast %159 : vector<8xf32> to vector<8x1xf32>
    %cst_107 = arith.constant 3.200000e+01 : f32
    %161 = vector.broadcast %cst_107 : f32 to vector<8x1xf32>
    %162 = arith.divf %160, %161 : vector<8x1xf32>
    %163 = vector.broadcast %162 : vector<8x1xf32> to vector<8x32xf32>
    %164 = arith.subf %156, %163 : vector<8x32xf32>
    %165 = arith.mulf %164, %164 : vector<8x32xf32>
    %cst_108 = arith.constant dense<0.000000e+00> : vector<8xf32>
    %166 = vector.multi_reduction <add>, %165, %cst_108 [1] : vector<8x32xf32> to vector<8xf32>
    %167 = vector.shape_cast %166 : vector<8xf32> to vector<8x1xf32>
    %cst_109 = arith.constant 3.200000e+01 : f32
    %168 = vector.broadcast %cst_109 : f32 to vector<8x1xf32>
    %169 = arith.divf %167, %168 : vector<8x1xf32>
    %170 = vector.broadcast %162 : vector<8x1xf32> to vector<8x32xf32>
    %171 = arith.subf %156, %170 : vector<8x32xf32>
    %cst_110 = arith.constant 9.99999974E-6 : f32
    %172 = vector.broadcast %cst_110 : f32 to vector<8x1xf32>
    %173 = arith.addf %169, %172 : vector<8x1xf32>
    %174 = math.rsqrt %173 : vector<8x1xf32>
    %175 = vector.broadcast %174 : vector<8x1xf32> to vector<8x32xf32>
    %176 = arith.mulf %171, %175 : vector<8x32xf32>
    %177 = vector.broadcast %157 : vector<1x32xf32> to vector<8x32xf32>
    %178 = arith.mulf %176, %177 : vector<8x32xf32>
    %179 = vector.broadcast %158 : vector<1x32xf32> to vector<8x32xf32>
    %180 = arith.addf %178, %179 : vector<8x32xf32>
    %c0_111 = arith.constant 0 : index
    %c0_112 = arith.constant 0 : index
    %c0_113 = arith.constant 0 : index
    %181 = vector.load %arg9[%c0_111, %c0_112, %c0_113] : memref<2x32x64xf32, #tpu.memory_space<vmem>>, vector<1x32x64xf32>
    %182 = vector.shape_cast %181 : vector<1x32x64xf32> to vector<32x64xf32>
    %cst_114 = arith.constant dense<0.000000e+00> : vector<8x64xf32>
    %183 = tpu.matmul %180, %182, %cst_114 {dimension_numbers = #tpu.dot_dimension_numbers<[1], [0], [0], [1], [0, 0, 1, 1], [], []>} : vector<8x32xf32>, vector<32x64xf32>, vector<8x64xf32> -> vector<8x64xf32>
    %c0_115 = arith.constant 0 : index
    %c0_116 = arith.constant 0 : index
    %c0_117 = arith.constant 0 : index
    %184 = vector.load %arg10[%c0_115, %c0_116, %c0_117] : memref<2x1x64xf32, #tpu.memory_space<vmem>>, vector<1x1x64xf32>
    %185 = vector.shape_cast %184 : vector<1x1x64xf32> to vector<1x64xf32>
    %186 = vector.broadcast %185 : vector<1x64xf32> to vector<8x64xf32>
    %187 = arith.addf %183, %186 : vector<8x64xf32>
    %cst_118 = arith.constant 0.000000e+00 : f32
    %188 = vector.broadcast %cst_118 : f32 to vector<8x64xf32>
    %189 = arith.maximumf %187, %188 : vector<8x64xf32>
    %c0_119 = arith.constant 0 : index
    %c0_120 = arith.constant 0 : index
    %c0_121 = arith.constant 0 : index
    %190 = vector.load %arg11[%c0_119, %c0_120, %c0_121] : memref<2x64x32xf32, #tpu.memory_space<vmem>>, vector<1x64x32xf32>
    %191 = vector.shape_cast %190 : vector<1x64x32xf32> to vector<64x32xf32>
    %cst_122 = arith.constant dense<0.000000e+00> : vector<8x32xf32>
    %192 = tpu.matmul %189, %191, %cst_122 {dimension_numbers = #tpu.dot_dimension_numbers<[1], [0], [0], [1], [0, 0, 1, 1], [], []>} : vector<8x64xf32>, vector<64x32xf32>, vector<8x32xf32> -> vector<8x32xf32>
    %193 = vector.extract_strided_slice %12 {offsets = [3, 0], sizes = [1, 32], strides = [1, 1]} : vector<6x32xf32> to vector<1x32xf32>
    %194 = vector.broadcast %193 : vector<1x32xf32> to vector<8x32xf32>
    %195 = arith.addf %192, %194 : vector<8x32xf32>
    %196 = arith.addf %180, %195 : vector<8x32xf32>
    %197 = vector.extract_strided_slice %12 {offsets = [4, 0], sizes = [1, 32], strides = [1, 1]} : vector<6x32xf32> to vector<1x32xf32>
    %198 = vector.extract_strided_slice %12 {offsets = [5, 0], sizes = [1, 32], strides = [1, 1]} : vector<6x32xf32> to vector<1x32xf32>
    %cst_123 = arith.constant dense<0.000000e+00> : vector<8xf32>
    %199 = vector.multi_reduction <add>, %196, %cst_123 [1] : vector<8x32xf32> to vector<8xf32>
    %200 = vector.shape_cast %199 : vector<8xf32> to vector<8x1xf32>
    %cst_124 = arith.constant 3.200000e+01 : f32
    %201 = vector.broadcast %cst_124 : f32 to vector<8x1xf32>
    %202 = arith.divf %200, %201 : vector<8x1xf32>
    %203 = vector.broadcast %202 : vector<8x1xf32> to vector<8x32xf32>
    %204 = arith.subf %196, %203 : vector<8x32xf32>
    %205 = arith.mulf %204, %204 : vector<8x32xf32>
    %cst_125 = arith.constant dense<0.000000e+00> : vector<8xf32>
    %206 = vector.multi_reduction <add>, %205, %cst_125 [1] : vector<8x32xf32> to vector<8xf32>
    %207 = vector.shape_cast %206 : vector<8xf32> to vector<8x1xf32>
    %cst_126 = arith.constant 3.200000e+01 : f32
    %208 = vector.broadcast %cst_126 : f32 to vector<8x1xf32>
    %209 = arith.divf %207, %208 : vector<8x1xf32>
    %210 = vector.broadcast %202 : vector<8x1xf32> to vector<8x32xf32>
    %211 = arith.subf %196, %210 : vector<8x32xf32>
    %cst_127 = arith.constant 9.99999974E-6 : f32
    %212 = vector.broadcast %cst_127 : f32 to vector<8x1xf32>
    %213 = arith.addf %209, %212 : vector<8x1xf32>
    %214 = math.rsqrt %213 : vector<8x1xf32>
    %215 = vector.broadcast %214 : vector<8x1xf32> to vector<8x32xf32>
    %216 = arith.mulf %211, %215 : vector<8x32xf32>
    %217 = vector.broadcast %197 : vector<1x32xf32> to vector<8x32xf32>
    %218 = arith.mulf %216, %217 : vector<8x32xf32>
    %219 = vector.broadcast %198 : vector<1x32xf32> to vector<8x32xf32>
    %220 = arith.addf %218, %219 : vector<8x32xf32>
    %c1_128 = arith.constant 1 : index
    %c0_129 = arith.constant 0 : index
    %c0_130 = arith.constant 0 : index
    %221 = vector.load %arg12[%c1_128, %c0_129, %c0_130] : memref<2x6x32xf32, #tpu.memory_space<vmem>>, vector<1x6x32xf32>
    %222 = vector.shape_cast %221 : vector<1x6x32xf32> to vector<6x32xf32>
    %c1_131 = arith.constant 1 : index
    %c0_132 = arith.constant 0 : index
    %c0_133 = arith.constant 0 : index
    %c0_134 = arith.constant 0 : index
    %223 = vector.load %arg7[%c1_131, %c0_132, %c0_133, %c0_134] : memref<2x4x3x8xf32, #tpu.memory_space<vmem>>, vector<1x1x3x8xf32>
    %224 = vector.shape_cast %223 : vector<1x1x3x8xf32> to vector<3x8xf32>
    %c1_135 = arith.constant 1 : index
    %c0_136 = arith.constant 0 : index
    %c0_137 = arith.constant 0 : index
    %c0_138 = arith.constant 0 : index
    %225 = vector.load %arg4[%c1_135, %c0_136, %c0_137, %c0_138] : memref<2x4x32x8xf32, #tpu.memory_space<vmem>>, vector<1x1x32x8xf32>
    %226 = vector.shape_cast %225 : vector<1x1x32x8xf32> to vector<32x8xf32>
    %cst_139 = arith.constant dense<0.000000e+00> : vector<8x8xf32>
    %227 = tpu.matmul %220, %226, %cst_139 {dimension_numbers = #tpu.dot_dimension_numbers<[1], [0], [0], [1], [0, 0, 1, 1], [], []>} : vector<8x32xf32>, vector<32x8xf32>, vector<8x8xf32> -> vector<8x8xf32>
    %228 = vector.extract_strided_slice %224 {offsets = [0, 0], sizes = [1, 8], strides = [1, 1]} : vector<3x8xf32> to vector<1x8xf32>
    %229 = vector.broadcast %228 : vector<1x8xf32> to vector<8x8xf32>
    %230 = arith.addf %227, %229 : vector<8x8xf32>
    %c1_140 = arith.constant 1 : index
    %c0_141 = arith.constant 0 : index
    %c0_142 = arith.constant 0 : index
    %c0_143 = arith.constant 0 : index
    %231 = vector.load %arg5[%c1_140, %c0_141, %c0_142, %c0_143] : memref<2x4x32x8xf32, #tpu.memory_space<vmem>>, vector<1x1x32x8xf32>
    %232 = vector.shape_cast %231 : vector<1x1x32x8xf32> to vector<32x8xf32>
    %cst_144 = arith.constant dense<0.000000e+00> : vector<8x8xf32>
    %233 = tpu.matmul %220, %232, %cst_144 {dimension_numbers = #tpu.dot_dimension_numbers<[1], [0], [0], [1], [0, 0, 1, 1], [], []>} : vector<8x32xf32>, vector<32x8xf32>, vector<8x8xf32> -> vector<8x8xf32>
    %234 = vector.extract_strided_slice %224 {offsets = [1, 0], sizes = [1, 8], strides = [1, 1]} : vector<3x8xf32> to vector<1x8xf32>
    %235 = vector.broadcast %234 : vector<1x8xf32> to vector<8x8xf32>
    %236 = arith.addf %233, %235 : vector<8x8xf32>
    %c1_145 = arith.constant 1 : index
    %c0_146 = arith.constant 0 : index
    %c0_147 = arith.constant 0 : index
    %c0_148 = arith.constant 0 : index
    %237 = vector.load %arg6[%c1_145, %c0_146, %c0_147, %c0_148] : memref<2x4x32x8xf32, #tpu.memory_space<vmem>>, vector<1x1x32x8xf32>
    %238 = vector.shape_cast %237 : vector<1x1x32x8xf32> to vector<32x8xf32>
    %cst_149 = arith.constant dense<0.000000e+00> : vector<8x8xf32>
    %239 = tpu.matmul %220, %238, %cst_149 {dimension_numbers = #tpu.dot_dimension_numbers<[1], [0], [0], [1], [0, 0, 1, 1], [], []>} : vector<8x32xf32>, vector<32x8xf32>, vector<8x8xf32> -> vector<8x8xf32>
    %240 = vector.extract_strided_slice %224 {offsets = [2, 0], sizes = [1, 8], strides = [1, 1]} : vector<3x8xf32> to vector<1x8xf32>
    %241 = vector.broadcast %240 : vector<1x8xf32> to vector<8x8xf32>
    %242 = arith.addf %239, %241 : vector<8x8xf32>
    %cst_150 = arith.constant dense<0.000000e+00> : vector<8x8xf32>
    %243 = tpu.matmul %230, %236, %cst_150 {dimension_numbers = #tpu.dot_dimension_numbers<[1], [1], [0], [0], [0, 0, 1, 0], [], []>} : vector<8x8xf32>, vector<8x8xf32>, vector<8x8xf32> -> vector<8x8xf32>
    %cst_151 = arith.constant 0.353553385 : f32
    %244 = vector.broadcast %cst_151 : f32 to vector<8x8xf32>
    %245 = arith.mulf %243, %244 : vector<8x8xf32>
    %cst_152 = arith.constant dense<0xFF800000> : vector<8xf32>
    %246 = vector.multi_reduction <maximumf>, %245, %cst_152 [1] : vector<8x8xf32> to vector<8xf32>
    %247 = vector.shape_cast %246 : vector<8xf32> to vector<8x1xf32>
    %248 = vector.broadcast %247 : vector<8x1xf32> to vector<8x8xf32>
    %249 = arith.subf %245, %248 : vector<8x8xf32>
    %250 = math.exp %249 : vector<8x8xf32>
    %cst_153 = arith.constant dense<0.000000e+00> : vector<8xf32>
    %251 = vector.multi_reduction <add>, %250, %cst_153 [1] : vector<8x8xf32> to vector<8xf32>
    %252 = vector.shape_cast %251 : vector<8xf32> to vector<8x1xf32>
    %253 = tpu.reciprocal %252 {approx = true} : vector<8x1xf32> -> vector<8x1xf32>
    %254 = vector.broadcast %253 : vector<8x1xf32> to vector<8x8xf32>
    %255 = arith.mulf %250, %254 : vector<8x8xf32>
    %cst_154 = arith.constant dense<0.000000e+00> : vector<8x8xf32>
    %256 = tpu.matmul %255, %242, %cst_154 {dimension_numbers = #tpu.dot_dimension_numbers<[1], [0], [0], [1], [0, 0, 1, 1], [], []>} : vector<8x8xf32>, vector<8x8xf32>, vector<8x8xf32> -> vector<8x8xf32>
    %c1_155 = arith.constant 1 : index
    %c1_156 = arith.constant 1 : index
    %c0_157 = arith.constant 0 : index
    %c0_158 = arith.constant 0 : index
    %257 = vector.load %arg7[%c1_155, %c1_156, %c0_157, %c0_158] : memref<2x4x3x8xf32, #tpu.memory_space<vmem>>, vector<1x1x3x8xf32>
    %258 = vector.shape_cast %257 : vector<1x1x3x8xf32> to vector<3x8xf32>
    %c1_159 = arith.constant 1 : index
    %c1_160 = arith.constant 1 : index
    %c0_161 = arith.constant 0 : index
    %c0_162 = arith.constant 0 : index
    %259 = vector.load %arg4[%c1_159, %c1_160, %c0_161, %c0_162] : memref<2x4x32x8xf32, #tpu.memory_space<vmem>>, vector<1x1x32x8xf32>
    %260 = vector.shape_cast %259 : vector<1x1x32x8xf32> to vector<32x8xf32>
    %cst_163 = arith.constant dense<0.000000e+00> : vector<8x8xf32>
    %261 = tpu.matmul %220, %260, %cst_163 {dimension_numbers = #tpu.dot_dimension_numbers<[1], [0], [0], [1], [0, 0, 1, 1], [], []>} : vector<8x32xf32>, vector<32x8xf32>, vector<8x8xf32> -> vector<8x8xf32>
    %262 = vector.extract_strided_slice %258 {offsets = [0, 0], sizes = [1, 8], strides = [1, 1]} : vector<3x8xf32> to vector<1x8xf32>
    %263 = vector.broadcast %262 : vector<1x8xf32> to vector<8x8xf32>
    %264 = arith.addf %261, %263 : vector<8x8xf32>
    %c1_164 = arith.constant 1 : index
    %c1_165 = arith.constant 1 : index
    %c0_166 = arith.constant 0 : index
    %c0_167 = arith.constant 0 : index
    %265 = vector.load %arg5[%c1_164, %c1_165, %c0_166, %c0_167] : memref<2x4x32x8xf32, #tpu.memory_space<vmem>>, vector<1x1x32x8xf32>
    %266 = vector.shape_cast %265 : vector<1x1x32x8xf32> to vector<32x8xf32>
    %cst_168 = arith.constant dense<0.000000e+00> : vector<8x8xf32>
    %267 = tpu.matmul %220, %266, %cst_168 {dimension_numbers = #tpu.dot_dimension_numbers<[1], [0], [0], [1], [0, 0, 1, 1], [], []>} : vector<8x32xf32>, vector<32x8xf32>, vector<8x8xf32> -> vector<8x8xf32>
    %268 = vector.extract_strided_slice %258 {offsets = [1, 0], sizes = [1, 8], strides = [1, 1]} : vector<3x8xf32> to vector<1x8xf32>
    %269 = vector.broadcast %268 : vector<1x8xf32> to vector<8x8xf32>
    %270 = arith.addf %267, %269 : vector<8x8xf32>
    %c1_169 = arith.constant 1 : index
    %c1_170 = arith.constant 1 : index
    %c0_171 = arith.constant 0 : index
    %c0_172 = arith.constant 0 : index
    %271 = vector.load %arg6[%c1_169, %c1_170, %c0_171, %c0_172] : memref<2x4x32x8xf32, #tpu.memory_space<vmem>>, vector<1x1x32x8xf32>
    %272 = vector.shape_cast %271 : vector<1x1x32x8xf32> to vector<32x8xf32>
    %cst_173 = arith.constant dense<0.000000e+00> : vector<8x8xf32>
    %273 = tpu.matmul %220, %272, %cst_173 {dimension_numbers = #tpu.dot_dimension_numbers<[1], [0], [0], [1], [0, 0, 1, 1], [], []>} : vector<8x32xf32>, vector<32x8xf32>, vector<8x8xf32> -> vector<8x8xf32>
    %274 = vector.extract_strided_slice %258 {offsets = [2, 0], sizes = [1, 8], strides = [1, 1]} : vector<3x8xf32> to vector<1x8xf32>
    %275 = vector.broadcast %274 : vector<1x8xf32> to vector<8x8xf32>
    %276 = arith.addf %273, %275 : vector<8x8xf32>
    %cst_174 = arith.constant dense<0.000000e+00> : vector<8x8xf32>
    %277 = tpu.matmul %264, %270, %cst_174 {dimension_numbers = #tpu.dot_dimension_numbers<[1], [1], [0], [0], [0, 0, 1, 0], [], []>} : vector<8x8xf32>, vector<8x8xf32>, vector<8x8xf32> -> vector<8x8xf32>
    %cst_175 = arith.constant 0.353553385 : f32
    %278 = vector.broadcast %cst_175 : f32 to vector<8x8xf32>
    %279 = arith.mulf %277, %278 : vector<8x8xf32>
    %cst_176 = arith.constant dense<0xFF800000> : vector<8xf32>
    %280 = vector.multi_reduction <maximumf>, %279, %cst_176 [1] : vector<8x8xf32> to vector<8xf32>
    %281 = vector.shape_cast %280 : vector<8xf32> to vector<8x1xf32>
    %282 = vector.broadcast %281 : vector<8x1xf32> to vector<8x8xf32>
    %283 = arith.subf %279, %282 : vector<8x8xf32>
    %284 = math.exp %283 : vector<8x8xf32>
    %cst_177 = arith.constant dense<0.000000e+00> : vector<8xf32>
    %285 = vector.multi_reduction <add>, %284, %cst_177 [1] : vector<8x8xf32> to vector<8xf32>
    %286 = vector.shape_cast %285 : vector<8xf32> to vector<8x1xf32>
    %287 = tpu.reciprocal %286 {approx = true} : vector<8x1xf32> -> vector<8x1xf32>
    %288 = vector.broadcast %287 : vector<8x1xf32> to vector<8x8xf32>
    %289 = arith.mulf %284, %288 : vector<8x8xf32>
    %cst_178 = arith.constant dense<0.000000e+00> : vector<8x8xf32>
    %290 = tpu.matmul %289, %276, %cst_178 {dimension_numbers = #tpu.dot_dimension_numbers<[1], [0], [0], [1], [0, 0, 1, 1], [], []>} : vector<8x8xf32>, vector<8x8xf32>, vector<8x8xf32> -> vector<8x8xf32>
    %c1_179 = arith.constant 1 : index
    %c2_180 = arith.constant 2 : index
    %c0_181 = arith.constant 0 : index
    %c0_182 = arith.constant 0 : index
    %291 = vector.load %arg7[%c1_179, %c2_180, %c0_181, %c0_182] : memref<2x4x3x8xf32, #tpu.memory_space<vmem>>, vector<1x1x3x8xf32>
    %292 = vector.shape_cast %291 : vector<1x1x3x8xf32> to vector<3x8xf32>
    %c1_183 = arith.constant 1 : index
    %c2_184 = arith.constant 2 : index
    %c0_185 = arith.constant 0 : index
    %c0_186 = arith.constant 0 : index
    %293 = vector.load %arg4[%c1_183, %c2_184, %c0_185, %c0_186] : memref<2x4x32x8xf32, #tpu.memory_space<vmem>>, vector<1x1x32x8xf32>
    %294 = vector.shape_cast %293 : vector<1x1x32x8xf32> to vector<32x8xf32>
    %cst_187 = arith.constant dense<0.000000e+00> : vector<8x8xf32>
    %295 = tpu.matmul %220, %294, %cst_187 {dimension_numbers = #tpu.dot_dimension_numbers<[1], [0], [0], [1], [0, 0, 1, 1], [], []>} : vector<8x32xf32>, vector<32x8xf32>, vector<8x8xf32> -> vector<8x8xf32>
    %296 = vector.extract_strided_slice %292 {offsets = [0, 0], sizes = [1, 8], strides = [1, 1]} : vector<3x8xf32> to vector<1x8xf32>
    %297 = vector.broadcast %296 : vector<1x8xf32> to vector<8x8xf32>
    %298 = arith.addf %295, %297 : vector<8x8xf32>
    %c1_188 = arith.constant 1 : index
    %c2_189 = arith.constant 2 : index
    %c0_190 = arith.constant 0 : index
    %c0_191 = arith.constant 0 : index
    %299 = vector.load %arg5[%c1_188, %c2_189, %c0_190, %c0_191] : memref<2x4x32x8xf32, #tpu.memory_space<vmem>>, vector<1x1x32x8xf32>
    %300 = vector.shape_cast %299 : vector<1x1x32x8xf32> to vector<32x8xf32>
    %cst_192 = arith.constant dense<0.000000e+00> : vector<8x8xf32>
    %301 = tpu.matmul %220, %300, %cst_192 {dimension_numbers = #tpu.dot_dimension_numbers<[1], [0], [0], [1], [0, 0, 1, 1], [], []>} : vector<8x32xf32>, vector<32x8xf32>, vector<8x8xf32> -> vector<8x8xf32>
    %302 = vector.extract_strided_slice %292 {offsets = [1, 0], sizes = [1, 8], strides = [1, 1]} : vector<3x8xf32> to vector<1x8xf32>
    %303 = vector.broadcast %302 : vector<1x8xf32> to vector<8x8xf32>
    %304 = arith.addf %301, %303 : vector<8x8xf32>
    %c1_193 = arith.constant 1 : index
    %c2_194 = arith.constant 2 : index
    %c0_195 = arith.constant 0 : index
    %c0_196 = arith.constant 0 : index
    %305 = vector.load %arg6[%c1_193, %c2_194, %c0_195, %c0_196] : memref<2x4x32x8xf32, #tpu.memory_space<vmem>>, vector<1x1x32x8xf32>
    %306 = vector.shape_cast %305 : vector<1x1x32x8xf32> to vector<32x8xf32>
    %cst_197 = arith.constant dense<0.000000e+00> : vector<8x8xf32>
    %307 = tpu.matmul %220, %306, %cst_197 {dimension_numbers = #tpu.dot_dimension_numbers<[1], [0], [0], [1], [0, 0, 1, 1], [], []>} : vector<8x32xf32>, vector<32x8xf32>, vector<8x8xf32> -> vector<8x8xf32>
    %308 = vector.extract_strided_slice %292 {offsets = [2, 0], sizes = [1, 8], strides = [1, 1]} : vector<3x8xf32> to vector<1x8xf32>
    %309 = vector.broadcast %308 : vector<1x8xf32> to vector<8x8xf32>
    %310 = arith.addf %307, %309 : vector<8x8xf32>
    %cst_198 = arith.constant dense<0.000000e+00> : vector<8x8xf32>
    %311 = tpu.matmul %298, %304, %cst_198 {dimension_numbers = #tpu.dot_dimension_numbers<[1], [1], [0], [0], [0, 0, 1, 0], [], []>} : vector<8x8xf32>, vector<8x8xf32>, vector<8x8xf32> -> vector<8x8xf32>
    %cst_199 = arith.constant 0.353553385 : f32
    %312 = vector.broadcast %cst_199 : f32 to vector<8x8xf32>
    %313 = arith.mulf %311, %312 : vector<8x8xf32>
    %cst_200 = arith.constant dense<0xFF800000> : vector<8xf32>
    %314 = vector.multi_reduction <maximumf>, %313, %cst_200 [1] : vector<8x8xf32> to vector<8xf32>
    %315 = vector.shape_cast %314 : vector<8xf32> to vector<8x1xf32>
    %316 = vector.broadcast %315 : vector<8x1xf32> to vector<8x8xf32>
    %317 = arith.subf %313, %316 : vector<8x8xf32>
    %318 = math.exp %317 : vector<8x8xf32>
    %cst_201 = arith.constant dense<0.000000e+00> : vector<8xf32>
    %319 = vector.multi_reduction <add>, %318, %cst_201 [1] : vector<8x8xf32> to vector<8xf32>
    %320 = vector.shape_cast %319 : vector<8xf32> to vector<8x1xf32>
    %321 = tpu.reciprocal %320 {approx = true} : vector<8x1xf32> -> vector<8x1xf32>
    %322 = vector.broadcast %321 : vector<8x1xf32> to vector<8x8xf32>
    %323 = arith.mulf %318, %322 : vector<8x8xf32>
    %cst_202 = arith.constant dense<0.000000e+00> : vector<8x8xf32>
    %324 = tpu.matmul %323, %310, %cst_202 {dimension_numbers = #tpu.dot_dimension_numbers<[1], [0], [0], [1], [0, 0, 1, 1], [], []>} : vector<8x8xf32>, vector<8x8xf32>, vector<8x8xf32> -> vector<8x8xf32>
    %c1_203 = arith.constant 1 : index
    %c3_204 = arith.constant 3 : index
    %c0_205 = arith.constant 0 : index
    %c0_206 = arith.constant 0 : index
    %325 = vector.load %arg7[%c1_203, %c3_204, %c0_205, %c0_206] : memref<2x4x3x8xf32, #tpu.memory_space<vmem>>, vector<1x1x3x8xf32>
    %326 = vector.shape_cast %325 : vector<1x1x3x8xf32> to vector<3x8xf32>
    %c1_207 = arith.constant 1 : index
    %c3_208 = arith.constant 3 : index
    %c0_209 = arith.constant 0 : index
    %c0_210 = arith.constant 0 : index
    %327 = vector.load %arg4[%c1_207, %c3_208, %c0_209, %c0_210] : memref<2x4x32x8xf32, #tpu.memory_space<vmem>>, vector<1x1x32x8xf32>
    %328 = vector.shape_cast %327 : vector<1x1x32x8xf32> to vector<32x8xf32>
    %cst_211 = arith.constant dense<0.000000e+00> : vector<8x8xf32>
    %329 = tpu.matmul %220, %328, %cst_211 {dimension_numbers = #tpu.dot_dimension_numbers<[1], [0], [0], [1], [0, 0, 1, 1], [], []>} : vector<8x32xf32>, vector<32x8xf32>, vector<8x8xf32> -> vector<8x8xf32>
    %330 = vector.extract_strided_slice %326 {offsets = [0, 0], sizes = [1, 8], strides = [1, 1]} : vector<3x8xf32> to vector<1x8xf32>
    %331 = vector.broadcast %330 : vector<1x8xf32> to vector<8x8xf32>
    %332 = arith.addf %329, %331 : vector<8x8xf32>
    %c1_212 = arith.constant 1 : index
    %c3_213 = arith.constant 3 : index
    %c0_214 = arith.constant 0 : index
    %c0_215 = arith.constant 0 : index
    %333 = vector.load %arg5[%c1_212, %c3_213, %c0_214, %c0_215] : memref<2x4x32x8xf32, #tpu.memory_space<vmem>>, vector<1x1x32x8xf32>
    %334 = vector.shape_cast %333 : vector<1x1x32x8xf32> to vector<32x8xf32>
    %cst_216 = arith.constant dense<0.000000e+00> : vector<8x8xf32>
    %335 = tpu.matmul %220, %334, %cst_216 {dimension_numbers = #tpu.dot_dimension_numbers<[1], [0], [0], [1], [0, 0, 1, 1], [], []>} : vector<8x32xf32>, vector<32x8xf32>, vector<8x8xf32> -> vector<8x8xf32>
    %336 = vector.extract_strided_slice %326 {offsets = [1, 0], sizes = [1, 8], strides = [1, 1]} : vector<3x8xf32> to vector<1x8xf32>
    %337 = vector.broadcast %336 : vector<1x8xf32> to vector<8x8xf32>
    %338 = arith.addf %335, %337 : vector<8x8xf32>
    %c1_217 = arith.constant 1 : index
    %c3_218 = arith.constant 3 : index
    %c0_219 = arith.constant 0 : index
    %c0_220 = arith.constant 0 : index
    %339 = vector.load %arg6[%c1_217, %c3_218, %c0_219, %c0_220] : memref<2x4x32x8xf32, #tpu.memory_space<vmem>>, vector<1x1x32x8xf32>
    %340 = vector.shape_cast %339 : vector<1x1x32x8xf32> to vector<32x8xf32>
    %cst_221 = arith.constant dense<0.000000e+00> : vector<8x8xf32>
    %341 = tpu.matmul %220, %340, %cst_221 {dimension_numbers = #tpu.dot_dimension_numbers<[1], [0], [0], [1], [0, 0, 1, 1], [], []>} : vector<8x32xf32>, vector<32x8xf32>, vector<8x8xf32> -> vector<8x8xf32>
    %342 = vector.extract_strided_slice %326 {offsets = [2, 0], sizes = [1, 8], strides = [1, 1]} : vector<3x8xf32> to vector<1x8xf32>
    %343 = vector.broadcast %342 : vector<1x8xf32> to vector<8x8xf32>
    %344 = arith.addf %341, %343 : vector<8x8xf32>
    %cst_222 = arith.constant dense<0.000000e+00> : vector<8x8xf32>
    %345 = tpu.matmul %332, %338, %cst_222 {dimension_numbers = #tpu.dot_dimension_numbers<[1], [1], [0], [0], [0, 0, 1, 0], [], []>} : vector<8x8xf32>, vector<8x8xf32>, vector<8x8xf32> -> vector<8x8xf32>
    %cst_223 = arith.constant 0.353553385 : f32
    %346 = vector.broadcast %cst_223 : f32 to vector<8x8xf32>
    %347 = arith.mulf %345, %346 : vector<8x8xf32>
    %cst_224 = arith.constant dense<0xFF800000> : vector<8xf32>
    %348 = vector.multi_reduction <maximumf>, %347, %cst_224 [1] : vector<8x8xf32> to vector<8xf32>
    %349 = vector.shape_cast %348 : vector<8xf32> to vector<8x1xf32>
    %350 = vector.broadcast %349 : vector<8x1xf32> to vector<8x8xf32>
    %351 = arith.subf %347, %350 : vector<8x8xf32>
    %352 = math.exp %351 : vector<8x8xf32>
    %cst_225 = arith.constant dense<0.000000e+00> : vector<8xf32>
    %353 = vector.multi_reduction <add>, %352, %cst_225 [1] : vector<8x8xf32> to vector<8xf32>
    %354 = vector.shape_cast %353 : vector<8xf32> to vector<8x1xf32>
    %355 = tpu.reciprocal %354 {approx = true} : vector<8x1xf32> -> vector<8x1xf32>
    %356 = vector.broadcast %355 : vector<8x1xf32> to vector<8x8xf32>
    %357 = arith.mulf %352, %356 : vector<8x8xf32>
    %cst_226 = arith.constant dense<0.000000e+00> : vector<8x8xf32>
    %358 = tpu.matmul %357, %344, %cst_226 {dimension_numbers = #tpu.dot_dimension_numbers<[1], [0], [0], [1], [0, 0, 1, 1], [], []>} : vector<8x8xf32>, vector<8x8xf32>, vector<8x8xf32> -> vector<8x8xf32>
    %359 = tpu.concatenate %256, %290, %324, %358 in 1 : vector<8x8xf32>, vector<8x8xf32>, vector<8x8xf32>, vector<8x8xf32> -> vector<8x32xf32>
    %c1_227 = arith.constant 1 : index
    %c0_228 = arith.constant 0 : index
    %c0_229 = arith.constant 0 : index
    %360 = vector.load %arg8[%c1_227, %c0_228, %c0_229] : memref<2x32x32xf32, #tpu.memory_space<vmem>>, vector<1x32x32xf32>
    %361 = vector.shape_cast %360 : vector<1x32x32xf32> to vector<32x32xf32>
    %cst_230 = arith.constant dense<0.000000e+00> : vector<8x32xf32>
    %362 = tpu.matmul %359, %361, %cst_230 {dimension_numbers = #tpu.dot_dimension_numbers<[1], [0], [0], [1], [0, 0, 1, 1], [], []>} : vector<8x32xf32>, vector<32x32xf32>, vector<8x32xf32> -> vector<8x32xf32>
    %363 = vector.extract_strided_slice %222 {offsets = [0, 0], sizes = [1, 32], strides = [1, 1]} : vector<6x32xf32> to vector<1x32xf32>
    %364 = vector.broadcast %363 : vector<1x32xf32> to vector<8x32xf32>
    %365 = arith.addf %362, %364 : vector<8x32xf32>
    %366 = arith.addf %220, %365 : vector<8x32xf32>
    %367 = vector.extract_strided_slice %222 {offsets = [1, 0], sizes = [1, 32], strides = [1, 1]} : vector<6x32xf32> to vector<1x32xf32>
    %368 = vector.extract_strided_slice %222 {offsets = [2, 0], sizes = [1, 32], strides = [1, 1]} : vector<6x32xf32> to vector<1x32xf32>
    %cst_231 = arith.constant dense<0.000000e+00> : vector<8xf32>
    %369 = vector.multi_reduction <add>, %366, %cst_231 [1] : vector<8x32xf32> to vector<8xf32>
    %370 = vector.shape_cast %369 : vector<8xf32> to vector<8x1xf32>
    %cst_232 = arith.constant 3.200000e+01 : f32
    %371 = vector.broadcast %cst_232 : f32 to vector<8x1xf32>
    %372 = arith.divf %370, %371 : vector<8x1xf32>
    %373 = vector.broadcast %372 : vector<8x1xf32> to vector<8x32xf32>
    %374 = arith.subf %366, %373 : vector<8x32xf32>
    %375 = arith.mulf %374, %374 : vector<8x32xf32>
    %cst_233 = arith.constant dense<0.000000e+00> : vector<8xf32>
    %376 = vector.multi_reduction <add>, %375, %cst_233 [1] : vector<8x32xf32> to vector<8xf32>
    %377 = vector.shape_cast %376 : vector<8xf32> to vector<8x1xf32>
    %cst_234 = arith.constant 3.200000e+01 : f32
    %378 = vector.broadcast %cst_234 : f32 to vector<8x1xf32>
    %379 = arith.divf %377, %378 : vector<8x1xf32>
    %380 = vector.broadcast %372 : vector<8x1xf32> to vector<8x32xf32>
    %381 = arith.subf %366, %380 : vector<8x32xf32>
    %cst_235 = arith.constant 9.99999974E-6 : f32
    %382 = vector.broadcast %cst_235 : f32 to vector<8x1xf32>
    %383 = arith.addf %379, %382 : vector<8x1xf32>
    %384 = math.rsqrt %383 : vector<8x1xf32>
    %385 = vector.broadcast %384 : vector<8x1xf32> to vector<8x32xf32>
    %386 = arith.mulf %381, %385 : vector<8x32xf32>
    %387 = vector.broadcast %367 : vector<1x32xf32> to vector<8x32xf32>
    %388 = arith.mulf %386, %387 : vector<8x32xf32>
    %389 = vector.broadcast %368 : vector<1x32xf32> to vector<8x32xf32>
    %390 = arith.addf %388, %389 : vector<8x32xf32>
    %c1_236 = arith.constant 1 : index
    %c0_237 = arith.constant 0 : index
    %c0_238 = arith.constant 0 : index
    %391 = vector.load %arg9[%c1_236, %c0_237, %c0_238] : memref<2x32x64xf32, #tpu.memory_space<vmem>>, vector<1x32x64xf32>
    %392 = vector.shape_cast %391 : vector<1x32x64xf32> to vector<32x64xf32>
    %cst_239 = arith.constant dense<0.000000e+00> : vector<8x64xf32>
    %393 = tpu.matmul %390, %392, %cst_239 {dimension_numbers = #tpu.dot_dimension_numbers<[1], [0], [0], [1], [0, 0, 1, 1], [], []>} : vector<8x32xf32>, vector<32x64xf32>, vector<8x64xf32> -> vector<8x64xf32>
    %c1_240 = arith.constant 1 : index
    %c0_241 = arith.constant 0 : index
    %c0_242 = arith.constant 0 : index
    %394 = vector.load %arg10[%c1_240, %c0_241, %c0_242] : memref<2x1x64xf32, #tpu.memory_space<vmem>>, vector<1x1x64xf32>
    %395 = vector.shape_cast %394 : vector<1x1x64xf32> to vector<1x64xf32>
    %396 = vector.broadcast %395 : vector<1x64xf32> to vector<8x64xf32>
    %397 = arith.addf %393, %396 : vector<8x64xf32>
    %cst_243 = arith.constant 0.000000e+00 : f32
    %398 = vector.broadcast %cst_243 : f32 to vector<8x64xf32>
    %399 = arith.maximumf %397, %398 : vector<8x64xf32>
    %c1_244 = arith.constant 1 : index
    %c0_245 = arith.constant 0 : index
    %c0_246 = arith.constant 0 : index
    %400 = vector.load %arg11[%c1_244, %c0_245, %c0_246] : memref<2x64x32xf32, #tpu.memory_space<vmem>>, vector<1x64x32xf32>
    %401 = vector.shape_cast %400 : vector<1x64x32xf32> to vector<64x32xf32>
    %cst_247 = arith.constant dense<0.000000e+00> : vector<8x32xf32>
    %402 = tpu.matmul %399, %401, %cst_247 {dimension_numbers = #tpu.dot_dimension_numbers<[1], [0], [0], [1], [0, 0, 1, 1], [], []>} : vector<8x64xf32>, vector<64x32xf32>, vector<8x32xf32> -> vector<8x32xf32>
    %403 = vector.extract_strided_slice %222 {offsets = [3, 0], sizes = [1, 32], strides = [1, 1]} : vector<6x32xf32> to vector<1x32xf32>
    %404 = vector.broadcast %403 : vector<1x32xf32> to vector<8x32xf32>
    %405 = arith.addf %402, %404 : vector<8x32xf32>
    %406 = arith.addf %390, %405 : vector<8x32xf32>
    %407 = vector.extract_strided_slice %222 {offsets = [4, 0], sizes = [1, 32], strides = [1, 1]} : vector<6x32xf32> to vector<1x32xf32>
    %408 = vector.extract_strided_slice %222 {offsets = [5, 0], sizes = [1, 32], strides = [1, 1]} : vector<6x32xf32> to vector<1x32xf32>
    %cst_248 = arith.constant dense<0.000000e+00> : vector<8xf32>
    %409 = vector.multi_reduction <add>, %406, %cst_248 [1] : vector<8x32xf32> to vector<8xf32>
    %410 = vector.shape_cast %409 : vector<8xf32> to vector<8x1xf32>
    %cst_249 = arith.constant 3.200000e+01 : f32
    %411 = vector.broadcast %cst_249 : f32 to vector<8x1xf32>
    %412 = arith.divf %410, %411 : vector<8x1xf32>
    %413 = vector.broadcast %412 : vector<8x1xf32> to vector<8x32xf32>
    %414 = arith.subf %406, %413 : vector<8x32xf32>
    %415 = arith.mulf %414, %414 : vector<8x32xf32>
    %cst_250 = arith.constant dense<0.000000e+00> : vector<8xf32>
    %416 = vector.multi_reduction <add>, %415, %cst_250 [1] : vector<8x32xf32> to vector<8xf32>
    %417 = vector.shape_cast %416 : vector<8xf32> to vector<8x1xf32>
    %cst_251 = arith.constant 3.200000e+01 : f32
    %418 = vector.broadcast %cst_251 : f32 to vector<8x1xf32>
    %419 = arith.divf %417, %418 : vector<8x1xf32>
    %420 = vector.broadcast %412 : vector<8x1xf32> to vector<8x32xf32>
    %421 = arith.subf %406, %420 : vector<8x32xf32>
    %cst_252 = arith.constant 9.99999974E-6 : f32
    %422 = vector.broadcast %cst_252 : f32 to vector<8x1xf32>
    %423 = arith.addf %419, %422 : vector<8x1xf32>
    %424 = math.rsqrt %423 : vector<8x1xf32>
    %425 = vector.broadcast %424 : vector<8x1xf32> to vector<8x32xf32>
    %426 = arith.mulf %421, %425 : vector<8x32xf32>
    %427 = vector.broadcast %407 : vector<1x32xf32> to vector<8x32xf32>
    %428 = arith.mulf %426, %427 : vector<8x32xf32>
    %429 = vector.broadcast %408 : vector<1x32xf32> to vector<8x32xf32>
    %430 = arith.addf %428, %429 : vector<8x32xf32>
    %c0_253 = arith.constant 0 : index
    %c0_254 = arith.constant 0 : index
    %c0_255 = arith.constant 0 : index
    %431 = vector.load %arg15[%c0_253, %c0_254, %c0_255] : memref<1x8x32xf32, #tpu.memory_space<vmem>>, vector<1x8x32xf32>
    %432 = vector.shape_cast %431 : vector<1x8x32xf32> to vector<8x32xf32>
    %433 = vector.shape_cast %430 : vector<8x32xf32> to vector<1x8x32xf32>
    tpu.vector_store %arg15[%c0_253, %c0_254, %c0_255], %433 {strides = array<i32>} : memref<1x8x32xf32, #tpu.memory_space<vmem>>, vector<1x8x32xf32>,
    %c0_256 = arith.constant 0 : index
    %c0_257 = arith.constant 0 : index
    %434 = vector.load %arg13[%c0_256, %c0_257] : memref<2x32xf32, #tpu.memory_space<vmem>>, vector<1x32xf32>
    %c1_258 = arith.constant 1 : index
    %c0_259 = arith.constant 0 : index
    %435 = vector.load %arg13[%c1_258, %c0_259] : memref<2x32xf32, #tpu.memory_space<vmem>>, vector<1x32xf32>
    %cst_260 = arith.constant dense<0.000000e+00> : vector<8xf32>
    %436 = vector.multi_reduction <add>, %430, %cst_260 [1] : vector<8x32xf32> to vector<8xf32>
    %437 = vector.shape_cast %436 : vector<8xf32> to vector<8x1xf32>
    %cst_261 = arith.constant 3.200000e+01 : f32
    %438 = vector.broadcast %cst_261 : f32 to vector<8x1xf32>
    %439 = arith.divf %437, %438 : vector<8x1xf32>
    %440 = vector.broadcast %439 : vector<8x1xf32> to vector<8x32xf32>
    %441 = arith.subf %430, %440 : vector<8x32xf32>
    %442 = arith.mulf %441, %441 : vector<8x32xf32>
    %cst_262 = arith.constant dense<0.000000e+00> : vector<8xf32>
    %443 = vector.multi_reduction <add>, %442, %cst_262 [1] : vector<8x32xf32> to vector<8xf32>
    %444 = vector.shape_cast %443 : vector<8xf32> to vector<8x1xf32>
    %cst_263 = arith.constant 3.200000e+01 : f32
    %445 = vector.broadcast %cst_263 : f32 to vector<8x1xf32>
    %446 = arith.divf %444, %445 : vector<8x1xf32>
    %447 = vector.broadcast %439 : vector<8x1xf32> to vector<8x32xf32>
    %448 = arith.subf %430, %447 : vector<8x32xf32>
    %cst_264 = arith.constant 9.99999974E-6 : f32
    %449 = vector.broadcast %cst_264 : f32 to vector<8x1xf32>
    %450 = arith.addf %446, %449 : vector<8x1xf32>
    %451 = math.rsqrt %450 : vector<8x1xf32>
    %452 = vector.broadcast %451 : vector<8x1xf32> to vector<8x32xf32>
    %453 = arith.mulf %448, %452 : vector<8x32xf32>
    %454 = vector.broadcast %434 : vector<1x32xf32> to vector<8x32xf32>
    %455 = arith.mulf %453, %454 : vector<8x32xf32>
    %456 = vector.broadcast %435 : vector<1x32xf32> to vector<8x32xf32>
    %457 = arith.addf %455, %456 : vector<8x32xf32>
    %c0_265 = arith.constant 0 : index
    %c0_266 = arith.constant 0 : index
    %458 = vector.load %arg14[%c0_265, %c0_266] : memref<32x128xf32, #tpu.memory_space<vmem>>, vector<32x128xf32>
    %cst_267 = arith.constant dense<0.000000e+00> : vector<8x128xf32>
    %459 = tpu.matmul %457, %458, %cst_267 {dimension_numbers = #tpu.dot_dimension_numbers<[1], [0], [0], [1], [0, 0, 1, 1], [], []>} : vector<8x32xf32>, vector<32x128xf32>, vector<8x128xf32> -> vector<8x128xf32>
    %c0_268 = arith.constant 0 : index
    %c0_269 = arith.constant 0 : index
    %c0_270 = arith.constant 0 : index
    %460 = vector.load %arg16[%c0_268, %c0_269, %c0_270] : memref<1x8x128xf32, #tpu.memory_space<vmem>>, vector<1x8x128xf32>
    %461 = vector.shape_cast %460 : vector<1x8x128xf32> to vector<8x128xf32>
    %462 = vector.shape_cast %459 : vector<8x128xf32> to vector<1x8x128xf32>
    tpu.vector_store %arg16[%c0_268, %c0_269, %c0_270], %462 {strides = array<i32>} : memref<1x8x128xf32, #tpu.memory_space<vmem>>, vector<1x8x128xf32>,
    return
  }
  func.func @transform_0(%arg0: i32) -> (i32, i32, i32) {
    %c0_i32 = arith.constant 0 : i32
    %c0_i32_0 = arith.constant 0 : i32
    %c0_i32_1 = arith.constant 0 : i32
    return %arg0, %c0_i32, %c0_i32_0 : i32, i32, i32
  }
  func.func @transform_1(%arg0: i32) -> (i32, i32) {
    %c0_i32 = arith.constant 0 : i32
    %c0_i32_0 = arith.constant 0 : i32
    %c0_i32_1 = arith.constant 0 : i32
    return %c0_i32, %c0_i32_0 : i32, i32
  }
  func.func @transform_2(%arg0: i32) -> (i32, i32) {
    %c0_i32 = arith.constant 0 : i32
    %c0_i32_0 = arith.constant 0 : i32
    %c0_i32_1 = arith.constant 0 : i32
    return %c0_i32, %c0_i32_0 : i32, i32
  }
  func.func @transform_3(%arg0: i32) -> (i32, i32, i32, i32) {
    %c0_i32 = arith.constant 0 : i32
    %c0_i32_0 = arith.constant 0 : i32
    %c0_i32_1 = arith.constant 0 : i32
    %c0_i32_2 = arith.constant 0 : i32
    %c0_i32_3 = arith.constant 0 : i32
    return %c0_i32, %c0_i32_0, %c0_i32_1, %c0_i32_2 : i32, i32, i32, i32
  }
  func.func @transform_4(%arg0: i32) -> (i32, i32, i32, i32) {
    %c0_i32 = arith.constant 0 : i32
    %c0_i32_0 = arith.constant 0 : i32
    %c0_i32_1 = arith.constant 0 : i32
    %c0_i32_2 = arith.constant 0 : i32
    %c0_i32_3 = arith.constant 0 : i32
    return %c0_i32, %c0_i32_0, %c0_i32_1, %c0_i32_2 : i32, i32, i32, i32
  }
  func.func @transform_5(%arg0: i32) -> (i32, i32, i32, i32) {
    %c0_i32 = arith.constant 0 : i32
    %c0_i32_0 = arith.constant 0 : i32
    %c0_i32_1 = arith.constant 0 : i32
    %c0_i32_2 = arith.constant 0 : i32
    %c0_i32_3 = arith.constant 0 : i32
    return %c0_i32, %c0_i32_0, %c0_i32_1, %c0_i32_2 : i32, i32, i32, i32
  }
  func.func @transform_6(%arg0: i32) -> (i32, i32, i32, i32) {
    %c0_i32 = arith.constant 0 : i32
    %c0_i32_0 = arith.constant 0 : i32
    %c0_i32_1 = arith.constant 0 : i32
    %c0_i32_2 = arith.constant 0 : i32
    %c0_i32_3 = arith.constant 0 : i32
    return %c0_i32, %c0_i32_0, %c0_i32_1, %c0_i32_2 : i32, i32, i32, i32
  }
  func.func @transform_7(%arg0: i32) -> (i32, i32, i32) {
    %c0_i32 = arith.constant 0 : i32
    %c0_i32_0 = arith.constant 0 : i32
    %c0_i32_1 = arith.constant 0 : i32
    %c0_i32_2 = arith.constant 0 : i32
    return %c0_i32, %c0_i32_0, %c0_i32_1 : i32, i32, i32
  }
  func.func @transform_8(%arg0: i32) -> (i32, i32, i32) {
    %c0_i32 = arith.constant 0 : i32
    %c0_i32_0 = arith.constant 0 : i32
    %c0_i32_1 = arith.constant 0 : i32
    %c0_i32_2 = arith.constant 0 : i32
    return %c0_i32, %c0_i32_0, %c0_i32_1 : i32, i32, i32
  }
  func.func @transform_9(%arg0: i32) -> (i32, i32, i32) {
    %c0_i32 = arith.constant 0 : i32
    %c0_i32_0 = arith.constant 0 : i32
    %c0_i32_1 = arith.constant 0 : i32
    %c0_i32_2 = arith.constant 0 : i32
    return %c0_i32, %c0_i32_0, %c0_i32_1 : i32, i32, i32
  }
  func.func @transform_10(%arg0: i32) -> (i32, i32, i32) {
    %c0_i32 = arith.constant 0 : i32
    %c0_i32_0 = arith.constant 0 : i32
    %c0_i32_1 = arith.constant 0 : i32
    %c0_i32_2 = arith.constant 0 : i32
    return %c0_i32, %c0_i32_0, %c0_i32_1 : i32, i32, i32
  }
  func.func @transform_11(%arg0: i32) -> (i32, i32, i32) {
    %c0_i32 = arith.constant 0 : i32
    %c0_i32_0 = arith.constant 0 : i32
    %c0_i32_1 = arith.constant 0 : i32
    %c0_i32_2 = arith.constant 0 : i32
    return %c0_i32, %c0_i32_0, %c0_i32_1 : i32, i32, i32
  }
  func.func @transform_12(%arg0: i32) -> (i32, i32) {
    %c0_i32 = arith.constant 0 : i32
    %c0_i32_0 = arith.constant 0 : i32
    %c0_i32_1 = arith.constant 0 : i32
    return %c0_i32, %c0_i32_0 : i32, i32
  }
  func.func @transform_13(%arg0: i32) -> (i32, i32) {
    %c0_i32 = arith.constant 0 : i32
    %c0_i32_0 = arith.constant 0 : i32
    %c0_i32_1 = arith.constant 0 : i32
    return %c0_i32, %c0_i32_0 : i32, i32
  }
  func.func @transform_14(%arg0: i32) -> (i32, i32, i32) {
    %c0_i32 = arith.constant 0 : i32
    %c0_i32_0 = arith.constant 0 : i32
    %c0_i32_1 = arith.constant 0 : i32
    return %arg0, %c0_i32, %c0_i32_0 : i32, i32, i32
  }
  func.func @transform_15(%arg0: i32) -> (i32, i32, i32) {
    %c0_i32 = arith.constant 0 : i32
    %c0_i32_0 = arith.constant 0 : i32
    %c0_i32_1 = arith.constant 0 : i32
    return %arg0, %c0_i32, %c0_i32_0 : i32, i32, i32
  }
}

</mosaic_0001>

<llo_original>
// kernel: categorical_transformer_forward.1
$region0: #{categorical_transformer_forward.1}
  #allocation0 [shape = 'u32[]', space=smem, size = 0x4, offset = 0x4, fixed_abs, tag = 'smem constant byte address 0x4 - core index']
  #allocation1 [shape = 'u32[144,128]{1,0:T(1,128)}', space=vmem, size = 0x12000, scoped, tag = 'internal scratch']
  %s0 = inlined_call_operand.vmem [shape: s32[2,8,1], index: 0, kind: input, shape index: {}]
  %s1 = inlined_call_operand.vmem [shape: f32[16,32], index: 1, kind: input, shape index: {}]
  %s2 = inlined_call_operand.vmem [shape: f32[8,32], index: 2, kind: input, shape index: {}]
  %s3 = inlined_call_operand.vmem [shape: f32[2,4,32,8], index: 3, kind: input, shape index: {}]
  %s4 = inlined_call_operand.vmem [shape: f32[2,4,32,8], index: 4, kind: input, shape index: {}]
  %s5 = inlined_call_operand.vmem [shape: f32[2,4,32,8], index: 5, kind: input, shape index: {}]
  %s6 = inlined_call_operand.vmem [shape: f32[2,4,3,8], index: 6, kind: input, shape index: {}]
  %s7 = inlined_call_operand.vmem [shape: f32[2,32,32], index: 7, kind: input, shape index: {}]
  %s8 = inlined_call_operand.vmem [shape: f32[2,32,64], index: 8, kind: input, shape index: {}]
  %s9 = inlined_call_operand.vmem [shape: f32[2,1,64], index: 9, kind: input, shape index: {}]
  %s10 = inlined_call_operand.vmem [shape: f32[2,64,32], index: 10, kind: input, shape index: {}]
  %s11 = inlined_call_operand.vmem [shape: f32[2,6,32], index: 11, kind: input, shape index: {}]
  %s12 = inlined_call_operand.vmem [shape: f32[2,32], index: 12, kind: input, shape index: {}]
  %s13 = inlined_call_operand.vmem [shape: f32[32,128], index: 13, kind: input, shape index: {}]
  %s14 = inlined_call_operand.hbm [shape: f32[2,8,32], index: 14, kind: output, shape index: {0}]
  %s15 = inlined_call_operand.hbm [shape: f32[2,8,128], index: 15, kind: output, shape index: {1}]
  %16 = xla_tuple %s14, %s15
  %s17 = sld [smem:[#allocation0]]
  $region97: #{categorical_transformer_forward.1} parent=0
    _
  %s19 = ssub.s32 1, %s17
  %s20 = scalar_select 0, %s19, %s17
  $region1: #{categorical_transformer_forward.1} parent=0
    #allocation2 [shape = 'u8[8192]{0}', space=vmem, size = 0x2000, scoped, tag = 'output window, operand 0']
    #allocation3 [shape = 's32[2]{0}', space=sflag, size = 0x8, scoped, tag = 'scoped memory for categorical_transformer_forward.1']
    #allocation4 [shape = 'u8[8192]{0}', space=vmem, size = 0x2000, scoped, tag = 'output window, operand 1']
    #allocation5 [shape = 's32[2]{0}', space=sflag, size = 0x8, scoped, tag = 'scoped memory for categorical_transformer_forward.1']
    %21 = vsyncpa [#allocation3], 0
    %s22 = scalar_lea.sflag [#allocation3], 1
    %23 = vsyncpa %s22, 0
    %24 = vsyncpa [#allocation5], 0
    %s25 = scalar_lea.sflag [#allocation5], 1
    %26 = vsyncpa %s25, 0
    loop: start=0, step=1, limit=4
    $region2: #{categorical_transformer_forward.1} parent=1 // loop_pre_header
      _
    $region3: #{categorical_transformer_forward.1} parent=1 // loop_header
      %s28 = sphi 0, %s32
      %p29 = scmp.ge.s32.totalorder %s28, 4
      %s38 = sphi 0, %s40
      %s41 = sphi 0, %s38
      %s42 = sphi 0, %s41
      %s58 = sphi 0, %s42
      %s62 = sphi 0, %s62
      %s64 = sphi 0, %s62
      %s65 = sphi 0, %s64
      %s79 = sphi 0, %s65
      %s83 = sphi 0, %s83
      %s85 = sphi 0, %s83
      %s86 = sphi 0, %s85
      %s100 = sphi 0, %s86
      %s104 = sphi 0, %s104
      %s106 = sphi 0, %s104
      %s107 = sphi 0, %s106
      %s121 = sphi 0, %s107
      %s125 = sphi 0, %s125
      %s127 = sphi 0, %s125
      %s128 = sphi 0, %s127
      %s142 = sphi 0, %s128
      %s146 = sphi 0, %s146
      %s148 = sphi 0, %s146
      %s149 = sphi 0, %s148
      %s163 = sphi 0, %s149
      %s167 = sphi 0, %s167
      %s169 = sphi 0, %s167
      %s170 = sphi 0, %s169
      %s184 = sphi 0, %s170
      %s188 = sphi 0, %s188
      %s190 = sphi 0, %s188
      %s191 = sphi 0, %s190
      %s205 = sphi 0, %s191
      %s209 = sphi 0, %s209
      %s211 = sphi 0, %s209
      %s212 = sphi 0, %s211
      %s226 = sphi 0, %s212
      %s230 = sphi 0, %s230
      %s232 = sphi 0, %s230
      %s233 = sphi 0, %s232
      %s247 = sphi 0, %s233
      %s251 = sphi 0, %s251
      %s253 = sphi 0, %s251
      %s254 = sphi 0, %s253
      %s268 = sphi 0, %s254
      %s272 = sphi 0, %s272
      %s274 = sphi 0, %s272
      %s275 = sphi 0, %s274
      %s289 = sphi 0, %s275
      %s293 = sphi 0, %s293
      %s295 = sphi 0, %s293
      %s296 = sphi 0, %s295
      %s310 = sphi 0, %s296
      %s314 = sphi 0, %s314
      %s316 = sphi 0, %s314
      %s317 = sphi 0, %s316
      %s331 = sphi 0, %s317
      %s337 = sphi 0, %s339
      %s340 = sphi 0, %s337
      %s341 = sphi 0, %s340
      %s357 = sphi 0, %s341
      %s363 = sphi 0, %s365
      %s366 = sphi 0, %s363
      %s367 = sphi 0, %s366
      %s383 = sphi 0, %s367
    $region4: #{categorical_transformer_forward.1} parent=1 // loop_header_branch
      %31 = sbr.rel (%p29) target = $region8
    $region5: #{categorical_transformer_forward.1} parent=1 // loop_body
      %s33 = ssub.s32 %s28, 1
      %s34 = ssub.s32 %s28, 2
      %s35 = sadd.s32 %s28, 1
      %s36 = ssub.s32 %s28, %s35
      %p37 = scmp.eq.s32.totalorder %s36, 0
      %s39 = sadd.s32 %s38, 1
      %s40 = scalar_select %p37, %s38, %s39
      %p43 = pneg %p37
      %p44 = scmp.eq.s32.totalorder %s28, 1
      %p45 = por %p43, %p44
      %p46 = scmp.ne.s32.totalorder %s38, %s41
      %p47 = scmp.eq.s32.totalorder %s28, 0
      %p48 = por %p46, %p47
      %p49 = scmp.ne.s32.totalorder %s38, %s41
      %p50 = scmp.eq.s32.totalorder %s33, 1
      %p51 = por %p49, %p50
      %p52 = scmp.ne.s32.totalorder %s41, %s42
      %p53 = scmp.eq.s32.totalorder %s33, 0
      %p54 = por %p52, %p53
      %p55 = scmp.ne.s32.totalorder %s41, %s42
      %p56 = scmp.eq.s32.totalorder %s34, 1
      %p57 = por %p55, %p56
      %p59 = scmp.ne.s32.totalorder %s42, %s58
      %p60 = scmp.eq.s32.totalorder %s34, 0
      %p61 = por %p59, %p60
      %s63 = sadd.s32 %s62, 1
      %p66 = scmp.eq.s32.totalorder %s28, 1
      %p67 = scmp.ne.s32.totalorder %s62, %s64
      %p68 = scmp.eq.s32.totalorder %s28, 0
      %p69 = por %p67, %p68
      %p70 = scmp.ne.s32.totalorder %s62, %s64
      %p71 = scmp.eq.s32.totalorder %s33, 1
      %p72 = por %p70, %p71
      %p73 = scmp.ne.s32.totalorder %s64, %s65
      %p74 = scmp.eq.s32.totalorder %s33, 0
      %p75 = por %p73, %p74
      %p76 = scmp.ne.s32.totalorder %s64, %s65
      %p77 = scmp.eq.s32.totalorder %s34, 1
      %p78 = por %p76, %p77
      %p80 = scmp.ne.s32.totalorder %s65, %s79
      %p81 = scmp.eq.s32.totalorder %s34, 0
      %p82 = por %p80, %p81
      %s84 = sadd.s32 %s83, 1
      %p87 = scmp.eq.s32.totalorder %s28, 1
      %p88 = scmp.ne.s32.totalorder %s83, %s85
      %p89 = scmp.eq.s32.totalorder %s28, 0
      %p90 = por %p88, %p89
      %p91 = scmp.ne.s32.totalorder %s83, %s85
      %p92 = scmp.eq.s32.totalorder %s33, 1
      %p93 = por %p91, %p92
      %p94 = scmp.ne.s32.totalorder %s85, %s86
      %p95 = scmp.eq.s32.totalorder %s33, 0
      %p96 = por %p94, %p95
      %p97 = scmp.ne.s32.totalorder %s85, %s86
      %p98 = scmp.eq.s32.totalorder %s34, 1
      %p99 = por %p97, %p98
      %p101 = scmp.ne.s32.totalorder %s86, %s100
      %p102 = scmp.eq.s32.totalorder %s34, 0
      %p103 = por %p101, %p102
      %s105 = sadd.s32 %s104, 1
      %p108 = scmp.eq.s32.totalorder %s28, 1
      %p109 = scmp.ne.s32.totalorder %s104, %s106
      %p110 = scmp.eq.s32.totalorder %s28, 0
      %p111 = por %p109, %p110
      %p112 = scmp.ne.s32.totalorder %s104, %s106
      %p113 = scmp.eq.s32.totalorder %s33, 1
      %p114 = por %p112, %p113
      %p115 = scmp.ne.s32.totalorder %s106, %s107
      %p116 = scmp.eq.s32.totalorder %s33, 0
      %p117 = por %p115, %p116
      %p118 = scmp.ne.s32.totalorder %s106, %s107
      %p119 = scmp.eq.s32.totalorder %s34, 1
      %p120 = por %p118, %p119
      %p122 = scmp.ne.s32.totalorder %s107, %s121
      %p123 = scmp.eq.s32.totalorder %s34, 0
      %p124 = por %p122, %p123
      %s126 = sadd.s32 %s125, 1
      %p129 = scmp.eq.s32.totalorder %s28, 1
      %p130 = scmp.ne.s32.totalorder %s125, %s127
      %p131 = scmp.eq.s32.totalorder %s28, 0
      %p132 = por %p130, %p131
      %p133 = scmp.ne.s32.totalorder %s125, %s127
      %p134 = scmp.eq.s32.totalorder %s33, 1
      %p135 = por %p133, %p134
      %p136 = scmp.ne.s32.totalorder %s127, %s128
      %p137 = scmp.eq.s32.totalorder %s33, 0
      %p138 = por %p136, %p137
      %p139 = scmp.ne.s32.totalorder %s127, %s128
      %p140 = scmp.eq.s32.totalorder %s34, 1
      %p141 = por %p139, %p140
      %p143 = scmp.ne.s32.totalorder %s128, %s142
      %p144 = scmp.eq.s32.totalorder %s34, 0
      %p145 = por %p143, %p144
      %s147 = sadd.s32 %s146, 1
      %p150 = scmp.eq.s32.totalorder %s28, 1
      %p151 = scmp.ne.s32.totalorder %s146, %s148
      %p152 = scmp.eq.s32.totalorder %s28, 0
      %p153 = por %p151, %p152
      %p154 = scmp.ne.s32.totalorder %s146, %s148
      %p155 = scmp.eq.s32.totalorder %s33, 1
      %p156 = por %p154, %p155
      %p157 = scmp.ne.s32.totalorder %s148, %s149
      %p158 = scmp.eq.s32.totalorder %s33, 0
      %p159 = por %p157, %p158
      %p160 = scmp.ne.s32.totalorder %s148, %s149
      %p161 = scmp.eq.s32.totalorder %s34, 1
      %p162 = por %p160, %p161
      %p164 = scmp.ne.s32.totalorder %s149, %s163
      %p165 = scmp.eq.s32.totalorder %s34, 0
      %p166 = por %p164, %p165
      %s168 = sadd.s32 %s167, 1
      %p171 = scmp.eq.s32.totalorder %s28, 1
      %p172 = scmp.ne.s32.totalorder %s167, %s169
      %p173 = scmp.eq.s32.totalorder %s28, 0
      %p174 = por %p172, %p173
      %p175 = scmp.ne.s32.totalorder %s167, %s169
      %p176 = scmp.eq.s32.totalorder %s33, 1
      %p177 = por %p175, %p176
      %p178 = scmp.ne.s32.totalorder %s169, %s170
      %p179 = scmp.eq.s32.totalorder %s33, 0
      %p180 = por %p178, %p179
      %p181 = scmp.ne.s32.totalorder %s169, %s170
      %p182 = scmp.eq.s32.totalorder %s34, 1
      %p183 = por %p181, %p182
      %p185 = scmp.ne.s32.totalorder %s170, %s184
      %p186 = scmp.eq.s32.totalorder %s34, 0
      %p187 = por %p185, %p186
      %s189 = sadd.s32 %s188, 1
      %p192 = scmp.eq.s32.totalorder %s28, 1
      %p193 = scmp.ne.s32.totalorder %s188, %s190
      %p194 = scmp.eq.s32.totalorder %s28, 0
      %p195 = por %p193, %p194
      %p196 = scmp.ne.s32.totalorder %s188, %s190
      %p197 = scmp.eq.s32.totalorder %s33, 1
      %p198 = por %p196, %p197
      %p199 = scmp.ne.s32.totalorder %s190, %s191
      %p200 = scmp.eq.s32.totalorder %s33, 0
      %p201 = por %p199, %p200
      %p202 = scmp.ne.s32.totalorder %s190, %s191
      %p203 = scmp.eq.s32.totalorder %s34, 1
      %p204 = por %p202, %p203
      %p206 = scmp.ne.s32.totalorder %s191, %s205
      %p207 = scmp.eq.s32.totalorder %s34, 0
      %p208 = por %p206, %p207
      %s210 = sadd.s32 %s209, 1
      %p213 = scmp.eq.s32.totalorder %s28, 1
      %p214 = scmp.ne.s32.totalorder %s209, %s211
      %p215 = scmp.eq.s32.totalorder %s28, 0
      %p216 = por %p214, %p215
      %p217 = scmp.ne.s32.totalorder %s209, %s211
      %p218 = scmp.eq.s32.totalorder %s33, 1
      %p219 = por %p217, %p218
      %p220 = scmp.ne.s32.totalorder %s211, %s212
      %p221 = scmp.eq.s32.totalorder %s33, 0
      %p222 = por %p220, %p221
      %p223 = scmp.ne.s32.totalorder %s211, %s212
      %p224 = scmp.eq.s32.totalorder %s34, 1
      %p225 = por %p223, %p224
      %p227 = scmp.ne.s32.totalorder %s212, %s226
      %p228 = scmp.eq.s32.totalorder %s34, 0
      %p229 = por %p227, %p228
      %s231 = sadd.s32 %s230, 1
      %p234 = scmp.eq.s32.totalorder %s28, 1
      %p235 = scmp.ne.s32.totalorder %s230, %s232
      %p236 = scmp.eq.s32.totalorder %s28, 0
      %p237 = por %p235, %p236
      %p238 = scmp.ne.s32.totalorder %s230, %s232
      %p239 = scmp.eq.s32.totalorder %s33, 1
      %p240 = por %p238, %p239
      %p241 = scmp.ne.s32.totalorder %s232, %s233
      %p242 = scmp.eq.s32.totalorder %s33, 0
      %p243 = por %p241, %p242
      %p244 = scmp.ne.s32.totalorder %s232, %s233
      %p245 = scmp.eq.s32.totalorder %s34, 1
      %p246 = por %p244, %p245
      %p248 = scmp.ne.s32.totalorder %s233, %s247
      %p249 = scmp.eq.s32.totalorder %s34, 0
      %p250 = por %p248, %p249
      %s252 = sadd.s32 %s251, 1
      %p255 = scmp.eq.s32.totalorder %s28, 1
      %p256 = scmp.ne.s32.totalorder %s251, %s253
      %p257 = scmp.eq.s32.totalorder %s28, 0
      %p258 = por %p256, %p257
      %p259 = scmp.ne.s32.totalorder %s251, %s253
      %p260 = scmp.eq.s32.totalorder %s33, 1
      %p261 = por %p259, %p260
      %p262 = scmp.ne.s32.totalorder %s253, %s254
      %p263 = scmp.eq.s32.totalorder %s33, 0
      %p264 = por %p262, %p263
      %p265 = scmp.ne.s32.totalorder %s253, %s254
      %p266 = scmp.eq.s32.totalorder %s34, 1
      %p267 = por %p265, %p266
      %p269 = scmp.ne.s32.totalorder %s254, %s268
      %p270 = scmp.eq.s32.totalorder %s34, 0
      %p271 = por %p269, %p270
      %s273 = sadd.s32 %s272, 1
      %p276 = scmp.eq.s32.totalorder %s28, 1
      %p277 = scmp.ne.s32.totalorder %s272, %s274
      %p278 = scmp.eq.s32.totalorder %s28, 0
      %p279 = por %p277, %p278
      %p280 = scmp.ne.s32.totalorder %s272, %s274
      %p281 = scmp.eq.s32.totalorder %s33, 1
      %p282 = por %p280, %p281
      %p283 = scmp.ne.s32.totalorder %s274, %s275
      %p284 = scmp.eq.s32.totalorder %s33, 0
      %p285 = por %p283, %p284
      %p286 = scmp.ne.s32.totalorder %s274, %s275
      %p287 = scmp.eq.s32.totalorder %s34, 1
      %p288 = por %p286, %p287
      %p290 = scmp.ne.s32.totalorder %s275, %s289
      %p291 = scmp.eq.s32.totalorder %s34, 0
      %p292 = por %p290, %p291
      %s294 = sadd.s32 %s293, 1
      %p297 = scmp.eq.s32.totalorder %s28, 1
      %p298 = scmp.ne.s32.totalorder %s293, %s295
      %p299 = scmp.eq.s32.totalorder %s28, 0
      %p300 = por %p298, %p299
      %p301 = scmp.ne.s32.totalorder %s293, %s295
      %p302 = scmp.eq.s32.totalorder %s33, 1
      %p303 = por %p301, %p302
      %p304 = scmp.ne.s32.totalorder %s295, %s296
      %p305 = scmp.eq.s32.totalorder %s33, 0
      %p306 = por %p304, %p305
      %p307 = scmp.ne.s32.totalorder %s295, %s296
      %p308 = scmp.eq.s32.totalorder %s34, 1
      %p309 = por %p307, %p308
      %p311 = scmp.ne.s32.totalorder %s296, %s310
      %p312 = scmp.eq.s32.totalorder %s34, 0
      %p313 = por %p311, %p312
      %s315 = sadd.s32 %s314, 1
      %p318 = scmp.eq.s32.totalorder %s28, 1
      %p319 = scmp.ne.s32.totalorder %s314, %s316
      %p320 = scmp.eq.s32.totalorder %s28, 0
      %p321 = por %p319, %p320
      %p322 = scmp.ne.s32.totalorder %s314, %s316
      %p323 = scmp.eq.s32.totalorder %s33, 1
      %p324 = por %p322, %p323
      %p325 = scmp.ne.s32.totalorder %s316, %s317
      %p326 = scmp.eq.s32.totalorder %s33, 0
      %p327 = por %p325, %p326
      %p328 = scmp.ne.s32.totalorder %s316, %s317
      %p329 = scmp.eq.s32.totalorder %s34, 1
      %p330 = por %p328, %p329
      %p332 = scmp.ne.s32.totalorder %s317, %s331
      %p333 = scmp.eq.s32.totalorder %s34, 0
      %p334 = por %p332, %p333
      %s335 = ssub.s32 %s28, %s35
      %p336 = scmp.eq.s32.totalorder %s335, 0
      %s338 = sadd.s32 %s337, 1
      %s339 = scalar_select %p336, %s337, %s338
      %p342 = pneg %p336
      %p343 = scmp.eq.s32.totalorder %s28, 1
      %p344 = por %p342, %p343
      %p345 = scmp.ne.s32.totalorder %s337, %s340
      %p346 = scmp.eq.s32.totalorder %s28, 0
      %p347 = por %p345, %p346
      %p348 = scmp.ne.s32.totalorder %s337, %s340
      %p349 = scmp.eq.s32.totalorder %s33, 1
      %p350 = por %p348, %p349
      %p351 = scmp.ne.s32.totalorder %s340, %s341
      %p352 = scmp.eq.s32.totalorder %s33, 0
      %p353 = por %p351, %p352
      %p354 = scmp.ne.s32.totalorder %s340, %s341
      %p355 = scmp.eq.s32.totalorder %s34, 1
      %p356 = por %p354, %p355
      %p358 = scmp.ne.s32.totalorder %s341, %s357
      %p359 = scmp.eq.s32.totalorder %s34, 0
      %p360 = por %p358, %p359
      %s361 = ssub.s32 %s28, %s35
      %p362 = scmp.eq.s32.totalorder %s361, 0
      %s364 = sadd.s32 %s363, 1
      %s365 = scalar_select %p362, %s363, %s364
      %p368 = pneg %p362
      %p369 = scmp.eq.s32.totalorder %s28, 1
      %p370 = por %p368, %p369
      %p371 = scmp.ne.s32.totalorder %s363, %s366
      %p372 = scmp.eq.s32.totalorder %s28, 0
      %p373 = por %p371, %p372
      %p374 = scmp.ne.s32.totalorder %s363, %s366
      %p375 = scmp.eq.s32.totalorder %s33, 1
      %p376 = por %p374, %p375
      %p377 = scmp.ne.s32.totalorder %s366, %s367
      %p378 = scmp.eq.s32.totalorder %s33, 0
      %p379 = por %p377, %p378
      %p380 = scmp.ne.s32.totalorder %s366, %s367
      %p381 = scmp.eq.s32.totalorder %s34, 1
      %p382 = por %p380, %p381
      %p384 = scmp.ne.s32.totalorder %s367, %s383
      %p385 = scmp.eq.s32.totalorder %s34, 0
      %p386 = por %p384, %p385
      %p387 = scmp.le.s32.totalorder 1, %s28
      %p388 = scmp.lt.s32.totalorder %s28, 3
      %p389 = pnand %p387, %p388
      %p390 = pneg %p389
      // Predicated region
      $region9: #{categorical_transformer_forward.1} parent=5 // pred_check
        _
      $region10: #{categorical_transformer_forward.1} parent=5 // pred_check_branch
        %392 = sbr.rel (%p389) target = $region12
      $region11: #{categorical_transformer_forward.1} parent=5 // pred_region
        %s393 = ssub.s32 %s28, 1
        // Predicated region
        $region13: #{categorical_transformer_forward.1} parent=11 // pred_check
          %p394 = pneg %p75
        $region14: #{categorical_transformer_forward.1} parent=11 // pred_check_branch
          %396 = sbr.rel (%p394) target = $region16
        $region15: #{categorical_transformer_forward.1} parent=11 // pred_region
          _
        $region16: #{categorical_transformer_forward.1} parent=11 // pred_fallthru
          _
        // Predicated region
        $region17: #{categorical_transformer_forward.1} parent=11 // pred_check
          %p397 = pneg %p96
        $region18: #{categorical_transformer_forward.1} parent=11 // pred_check_branch
          %399 = sbr.rel (%p397) target = $region20
        $region19: #{categorical_transformer_forward.1} parent=11 // pred_region
          _
        $region20: #{categorical_transformer_forward.1} parent=11 // pred_fallthru
          _
        // Predicated region
        $region21: #{categorical_transformer_forward.1} parent=11 // pred_check
          %p400 = pneg %p117
        $region22: #{categorical_transformer_forward.1} parent=11 // pred_check_branch
          %402 = sbr.rel (%p400) target = $region24
        $region23: #{categorical_transformer_forward.1} parent=11 // pred_region
          _
        $region24: #{categorical_transformer_forward.1} parent=11 // pred_fallthru
          _
        // Predicated region
        $region25: #{categorical_transformer_forward.1} parent=11 // pred_check
          %p403 = pneg %p138
        $region26: #{categorical_transformer_forward.1} parent=11 // pred_check_branch
          %405 = sbr.rel (%p403) target = $region28
        $region27: #{categorical_transformer_forward.1} parent=11 // pred_region
          _
        $region28: #{categorical_transformer_forward.1} parent=11 // pred_fallthru
          _
        // Predicated region
        $region29: #{categorical_transformer_forward.1} parent=11 // pred_check
          %p406 = pneg %p159
        $region30: #{categorical_transformer_forward.1} parent=11 // pred_check_branch
          %408 = sbr.rel (%p406) target = $region32
        $region31: #{categorical_transformer_forward.1} parent=11 // pred_region
          _
        $region32: #{categorical_transformer_forward.1} parent=11 // pred_fallthru
          _
        // Predicated region
        $region33: #{categorical_transformer_forward.1} parent=11 // pred_check
          %p409 = pneg %p180
        $region34: #{categorical_transformer_forward.1} parent=11 // pred_check_branch
          %411 = sbr.rel (%p409) target = $region36
        $region35: #{categorical_transformer_forward.1} parent=11 // pred_region
          _
        $region36: #{categorical_transformer_forward.1} parent=11 // pred_fallthru
          _
        // Predicated region
        $region37: #{categorical_transformer_forward.1} parent=11 // pred_check
          %p412 = pneg %p201
        $region38: #{categorical_transformer_forward.1} parent=11 // pred_check_branch
          %414 = sbr.rel (%p412) target = $region40
        $region39: #{categorical_transformer_forward.1} parent=11 // pred_region
          _
        $region40: #{categorical_transformer_forward.1} parent=11 // pred_fallthru
          _
        // Predicated region
        $region41: #{categorical_transformer_forward.1} parent=11 // pred_check
          %p415 = pneg %p222
        $region42: #{categorical_transformer_forward.1} parent=11 // pred_check_branch
          %417 = sbr.rel (%p415) target = $region44
        $region43: #{categorical_transformer_forward.1} parent=11 // pred_region
          _
        $region44: #{categorical_transformer_forward.1} parent=11 // pred_fallthru
          _
        // Predicated region
        $region45: #{categorical_transformer_forward.1} parent=11 // pred_check
          %p418 = pneg %p243
        $region46: #{categorical_transformer_forward.1} parent=11 // pred_check_branch
          %420 = sbr.rel (%p418) target = $region48
        $region47: #{categorical_transformer_forward.1} parent=11 // pred_region
          _
        $region48: #{categorical_transformer_forward.1} parent=11 // pred_fallthru
          _
        // Predicated region
        $region49: #{categorical_transformer_forward.1} parent=11 // pred_check
          %p421 = pneg %p264
        $region50: #{categorical_transformer_forward.1} parent=11 // pred_check_branch
          %423 = sbr.rel (%p421) target = $region52
        $region51: #{categorical_transformer_forward.1} parent=11 // pred_region
          _
        $region52: #{categorical_transformer_forward.1} parent=11 // pred_fallthru
          _
        // Predicated region
        $region53: #{categorical_transformer_forward.1} parent=11 // pred_check
          %p424 = pneg %p285
        $region54: #{categorical_transformer_forward.1} parent=11 // pred_check_branch
          %426 = sbr.rel (%p424) target = $region56
        $region55: #{categorical_transformer_forward.1} parent=11 // pred_region
          _
        $region56: #{categorical_transformer_forward.1} parent=11 // pred_fallthru
          _
        // Predicated region
        $region57: #{categorical_transformer_forward.1} parent=11 // pred_check
          %p427 = pneg %p306
        $region58: #{categorical_transformer_forward.1} parent=11 // pred_check_branch
          %429 = sbr.rel (%p427) target = $region60
        $region59: #{categorical_transformer_forward.1} parent=11 // pred_region
          _
        $region60: #{categorical_transformer_forward.1} parent=11 // pred_fallthru
          _
        // Predicated region
        $region61: #{categorical_transformer_forward.1} parent=11 // pred_check
          %p430 = pneg %p327
        $region62: #{categorical_transformer_forward.1} parent=11 // pred_check_branch
          %432 = sbr.rel (%p430) target = $region64
        $region63: #{categorical_transformer_forward.1} parent=11 // pred_region
          _
        $region64: #{categorical_transformer_forward.1} parent=11 // pred_fallthru
          _
      $region12: #{categorical_transformer_forward.1} parent=5 // pred_fallthru
        _
      %p433 = scmp.lt.s32.totalorder %s28, 2
      // Predicated region
      $region65: #{categorical_transformer_forward.1} parent=5 // pred_check
        %p434 = pneg %p433
      $region66: #{categorical_transformer_forward.1} parent=5 // pred_check_branch
        %436 = sbr.rel (%p434) target = $region68
      $region67: #{categorical_transformer_forward.1} parent=5 // pred_region
        // Predicated region
        $region69: #{categorical_transformer_forward.1} parent=67 // pred_check
          %p437 = pneg %p48
        $region70: #{categorical_transformer_forward.1} parent=67 // pred_check_branch
          %439 = sbr.rel (%p437) target = $region72
        $region71: #{categorical_transformer_forward.1} parent=67 // pred_region
          %p440 = scmp.lt.s32.totalorder %s28, 1
          %s441 = scalar_select %p440, %s28, 1
          %s442 = smul.addr %s441, 8
          %s443 = scalar_lea.vmem %s0, %s442
        $region72: #{categorical_transformer_forward.1} parent=67 // pred_fallthru
          _
      $region68: #{categorical_transformer_forward.1} parent=5 // pred_fallthru
        _
      %p444 = scmp.le.s32.totalorder 1, %s28
      %p445 = scmp.lt.s32.totalorder %s28, 3
      %p446 = pnand %p444, %p445
      %p447 = pneg %p446
      // Predicated region
      $region73: #{categorical_transformer_forward.1} parent=5 // pred_check
        _
      $region74: #{categorical_transformer_forward.1} parent=5 // pred_check_branch
        %449 = sbr.rel (%p446) target = $region76
      $region75: #{categorical_transformer_forward.1} parent=5 // pred_region
        %s450 = ssub.s32 %s28, 1
        %p451 = scmp.lt.s32.totalorder %s33, 1
        %s452 = scalar_select %p451, %s33, 1
        %s453 = smul.addr %s452, 8
        %s454 = scalar_lea.vmem %s0, %s453
        %p455 = pneg %p54
        %p456 = pneg %p51
        %p457 = pneg %p75
        %p458 = pneg %p72
        %p459 = pneg %p96
        %p460 = pneg %p93
        %p461 = pneg %p117
        %p462 = pneg %p114
        %p463 = pneg %p138
        %p464 = pneg %p135
        %p465 = pneg %p159
        %p466 = pneg %p156
        %p467 = pneg %p180
        %p468 = pneg %p177
        %p469 = pneg %p201
        %p470 = pneg %p198
        %p471 = pneg %p222
        %p472 = pneg %p219
        %p473 = pneg %p243
        %p474 = pneg %p240
        %p475 = pneg %p264
        %p476 = pneg %p261
        %p477 = pneg %p285
        %p478 = pneg %p282
        %p479 = pneg %p306
        %p480 = pneg %p303
        %p481 = pneg %p327
        %p482 = pneg %p324
        %p483 = pneg %p353
        %p484 = pneg %p350
        %s485 = sand.u32 %s340, 1
        %s486 = scalar_lea.sflag [#allocation3], %s485
        %s487 = sand.u32 %s340, 1
        %s488 = smul.addr %s487, 8
        %s489 = scalar_lea.vmem [#allocation2], %s488
        %p490 = pneg %p379
        %p491 = pneg %p376
        %s492 = sand.u32 %s366, 1
        %s493 = scalar_lea.sflag [#allocation5], %s492
        %s494 = sand.u32 %s366, 1
        %s495 = smul.addr %s494, 8
        %s496 = scalar_lea.vmem [#allocation4], %s495
        %p497 = scmp.lt.s32.totalorder %s33, 1
        %s498 = scalar_select %p497, %s33, 1
        %s499 = smul.addr %s498, 8
        %s500 = scalar_lea.vmem %s0, %s499
        %v501 = vld [vmem:[%s500] sm:$0xff]
        %v502 = vlaneseq
        %v503 = vand.u32 %v502, 127
        %504 = vset.pattern.permute.xlu0 0
        %505 = vperm.xlu0 %504, %v501
        %v506 = vpop.permute.xlu0 %505
        %vm507 = vcmp.eq.s32.totalorder %v506, %v503
        %v508 = vsel %vm507, 1, 0
        %v509 = vcvt.s32.f32 %v508
        %v510 = vld [vmem:[%s1] sm:$0xff]
        %v511 = vld [vmem:[%s1 + $0x8] sm:$0xff]
        %v512 = vld [vmem:[%s2] sm:$0xff]
        %vm513 = vcmask 130048
        %v515 = vsel %vm513, %v509, 0
        %517 = vmatprep.subr.mxu0 0.0
        %518 = vmatpush1.msra.mxu0 %v510
        %519 = vmatprep.subr.mxu0 0.0
        %520 = vmatpush1.msra.mxu0 %v511
        %521 = vmatprep.subr.mxu0 0.0
        %522 = vmatpush1.msra.mxu0 0.0
        %523 = vmatprep.subr.mxu0 0.0
        %524 = vmatpush1.msra.mxu0 0.0
        %525 = vmatprep.subr.mxu0 0.0
        %526 = vmatpush1.msra.mxu0 0.0
        %527 = vmatprep.subr.mxu0 0.0
        %528 = vmatpush1.msra.mxu0 0.0
        %529 = vmatprep.subr.mxu0 0.0
        %530 = vmatpush1.msra.mxu0 0.0
        %531 = vmatprep.subr.mxu0 0.0
        %532 = vmatpush1.msra.mxu0 0.0
        %533 = vmatprep.subr.mxu0 0.0
        %534 = vmatpush1.msra.mxu0 0.0
        %535 = vmatprep.subr.mxu0 0.0
        %536 = vmatpush1.msra.mxu0 0.0
        %537 = vmatprep.subr.mxu0 0.0
        %538 = vmatpush1.msra.mxu0 0.0
        %539 = vmatprep.subr.mxu0 0.0
        %540 = vmatpush1.msra.mxu0 0.0
        %541 = vmatprep.subr.mxu0 0.0
        %542 = vmatpush1.msra.mxu0 0.0
        %543 = vmatprep.subr.mxu0 0.0
        %544 = vmatpush1.msra.mxu0 0.0
        %545 = vmatprep.subr.mxu0 0.0
        %546 = vmatpush1.msra.mxu0 0.0
        %547 = vmatprep.subr.mxu0 0.0
        %548 = vmatpush1.msra.mxu0 0.0
        %549 = vmatprep.subr.mxu0 0.0
        %550 = vmatpush1.msra.mxu0 0.0
        %551 = vmatprep.subr.mxu0 0.0
        %552 = vmatpush1.msra.mxu0 0.0
        %553 = vmatprep.subr.mxu0 0.0
        %554 = vmatpush1.msra.mxu0 0.0
        %555 = vmatprep.subr.mxu0 0.0
        %556 = vmatpush1.msra.mxu0 0.0
        %557 = vmatprep.subr.mxu0 0.0
        %558 = vmatpush1.msra.mxu0 0.0
        %559 = vmatprep.subr.mxu0 0.0
        %560 = vmatpush1.msra.mxu0 0.0
        %561 = vmatprep.subr.mxu0 0.0
        %562 = vmatpush1.msra.mxu0 0.0
        %563 = vmatprep.subr.mxu0 0.0
        %564 = vmatpush1.msra.mxu0 0.0
        %565 = vmatprep.subr.mxu0 0.0
        %566 = vmatpush1.msra.mxu0 0.0
        %567 = vmatprep.subr.mxu0 0.0
        %568 = vmatpush1.msra.mxu0 0.0
        %569 = vmatprep.subr.mxu0 0.0
        %570 = vmatpush1.msra.mxu0 0.0
        %571 = vmatprep.subr.mxu0 0.0
        %572 = vmatpush1.msra.mxu0 0.0
        %573 = vmatprep.subr.mxu0 0.0
        %574 = vmatpush1.msra.mxu0 0.0
        %575 = vmatprep.subr.mxu0 0.0
        %576 = vmatpush1.msra.mxu0 0.0
        %577 = vmatprep.subr.mxu0 0.0
        %578 = vmatpush1.msra.mxu0 0.0
        %579 = vmatprep.subr.mxu0 0.0
        %580 = vmatpush1.msra.mxu0 0.0
        %581 = vmatprep.mubr.f32.mxu0 0.0
        %582 = vmatmul.mubr.f32.gmra.mrb[0].mxu0 %v515
        %v583 = vpop.f32.mrb[0].mxu0
        %v584 = vadd.f32 %v512, %v583
        %v585 = vpop.f32.mrb[0].mxu0
        %586 = vdwg.mxu0
        %v587 = vld [vmem:[%s11] sm:$0x3f]
        %v588 = vld [vmem:[%s6] sm:$0x7]
        %v589 = vld [vmem:[%s3] sm:$0xff]
        %v590 = vld [vmem:[%s3 + $0x8] sm:$0xff]
        %v591 = vld [vmem:[%s3 + $0x10] sm:$0xff]
        %v592 = vld [vmem:[%s3 + $0x18] sm:$0xff]
        %v593 = vlaneseq
        %v594 = vshrl.u32 %v593, 7
        %v595 = vsub.s32 0, %v594
        %v596 = vrot.slane %v588, %v595
        %vm597 = vcmask 261120
        %v599 = vsel %vm597, %v584, 0
        %601 = vmatprep.subr.mxu0 0.0
        %602 = vmatpush1.msra.mxu0 %v589
        %603 = vmatprep.subr.mxu0 0.0
        %604 = vmatpush1.msra.mxu0 %v590
        %605 = vmatprep.subr.mxu0 0.0
        %606 = vmatpush1.msra.mxu0 %v591
        %607 = vmatprep.subr.mxu0 0.0
        %608 = vmatpush1.msra.mxu0 %v592
        %609 = vmatprep.subr.mxu0 0.0
        %610 = vmatpush1.msra.mxu0 0.0
        %611 = vmatprep.subr.mxu0 0.0
        %612 = vmatpush1.msra.mxu0 0.0
        %613 = vmatprep.subr.mxu0 0.0
        %614 = vmatpush1.msra.mxu0 0.0
        %615 = vmatprep.subr.mxu0 0.0
        %616 = vmatpush1.msra.mxu0 0.0
        %617 = vmatprep.subr.mxu0 0.0
        %618 = vmatpush1.msra.mxu0 0.0
        %619 = vmatprep.subr.mxu0 0.0
        %620 = vmatpush1.msra.mxu0 0.0
        %621 = vmatprep.subr.mxu0 0.0
        %622 = vmatpush1.msra.mxu0 0.0
        %623 = vmatprep.subr.mxu0 0.0
        %624 = vmatpush1.msra.mxu0 0.0
        %625 = vmatprep.subr.mxu0 0.0
        %626 = vmatpush1.msra.mxu0 0.0
        %627 = vmatprep.subr.mxu0 0.0
        %628 = vmatpush1.msra.mxu0 0.0
        %629 = vmatprep.subr.mxu0 0.0
        %630 = vmatpush1.msra.mxu0 0.0
        %631 = vmatprep.subr.mxu0 0.0
        %632 = vmatpush1.msra.mxu0 0.0
        %633 = vmatprep.subr.mxu0 0.0
        %634 = vmatpush1.msra.mxu0 0.0
        %635 = vmatprep.subr.mxu0 0.0
        %636 = vmatpush1.msra.mxu0 0.0
        %637 = vmatprep.subr.mxu0 0.0
        %638 = vmatpush1.msra.mxu0 0.0
        %639 = vmatprep.subr.mxu0 0.0
        %640 = vmatpush1.msra.mxu0 0.0
        %641 = vmatprep.subr.mxu0 0.0
        %642 = vmatpush1.msra.mxu0 0.0
        %643 = vmatprep.subr.mxu0 0.0
        %644 = vmatpush1.msra.mxu0 0.0
        %645 = vmatprep.subr.mxu0 0.0
        %646 = vmatpush1.msra.mxu0 0.0
        %647 = vmatprep.subr.mxu0 0.0
        %648 = vmatpush1.msra.mxu0 0.0
        %649 = vmatprep.subr.mxu0 0.0
        %650 = vmatpush1.msra.mxu0 0.0
        %651 = vmatprep.subr.mxu0 0.0
        %652 = vmatpush1.msra.mxu0 0.0
        %653 = vmatprep.subr.mxu0 0.0
        %654 = vmatpush1.msra.mxu0 0.0
        %655 = vmatprep.subr.mxu0 0.0
        %656 = vmatpush1.msra.mxu0 0.0
        %657 = vmatprep.subr.mxu0 0.0
        %658 = vmatpush1.msra.mxu0 0.0
        %659 = vmatprep.subr.mxu0 0.0
        %660 = vmatpush1.msra.mxu0 0.0
        %661 = vmatprep.subr.mxu0 0.0
        %662 = vmatpush1.msra.mxu0 0.0
        %663 = vmatprep.subr.mxu0 0.0
        %664 = vmatpush1.msra.mxu0 0.0
        %665 = vmatprep.mubr.f32.mxu0 0.0
        %666 = vmatmul.mubr.f32.gmra.mrb[0].mxu0 %v599
        %v667 = vpop.f32.mrb[0].mxu0
        %v668 = vadd.f32 %v596, %v667
        %v669 = vpop.f32.mrb[0].mxu0
        %670 = vdwg.mxu0
        %v671 = vld [vmem:[%s4] sm:$0xff]
        %v672 = vld [vmem:[%s4 + $0x8] sm:$0xff]
        %v673 = vld [vmem:[%s4 + $0x10] sm:$0xff]
        %v674 = vld [vmem:[%s4 + $0x18] sm:$0xff]
        %v675 = vlaneseq
        %v676 = vshrl.u32 %v675, 7
        %v677 = vsub.s32 1, %v676
        %v678 = vrot.slane %v588, %v677
        %679 = vmatprep.subr.mxu0 0.0
        %680 = vmatpush1.msra.mxu0 %v671
        %681 = vmatprep.subr.mxu0 0.0
        %682 = vmatpush1.msra.mxu0 %v672
        %683 = vmatprep.subr.mxu0 0.0
        %684 = vmatpush1.msra.mxu0 %v673
        %685 = vmatprep.subr.mxu0 0.0
        %686 = vmatpush1.msra.mxu0 %v674
        %687 = vmatprep.subr.mxu0 0.0
        %688 = vmatpush1.msra.mxu0 0.0
        %689 = vmatprep.subr.mxu0 0.0
        %690 = vmatpush1.msra.mxu0 0.0
        %691 = vmatprep.subr.mxu0 0.0
        %692 = vmatpush1.msra.mxu0 0.0
        %693 = vmatprep.subr.mxu0 0.0
        %694 = vmatpush1.msra.mxu0 0.0
        %695 = vmatprep.subr.mxu0 0.0
        %696 = vmatpush1.msra.mxu0 0.0
        %697 = vmatprep.subr.mxu0 0.0
        %698 = vmatpush1.msra.mxu0 0.0
        %699 = vmatprep.subr.mxu0 0.0
        %700 = vmatpush1.msra.mxu0 0.0
        %701 = vmatprep.subr.mxu0 0.0
        %702 = vmatpush1.msra.mxu0 0.0
        %703 = vmatprep.subr.mxu0 0.0
        %704 = vmatpush1.msra.mxu0 0.0
        %705 = vmatprep.subr.mxu0 0.0
        %706 = vmatpush1.msra.mxu0 0.0
        %707 = vmatprep.subr.mxu0 0.0
        %708 = vmatpush1.msra.mxu0 0.0
        %709 = vmatprep.subr.mxu0 0.0
        %710 = vmatpush1.msra.mxu0 0.0
        %711 = vmatprep.subr.mxu0 0.0
        %712 = vmatpush1.msra.mxu0 0.0
        %713 = vmatprep.subr.mxu0 0.0
        %714 = vmatpush1.msra.mxu0 0.0
        %715 = vmatprep.subr.mxu0 0.0
        %716 = vmatpush1.msra.mxu0 0.0
        %717 = vmatprep.subr.mxu0 0.0
        %718 = vmatpush1.msra.mxu0 0.0
        %719 = vmatprep.subr.mxu0 0.0
        %720 = vmatpush1.msra.mxu0 0.0
        %721 = vmatprep.subr.mxu0 0.0
        %722 = vmatpush1.msra.mxu0 0.0
        %723 = vmatprep.subr.mxu0 0.0
        %724 = vmatpush1.msra.mxu0 0.0
        %725 = vmatprep.subr.mxu0 0.0
        %726 = vmatpush1.msra.mxu0 0.0
        %727 = vmatprep.subr.mxu0 0.0
        %728 = vmatpush1.msra.mxu0 0.0
        %729 = vmatprep.subr.mxu0 0.0
        %730 = vmatpush1.msra.mxu0 0.0
        %731 = vmatprep.subr.mxu0 0.0
        %732 = vmatpush1.msra.mxu0 0.0
        %733 = vmatprep.subr.mxu0 0.0
        %734 = vmatpush1.msra.mxu0 0.0
        %735 = vmatprep.subr.mxu0 0.0
        %736 = vmatpush1.msra.mxu0 0.0
        %737 = vmatprep.subr.mxu0 0.0
        %738 = vmatpush1.msra.mxu0 0.0
        %739 = vmatprep.subr.mxu0 0.0
        %740 = vmatpush1.msra.mxu0 0.0
        %741 = vmatprep.subr.mxu0 0.0
        %742 = vmatpush1.msra.mxu0 0.0
        %743 = vmatprep.mubr.f32.mxu0 0.0
        %744 = vmatmul.mubr.f32.gmra.mrb[0].mxu0 %v599
        %v745 = vpop.f32.mrb[0].mxu0
        %v746 = vadd.f32 %v678, %v745
        %v747 = vpop.f32.mrb[0].mxu0
        %748 = vdwg.mxu0
        %v749 = vld [vmem:[%s5] sm:$0xff]
        %v750 = vld [vmem:[%s5 + $0x8] sm:$0xff]
        %v751 = vld [vmem:[%s5 + $0x10] sm:$0xff]
        %v752 = vld [vmem:[%s5 + $0x18] sm:$0xff]
        %v753 = vlaneseq
        %v754 = vshrl.u32 %v753, 7
        %v755 = vsub.s32 2, %v754
        %v756 = vrot.slane %v588, %v755
        %757 = vmatprep.subr.mxu0 0.0
        %758 = vmatpush1.msra.mxu0 %v749
        %759 = vmatprep.subr.mxu0 0.0
        %760 = vmatpush1.msra.mxu0 %v750
        %761 = vmatprep.subr.mxu0 0.0
        %762 = vmatpush1.msra.mxu0 %v751
        %763 = vmatprep.subr.mxu0 0.0
        %764 = vmatpush1.msra.mxu0 %v752
        %765 = vmatprep.subr.mxu0 0.0
        %766 = vmatpush1.msra.mxu0 0.0
        %767 = vmatprep.subr.mxu0 0.0
        %768 = vmatpush1.msra.mxu0 0.0
        %769 = vmatprep.subr.mxu0 0.0
        %770 = vmatpush1.msra.mxu0 0.0
        %771 = vmatprep.subr.mxu0 0.0
        %772 = vmatpush1.msra.mxu0 0.0
        %773 = vmatprep.subr.mxu0 0.0
        %774 = vmatpush1.msra.mxu0 0.0
        %775 = vmatprep.subr.mxu0 0.0
        %776 = vmatpush1.msra.mxu0 0.0
        %777 = vmatprep.subr.mxu0 0.0
        %778 = vmatpush1.msra.mxu0 0.0
        %779 = vmatprep.subr.mxu0 0.0
        %780 = vmatpush1.msra.mxu0 0.0
        %781 = vmatprep.subr.mxu0 0.0
        %782 = vmatpush1.msra.mxu0 0.0
        %783 = vmatprep.subr.mxu0 0.0
        %784 = vmatpush1.msra.mxu0 0.0
        %785 = vmatprep.subr.mxu0 0.0
        %786 = vmatpush1.msra.mxu0 0.0
        %787 = vmatprep.subr.mxu0 0.0
        %788 = vmatpush1.msra.mxu0 0.0
        %789 = vmatprep.subr.mxu0 0.0
        %790 = vmatpush1.msra.mxu0 0.0
        %791 = vmatprep.subr.mxu0 0.0
        %792 = vmatpush1.msra.mxu0 0.0
        %793 = vmatprep.subr.mxu0 0.0
        %794 = vmatpush1.msra.mxu0 0.0
        %795 = vmatprep.subr.mxu0 0.0
        %796 = vmatpush1.msra.mxu0 0.0
        %797 = vmatprep.subr.mxu0 0.0
        %798 = vmatpush1.msra.mxu0 0.0
        %799 = vmatprep.subr.mxu0 0.0
        %800 = vmatpush1.msra.mxu0 0.0
        %801 = vmatprep.subr.mxu0 0.0
        %802 = vmatpush1.msra.mxu0 0.0
        %803 = vmatprep.subr.mxu0 0.0
        %804 = vmatpush1.msra.mxu0 0.0
        %805 = vmatprep.subr.mxu0 0.0
        %806 = vmatpush1.msra.mxu0 0.0
        %807 = vmatprep.subr.mxu0 0.0
        %808 = vmatpush1.msra.mxu0 0.0
        %809 = vmatprep.subr.mxu0 0.0
        %810 = vmatpush1.msra.mxu0 0.0
        %811 = vmatprep.subr.mxu0 0.0
        %812 = vmatpush1.msra.mxu0 0.0
        %813 = vmatprep.subr.mxu0 0.0
        %814 = vmatpush1.msra.mxu0 0.0
        %815 = vmatprep.subr.mxu0 0.0
        %816 = vmatpush1.msra.mxu0 0.0
        %817 = vmatprep.subr.mxu0 0.0
        %818 = vmatpush1.msra.mxu0 0.0
        %819 = vmatprep.subr.mxu0 0.0
        %820 = vmatpush1.msra.mxu0 0.0
        %821 = vmatprep.mubr.f32.mxu0 0.0
        %822 = vmatmul.mubr.f32.gmra.mrb[0].mxu0 %v599
        %v823 = vpop.f32.mrb[0].mxu0
        %v824 = vadd.f32 %v756, %v823
        %v825 = vpop.f32.mrb[0].mxu0
        %826 = vdwg.mxu0
        %vm827 = vcmask 64512
        %v829 = vsel %vm827, %v668, 0
        %v832 = vsel %vm827, %v746, 0
        %834 = vmatprep.subr.mxu0 0.0
        %835 = vmatpush1.xpose.msra.mxu0 %v832
        %836 = vmatprep.subr.mxu0 0.0
        %837 = vmatpush1.xpose.msra.mxu0 0.0
        %838 = vmatprep.subr.mxu0 0.0
        %839 = vmatpush1.xpose.msra.mxu0 0.0
        %840 = vmatprep.subr.mxu0 0.0
        %841 = vmatpush1.xpose.msra.mxu0 0.0
        %842 = vmatprep.subr.mxu0 0.0
        %843 = vmatpush1.xpose.msra.mxu0 0.0
        %844 = vmatprep.subr.mxu0 0.0
        %845 = vmatpush1.xpose.msra.mxu0 0.0
        %846 = vmatprep.subr.mxu0 0.0
        %847 = vmatpush1.xpose.msra.mxu0 0.0
        %848 = vmatprep.subr.mxu0 0.0
        %849 = vmatpush1.xpose.msra.mxu0 0.0
        %850 = vmatprep.subr.mxu0 0.0
        %851 = vmatpush1.xpose.msra.mxu0 0.0
        %852 = vmatprep.subr.mxu0 0.0
        %853 = vmatpush1.xpose.msra.mxu0 0.0
        %854 = vmatprep.subr.mxu0 0.0
        %855 = vmatpush1.xpose.msra.mxu0 0.0
        %856 = vmatprep.subr.mxu0 0.0
        %857 = vmatpush1.xpose.msra.mxu0 0.0
        %858 = vmatprep.subr.mxu0 0.0
        %859 = vmatpush1.xpose.msra.mxu0 0.0
        %860 = vmatprep.subr.mxu0 0.0
        %861 = vmatpush1.xpose.msra.mxu0 0.0
        %862 = vmatprep.subr.mxu0 0.0
        %863 = vmatpush1.xpose.msra.mxu0 0.0
        %864 = vmatprep.subr.mxu0 0.0
        %865 = vmatpush1.xpose.msra.mxu0 0.0
        %866 = vmatprep.subr.mxu0 0.0
        %867 = vmatpush1.xpose.msra.mxu0 0.0
        %868 = vmatprep.subr.mxu0 0.0
        %869 = vmatpush1.xpose.msra.mxu0 0.0
        %870 = vmatprep.subr.mxu0 0.0
        %871 = vmatpush1.xpose.msra.mxu0 0.0
        %872 = vmatprep.subr.mxu0 0.0
        %873 = vmatpush1.xpose.msra.mxu0 0.0
        %874 = vmatprep.subr.mxu0 0.0
        %875 = vmatpush1.xpose.msra.mxu0 0.0
        %876 = vmatprep.subr.mxu0 0.0
        %877 = vmatpush1.xpose.msra.mxu0 0.0
        %878 = vmatprep.subr.mxu0 0.0
        %879 = vmatpush1.xpose.msra.mxu0 0.0
        %880 = vmatprep.subr.mxu0 0.0
        %881 = vmatpush1.xpose.msra.mxu0 0.0
        %882 = vmatprep.subr.mxu0 0.0
        %883 = vmatpush1.xpose.msra.mxu0 0.0
        %884 = vmatprep.subr.mxu0 0.0
        %885 = vmatpush1.xpose.msra.mxu0 0.0
        %886 = vmatprep.subr.mxu0 0.0
        %887 = vmatpush1.xpose.msra.mxu0 0.0
        %888 = vmatprep.subr.mxu0 0.0
        %889 = vmatpush1.xpose.msra.mxu0 0.0
        %890 = vmatprep.subr.mxu0 0.0
        %891 = vmatpush1.xpose.msra.mxu0 0.0
        %892 = vmatprep.subr.mxu0 0.0
        %893 = vmatpush1.xpose.msra.mxu0 0.0
        %894 = vmatprep.subr.mxu0 0.0
        %895 = vmatpush1.xpose.msra.mxu0 0.0
        %896 = vmatprep.subr.mxu0 0.0
        %897 = vmatpush1.xpose.msra.mxu0 0.0
        %898 = vmatprep.mubr.f32.mxu0 0.0
        %899 = vmatmul.mubr.f32.gmra.mrb[0].mxu0 %v829
        %v900 = vpop.f32.mrb[0].mxu0
        %v901 = vadd.f32 0.0, %v900
        %v902 = vpop.f32.mrb[0].mxu0
        %903 = vdwg.mxu0
        %v904 = vmul.f32 %v901, 0.35355338
        %v905 = vsel %vm827, %v904, -inf
        %906 = vmax.xlane.f32.xlu0 %v905
        %v907 = vpop.xlane.xlu0 %906
        %v908 = vsub.f32 %v904, %v907
        %v909 = vmul.f32 %v908, 1.442695
        %v910 = vpow.pop %v909
        %v911 = vsel %vm827, %v910, 0.0
        %912 = vadd.xlane.f32.xlu0 %v911
        %v913 = vpop.xlane.xlu0 %912
        %v914 = vrcp.pop %v913
        %v915 = vmul.f32 %v910, %v914
        %v917 = vsel %vm827, %v915, 0
        %919 = vmatprep.subr.mxu0 0.0
        %920 = vmatpush1.msra.mxu0 %v824
        %921 = vmatprep.subr.mxu0 0.0
        %922 = vmatpush1.msra.mxu0 0.0
        %923 = vmatprep.subr.mxu0 0.0
        %924 = vmatpush1.msra.mxu0 0.0
        %925 = vmatprep.subr.mxu0 0.0
        %926 = vmatpush1.msra.mxu0 0.0
        %927 = vmatprep.subr.mxu0 0.0
        %928 = vmatpush1.msra.mxu0 0.0
        %929 = vmatprep.subr.mxu0 0.0
        %930 = vmatpush1.msra.mxu0 0.0
        %931 = vmatprep.subr.mxu0 0.0
        %932 = vmatpush1.msra.mxu0 0.0
        %933 = vmatprep.subr.mxu0 0.0
        %934 = vmatpush1.msra.mxu0 0.0
        %935 = vmatprep.subr.mxu0 0.0
        %936 = vmatpush1.msra.mxu0 0.0
        %937 = vmatprep.subr.mxu0 0.0
        %938 = vmatpush1.msra.mxu0 0.0
        %939 = vmatprep.subr.mxu0 0.0
        %940 = vmatpush1.msra.mxu0 0.0
        %941 = vmatprep.subr.mxu0 0.0
        %942 = vmatpush1.msra.mxu0 0.0
        %943 = vmatprep.subr.mxu0 0.0
        %944 = vmatpush1.msra.mxu0 0.0
        %945 = vmatprep.subr.mxu0 0.0
        %946 = vmatpush1.msra.mxu0 0.0
        %947 = vmatprep.subr.mxu0 0.0
        %948 = vmatpush1.msra.mxu0 0.0
        %949 = vmatprep.subr.mxu0 0.0
        %950 = vmatpush1.msra.mxu0 0.0
        %951 = vmatprep.subr.mxu0 0.0
        %952 = vmatpush1.msra.mxu0 0.0
        %953 = vmatprep.subr.mxu0 0.0
        %954 = vmatpush1.msra.mxu0 0.0
        %955 = vmatprep.subr.mxu0 0.0
        %956 = vmatpush1.msra.mxu0 0.0
        %957 = vmatprep.subr.mxu0 0.0
        %958 = vmatpush1.msra.mxu0 0.0
        %959 = vmatprep.subr.mxu0 0.0
        %960 = vmatpush1.msra.mxu0 0.0
        %961 = vmatprep.subr.mxu0 0.0
        %962 = vmatpush1.msra.mxu0 0.0
        %963 = vmatprep.subr.mxu0 0.0
        %964 = vmatpush1.msra.mxu0 0.0
        %965 = vmatprep.subr.mxu0 0.0
        %966 = vmatpush1.msra.mxu0 0.0
        %967 = vmatprep.subr.mxu0 0.0
        %968 = vmatpush1.msra.mxu0 0.0
        %969 = vmatprep.subr.mxu0 0.0
        %970 = vmatpush1.msra.mxu0 0.0
        %971 = vmatprep.subr.mxu0 0.0
        %972 = vmatpush1.msra.mxu0 0.0
        %973 = vmatprep.subr.mxu0 0.0
        %974 = vmatpush1.msra.mxu0 0.0
        %975 = vmatprep.subr.mxu0 0.0
        %976 = vmatpush1.msra.mxu0 0.0
        %977 = vmatprep.subr.mxu0 0.0
        %978 = vmatpush1.msra.mxu0 0.0
        %979 = vmatprep.subr.mxu0 0.0
        %980 = vmatpush1.msra.mxu0 0.0
        %981 = vmatprep.subr.mxu0 0.0
        %982 = vmatpush1.msra.mxu0 0.0
        %983 = vmatprep.mubr.f32.mxu0 0.0
        %984 = vmatmul.mubr.f32.gmra.mrb[0].mxu0 %v917
        %v985 = vpop.f32.mrb[0].mxu0
        %v986 = vadd.f32 0.0, %v985
        %v987 = vpop.f32.mrb[0].mxu0
        %988 = vdwg.mxu0
        %s989 = scalar_lea.vmem %s6, 4
        %v990 = vld [vmem:[%s989] sm:$0x7]
        %s991 = scalar_lea.vmem %s3, 32
        %v992 = vld [vmem:[%s991] sm:$0xff]
        %v993 = vld [vmem:[%s991 + $0x8] sm:$0xff]
        %v994 = vld [vmem:[%s991 + $0x10] sm:$0xff]
        %v995 = vld [vmem:[%s991 + $0x18] sm:$0xff]
        %v996 = vlaneseq
        %v997 = vshrl.u32 %v996, 7
        %v998 = vsub.s32 0, %v997
        %v999 = vrot.slane %v990, %v998
        %1000 = vmatprep.subr.mxu0 0.0
        %1001 = vmatpush1.msra.mxu0 %v992
        %1002 = vmatprep.subr.mxu0 0.0
        %1003 = vmatpush1.msra.mxu0 %v993
        %1004 = vmatprep.subr.mxu0 0.0
        %1005 = vmatpush1.msra.mxu0 %v994
        %1006 = vmatprep.subr.mxu0 0.0
        %1007 = vmatpush1.msra.mxu0 %v995
        %1008 = vmatprep.subr.mxu0 0.0
        %1009 = vmatpush1.msra.mxu0 0.0
        %1010 = vmatprep.subr.mxu0 0.0
        %1011 = vmatpush1.msra.mxu0 0.0
        %1012 = vmatprep.subr.mxu0 0.0
        %1013 = vmatpush1.msra.mxu0 0.0
        %1014 = vmatprep.subr.mxu0 0.0
        %1015 = vmatpush1.msra.mxu0 0.0
        %1016 = vmatprep.subr.mxu0 0.0
        %1017 = vmatpush1.msra.mxu0 0.0
        %1018 = vmatprep.subr.mxu0 0.0
        %1019 = vmatpush1.msra.mxu0 0.0
        %1020 = vmatprep.subr.mxu0 0.0
        %1021 = vmatpush1.msra.mxu0 0.0
        %1022 = vmatprep.subr.mxu0 0.0
        %1023 = vmatpush1.msra.mxu0 0.0
        %1024 = vmatprep.subr.mxu0 0.0
        %1025 = vmatpush1.msra.mxu0 0.0
        %1026 = vmatprep.subr.mxu0 0.0
        %1027 = vmatpush1.msra.mxu0 0.0
        %1028 = vmatprep.subr.mxu0 0.0
        %1029 = vmatpush1.msra.mxu0 0.0
        %1030 = vmatprep.subr.mxu0 0.0
        %1031 = vmatpush1.msra.mxu0 0.0
        %1032 = vmatprep.subr.mxu0 0.0
        %1033 = vmatpush1.msra.mxu0 0.0
        %1034 = vmatprep.subr.mxu0 0.0
        %1035 = vmatpush1.msra.mxu0 0.0
        %1036 = vmatprep.subr.mxu0 0.0
        %1037 = vmatpush1.msra.mxu0 0.0
        %1038 = vmatprep.subr.mxu0 0.0
        %1039 = vmatpush1.msra.mxu0 0.0
        %1040 = vmatprep.subr.mxu0 0.0
        %1041 = vmatpush1.msra.mxu0 0.0
        %1042 = vmatprep.subr.mxu0 0.0
        %1043 = vmatpush1.msra.mxu0 0.0
        %1044 = vmatprep.subr.mxu0 0.0
        %1045 = vmatpush1.msra.mxu0 0.0
        %1046 = vmatprep.subr.mxu0 0.0
        %1047 = vmatpush1.msra.mxu0 0.0
        %1048 = vmatprep.subr.mxu0 0.0
        %1049 = vmatpush1.msra.mxu0 0.0
        %1050 = vmatprep.subr.mxu0 0.0
        %1051 = vmatpush1.msra.mxu0 0.0
        %1052 = vmatprep.subr.mxu0 0.0
        %1053 = vmatpush1.msra.mxu0 0.0
        %1054 = vmatprep.subr.mxu0 0.0
        %1055 = vmatpush1.msra.mxu0 0.0
        %1056 = vmatprep.subr.mxu0 0.0
        %1057 = vmatpush1.msra.mxu0 0.0
        %1058 = vmatprep.subr.mxu0 0.0
        %1059 = vmatpush1.msra.mxu0 0.0
        %1060 = vmatprep.subr.mxu0 0.0
        %1061 = vmatpush1.msra.mxu0 0.0
        %1062 = vmatprep.subr.mxu0 0.0
        %1063 = vmatpush1.msra.mxu0 0.0
        %1064 = vmatprep.mubr.f32.mxu0 0.0
        %1065 = vmatmul.mubr.f32.gmra.mrb[0].mxu0 %v599
        %v1066 = vpop.f32.mrb[0].mxu0
        %v1067 = vadd.f32 %v999, %v1066
        %v1068 = vpop.f32.mrb[0].mxu0
        %1069 = vdwg.mxu0
        %s1070 = scalar_lea.vmem %s4, 32
        %v1071 = vld [vmem:[%s1070] sm:$0xff]
        %v1072 = vld [vmem:[%s1070 + $0x8] sm:$0xff]
        %v1073 = vld [vmem:[%s1070 + $0x10] sm:$0xff]
        %v1074 = vld [vmem:[%s1070 + $0x18] sm:$0xff]
        %v1075 = vlaneseq
        %v1076 = vshrl.u32 %v1075, 7
        %v1077 = vsub.s32 1, %v1076
        %v1078 = vrot.slane %v990, %v1077
        %1079 = vmatprep.subr.mxu0 0.0
        %1080 = vmatpush1.msra.mxu0 %v1071
        %1081 = vmatprep.subr.mxu0 0.0
        %1082 = vmatpush1.msra.mxu0 %v1072
        %1083 = vmatprep.subr.mxu0 0.0
        %1084 = vmatpush1.msra.mxu0 %v1073
        %1085 = vmatprep.subr.mxu0 0.0
        %1086 = vmatpush1.msra.mxu0 %v1074
        %1087 = vmatprep.subr.mxu0 0.0
        %1088 = vmatpush1.msra.mxu0 0.0
        %1089 = vmatprep.subr.mxu0 0.0
        %1090 = vmatpush1.msra.mxu0 0.0
        %1091 = vmatprep.subr.mxu0 0.0
        %1092 = vmatpush1.msra.mxu0 0.0
        %1093 = vmatprep.subr.mxu0 0.0
        %1094 = vmatpush1.msra.mxu0 0.0
        %1095 = vmatprep.subr.mxu0 0.0
        %1096 = vmatpush1.msra.mxu0 0.0
        %1097 = vmatprep.subr.mxu0 0.0
        %1098 = vmatpush1.msra.mxu0 0.0
        %1099 = vmatprep.subr.mxu0 0.0
        %1100 = vmatpush1.msra.mxu0 0.0
        %1101 = vmatprep.subr.mxu0 0.0
        %1102 = vmatpush1.msra.mxu0 0.0
        %1103 = vmatprep.subr.mxu0 0.0
        %1104 = vmatpush1.msra.mxu0 0.0
        %1105 = vmatprep.subr.mxu0 0.0
        %1106 = vmatpush1.msra.mxu0 0.0
        %1107 = vmatprep.subr.mxu0 0.0
        %1108 = vmatpush1.msra.mxu0 0.0
        %1109 = vmatprep.subr.mxu0 0.0
        %1110 = vmatpush1.msra.mxu0 0.0
        %1111 = vmatprep.subr.mxu0 0.0
        %1112 = vmatpush1.msra.mxu0 0.0
        %1113 = vmatprep.subr.mxu0 0.0
        %1114 = vmatpush1.msra.mxu0 0.0
        %1115 = vmatprep.subr.mxu0 0.0
        %1116 = vmatpush1.msra.mxu0 0.0
        %1117 = vmatprep.subr.mxu0 0.0
        %1118 = vmatpush1.msra.mxu0 0.0
        %1119 = vmatprep.subr.mxu0 0.0
        %1120 = vmatpush1.msra.mxu0 0.0
        %1121 = vmatprep.subr.mxu0 0.0
        %1122 = vmatpush1.msra.mxu0 0.0
        %1123 = vmatprep.subr.mxu0 0.0
        %1124 = vmatpush1.msra.mxu0 0.0
        %1125 = vmatprep.subr.mxu0 0.0
        %1126 = vmatpush1.msra.mxu0 0.0
        %1127 = vmatprep.subr.mxu0 0.0
        %1128 = vmatpush1.msra.mxu0 0.0
        %1129 = vmatprep.subr.mxu0 0.0
        %1130 = vmatpush1.msra.mxu0 0.0
        %1131 = vmatprep.subr.mxu0 0.0
        %1132 = vmatpush1.msra.mxu0 0.0
        %1133 = vmatprep.subr.mxu0 0.0
        %1134 = vmatpush1.msra.mxu0 0.0
        %1135 = vmatprep.subr.mxu0 0.0
        %1136 = vmatpush1.msra.mxu0 0.0
        %1137 = vmatprep.subr.mxu0 0.0
        %1138 = vmatpush1.msra.mxu0 0.0
        %1139 = vmatprep.subr.mxu0 0.0
        %1140 = vmatpush1.msra.mxu0 0.0
        %1141 = vmatprep.subr.mxu0 0.0
        %1142 = vmatpush1.msra.mxu0 0.0
        %1143 = vmatprep.mubr.f32.mxu0 0.0
        %1144 = vmatmul.mubr.f32.gmra.mrb[0].mxu0 %v599
        %v1145 = vpop.f32.mrb[0].mxu0
        %v1146 = vadd.f32 %v1078, %v1145
        %v1147 = vpop.f32.mrb[0].mxu0
        %1148 = vdwg.mxu0
        %s1149 = scalar_lea.vmem %s5, 32
        %v1150 = vld [vmem:[%s1149] sm:$0xff]
        %v1151 = vld [vmem:[%s1149 + $0x8] sm:$0xff]
        %v1152 = vld [vmem:[%s1149 + $0x10] sm:$0xff]
        %v1153 = vld [vmem:[%s1149 + $0x18] sm:$0xff]
        %v1154 = vlaneseq
        %v1155 = vshrl.u32 %v1154, 7
        %v1156 = vsub.s32 2, %v1155
        %v1157 = vrot.slane %v990, %v1156
        %1158 = vmatprep.subr.mxu0 0.0
        %1159 = vmatpush1.msra.mxu0 %v1150
        %1160 = vmatprep.subr.mxu0 0.0
        %1161 = vmatpush1.msra.mxu0 %v1151
        %1162 = vmatprep.subr.mxu0 0.0
        %1163 = vmatpush1.msra.mxu0 %v1152
        %1164 = vmatprep.subr.mxu0 0.0
        %1165 = vmatpush1.msra.mxu0 %v1153
        %1166 = vmatprep.subr.mxu0 0.0
        %1167 = vmatpush1.msra.mxu0 0.0
        %1168 = vmatprep.subr.mxu0 0.0
        %1169 = vmatpush1.msra.mxu0 0.0
        %1170 = vmatprep.subr.mxu0 0.0
        %1171 = vmatpush1.msra.mxu0 0.0
        %1172 = vmatprep.subr.mxu0 0.0
        %1173 = vmatpush1.msra.mxu0 0.0
        %1174 = vmatprep.subr.mxu0 0.0
        %1175 = vmatpush1.msra.mxu0 0.0
        %1176 = vmatprep.subr.mxu0 0.0
        %1177 = vmatpush1.msra.mxu0 0.0
        %1178 = vmatprep.subr.mxu0 0.0
        %1179 = vmatpush1.msra.mxu0 0.0
        %1180 = vmatprep.subr.mxu0 0.0
        %1181 = vmatpush1.msra.mxu0 0.0
        %1182 = vmatprep.subr.mxu0 0.0
        %1183 = vmatpush1.msra.mxu0 0.0
        %1184 = vmatprep.subr.mxu0 0.0
        %1185 = vmatpush1.msra.mxu0 0.0
        %1186 = vmatprep.subr.mxu0 0.0
        %1187 = vmatpush1.msra.mxu0 0.0
        %1188 = vmatprep.subr.mxu0 0.0
        %1189 = vmatpush1.msra.mxu0 0.0
        %1190 = vmatprep.subr.mxu0 0.0
        %1191 = vmatpush1.msra.mxu0 0.0
        %1192 = vmatprep.subr.mxu0 0.0
        %1193 = vmatpush1.msra.mxu0 0.0
        %1194 = vmatprep.subr.mxu0 0.0
        %1195 = vmatpush1.msra.mxu0 0.0
        %1196 = vmatprep.subr.mxu0 0.0
        %1197 = vmatpush1.msra.mxu0 0.0
        %1198 = vmatprep.subr.mxu0 0.0
        %1199 = vmatpush1.msra.mxu0 0.0
        %1200 = vmatprep.subr.mxu0 0.0
        %1201 = vmatpush1.msra.mxu0 0.0
        %1202 = vmatprep.subr.mxu0 0.0
        %1203 = vmatpush1.msra.mxu0 0.0
        %1204 = vmatprep.subr.mxu0 0.0
        %1205 = vmatpush1.msra.mxu0 0.0
        %1206 = vmatprep.subr.mxu0 0.0
        %1207 = vmatpush1.msra.mxu0 0.0
        %1208 = vmatprep.subr.mxu0 0.0
        %1209 = vmatpush1.msra.mxu0 0.0
        %1210 = vmatprep.subr.mxu0 0.0
        %1211 = vmatpush1.msra.mxu0 0.0
        %1212 = vmatprep.subr.mxu0 0.0
        %1213 = vmatpush1.msra.mxu0 0.0
        %1214 = vmatprep.subr.mxu0 0.0
        %1215 = vmatpush1.msra.mxu0 0.0
        %1216 = vmatprep.subr.mxu0 0.0
        %1217 = vmatpush1.msra.mxu0 0.0
        %1218 = vmatprep.subr.mxu0 0.0
        %1219 = vmatpush1.msra.mxu0 0.0
        %1220 = vmatprep.subr.mxu0 0.0
        %1221 = vmatpush1.msra.mxu0 0.0
        %1222 = vmatprep.mubr.f32.mxu0 0.0
        %1223 = vmatmul.mubr.f32.gmra.mrb[0].mxu0 %v599
        %v1224 = vpop.f32.mrb[0].mxu0
        %v1225 = vadd.f32 %v1157, %v1224
        %v1226 = vpop.f32.mrb[0].mxu0
        %1227 = vdwg.mxu0
        %v1229 = vsel %vm827, %v1067, 0
        %v1232 = vsel %vm827, %v1146, 0
        %1234 = vmatprep.subr.mxu0 0.0
        %1235 = vmatpush1.xpose.msra.mxu0 %v1232
        %1236 = vmatprep.subr.mxu0 0.0
        %1237 = vmatpush1.xpose.msra.mxu0 0.0
        %1238 = vmatprep.subr.mxu0 0.0
        %1239 = vmatpush1.xpose.msra.mxu0 0.0
        %1240 = vmatprep.subr.mxu0 0.0
        %1241 = vmatpush1.xpose.msra.mxu0 0.0
        %1242 = vmatprep.subr.mxu0 0.0
        %1243 = vmatpush1.xpose.msra.mxu0 0.0
        %1244 = vmatprep.subr.mxu0 0.0
        %1245 = vmatpush1.xpose.msra.mxu0 0.0
        %1246 = vmatprep.subr.mxu0 0.0
        %1247 = vmatpush1.xpose.msra.mxu0 0.0
        %1248 = vmatprep.subr.mxu0 0.0
        %1249 = vmatpush1.xpose.msra.mxu0 0.0
        %1250 = vmatprep.subr.mxu0 0.0
        %1251 = vmatpush1.xpose.msra.mxu0 0.0
        %1252 = vmatprep.subr.mxu0 0.0
        %1253 = vmatpush1.xpose.msra.mxu0 0.0
        %1254 = vmatprep.subr.mxu0 0.0
        %1255 = vmatpush1.xpose.msra.mxu0 0.0
        %1256 = vmatprep.subr.mxu0 0.0
        %1257 = vmatpush1.xpose.msra.mxu0 0.0
        %1258 = vmatprep.subr.mxu0 0.0
        %1259 = vmatpush1.xpose.msra.mxu0 0.0
        %1260 = vmatprep.subr.mxu0 0.0
        %1261 = vmatpush1.xpose.msra.mxu0 0.0
        %1262 = vmatprep.subr.mxu0 0.0
        %1263 = vmatpush1.xpose.msra.mxu0 0.0
        %1264 = vmatprep.subr.mxu0 0.0
        %1265 = vmatpush1.xpose.msra.mxu0 0.0
        %1266 = vmatprep.subr.mxu0 0.0
        %1267 = vmatpush1.xpose.msra.mxu0 0.0
        %1268 = vmatprep.subr.mxu0 0.0
        %1269 = vmatpush1.xpose.msra.mxu0 0.0
        %1270 = vmatprep.subr.mxu0 0.0
        %1271 = vmatpush1.xpose.msra.mxu0 0.0
        %1272 = vmatprep.subr.mxu0 0.0
        %1273 = vmatpush1.xpose.msra.mxu0 0.0
        %1274 = vmatprep.subr.mxu0 0.0
        %1275 = vmatpush1.xpose.msra.mxu0 0.0
        %1276 = vmatprep.subr.mxu0 0.0
        %1277 = vmatpush1.xpose.msra.mxu0 0.0
        %1278 = vmatprep.subr.mxu0 0.0
        %1279 = vmatpush1.xpose.msra.mxu0 0.0
        %1280 = vmatprep.subr.mxu0 0.0
        %1281 = vmatpush1.xpose.msra.mxu0 0.0
        %1282 = vmatprep.subr.mxu0 0.0
        %1283 = vmatpush1.xpose.msra.mxu0 0.0
        %1284 = vmatprep.subr.mxu0 0.0
        %1285 = vmatpush1.xpose.msra.mxu0 0.0
        %1286 = vmatprep.subr.mxu0 0.0
        %1287 = vmatpush1.xpose.msra.mxu0 0.0
        %1288 = vmatprep.subr.mxu0 0.0
        %1289 = vmatpush1.xpose.msra.mxu0 0.0
        %1290 = vmatprep.subr.mxu0 0.0
        %1291 = vmatpush1.xpose.msra.mxu0 0.0
        %1292 = vmatprep.subr.mxu0 0.0
        %1293 = vmatpush1.xpose.msra.mxu0 0.0
        %1294 = vmatprep.subr.mxu0 0.0
        %1295 = vmatpush1.xpose.msra.mxu0 0.0
        %1296 = vmatprep.subr.mxu0 0.0
        %1297 = vmatpush1.xpose.msra.mxu0 0.0
        %1298 = vmatprep.mubr.f32.mxu0 0.0
        %1299 = vmatmul.mubr.f32.gmra.mrb[0].mxu0 %v1229
        %v1300 = vpop.f32.mrb[0].mxu0
        %v1301 = vadd.f32 0.0, %v1300
        %v1302 = vpop.f32.mrb[0].mxu0
        %1303 = vdwg.mxu0
        %v1304 = vmul.f32 %v1301, 0.35355338
        %v1305 = vsel %vm827, %v1304, -inf
        %1306 = vmax.xlane.f32.xlu0 %v1305
        %v1307 = vpop.xlane.xlu0 %1306
        %v1308 = vsub.f32 %v1304, %v1307
        %v1309 = vmul.f32 %v1308, 1.442695
        %v1310 = vpow.pop %v1309
        %v1311 = vsel %vm827, %v1310, 0.0
        %1312 = vadd.xlane.f32.xlu0 %v1311
        %v1313 = vpop.xlane.xlu0 %1312
        %v1314 = vrcp.pop %v1313
        %v1315 = vmul.f32 %v1310, %v1314
        %v1317 = vsel %vm827, %v1315, 0
        %1319 = vmatprep.subr.mxu0 0.0
        %1320 = vmatpush1.msra.mxu0 %v1225
        %1321 = vmatprep.subr.mxu0 0.0
        %1322 = vmatpush1.msra.mxu0 0.0
        %1323 = vmatprep.subr.mxu0 0.0
        %1324 = vmatpush1.msra.mxu0 0.0
        %1325 = vmatprep.subr.mxu0 0.0
        %1326 = vmatpush1.msra.mxu0 0.0
        %1327 = vmatprep.subr.mxu0 0.0
        %1328 = vmatpush1.msra.mxu0 0.0
        %1329 = vmatprep.subr.mxu0 0.0
        %1330 = vmatpush1.msra.mxu0 0.0
        %1331 = vmatprep.subr.mxu0 0.0
        %1332 = vmatpush1.msra.mxu0 0.0
        %1333 = vmatprep.subr.mxu0 0.0
        %1334 = vmatpush1.msra.mxu0 0.0
        %1335 = vmatprep.subr.mxu0 0.0
        %1336 = vmatpush1.msra.mxu0 0.0
        %1337 = vmatprep.subr.mxu0 0.0
        %1338 = vmatpush1.msra.mxu0 0.0
        %1339 = vmatprep.subr.mxu0 0.0
        %1340 = vmatpush1.msra.mxu0 0.0
        %1341 = vmatprep.subr.mxu0 0.0
        %1342 = vmatpush1.msra.mxu0 0.0
        %1343 = vmatprep.subr.mxu0 0.0
        %1344 = vmatpush1.msra.mxu0 0.0
        %1345 = vmatprep.subr.mxu0 0.0
        %1346 = vmatpush1.msra.mxu0 0.0
        %1347 = vmatprep.subr.mxu0 0.0
        %1348 = vmatpush1.msra.mxu0 0.0
        %1349 = vmatprep.subr.mxu0 0.0
        %1350 = vmatpush1.msra.mxu0 0.0
        %1351 = vmatprep.subr.mxu0 0.0
        %1352 = vmatpush1.msra.mxu0 0.0
        %1353 = vmatprep.subr.mxu0 0.0
        %1354 = vmatpush1.msra.mxu0 0.0
        %1355 = vmatprep.subr.mxu0 0.0
        %1356 = vmatpush1.msra.mxu0 0.0
        %1357 = vmatprep.subr.mxu0 0.0
        %1358 = vmatpush1.msra.mxu0 0.0
        %1359 = vmatprep.subr.mxu0 0.0
        %1360 = vmatpush1.msra.mxu0 0.0
        %1361 = vmatprep.subr.mxu0 0.0
        %1362 = vmatpush1.msra.mxu0 0.0
        %1363 = vmatprep.subr.mxu0 0.0
        %1364 = vmatpush1.msra.mxu0 0.0
        %1365 = vmatprep.subr.mxu0 0.0
        %1366 = vmatpush1.msra.mxu0 0.0
        %1367 = vmatprep.subr.mxu0 0.0
        %1368 = vmatpush1.msra.mxu0 0.0
        %1369 = vmatprep.subr.mxu0 0.0
        %1370 = vmatpush1.msra.mxu0 0.0
        %1371 = vmatprep.subr.mxu0 0.0
        %1372 = vmatpush1.msra.mxu0 0.0
        %1373 = vmatprep.subr.mxu0 0.0
        %1374 = vmatpush1.msra.mxu0 0.0
        %1375 = vmatprep.subr.mxu0 0.0
        %1376 = vmatpush1.msra.mxu0 0.0
        %1377 = vmatprep.subr.mxu0 0.0
        %1378 = vmatpush1.msra.mxu0 0.0
        %1379 = vmatprep.subr.mxu0 0.0
        %1380 = vmatpush1.msra.mxu0 0.0
        %1381 = vmatprep.subr.mxu0 0.0
        %1382 = vmatpush1.msra.mxu0 0.0
        %1383 = vmatprep.mubr.f32.mxu0 0.0
        %1384 = vmatmul.mubr.f32.gmra.mrb[0].mxu0 %v1317
        %v1385 = vpop.f32.mrb[0].mxu0
        %v1386 = vadd.f32 0.0, %v1385
        %v1387 = vpop.f32.mrb[0].mxu0
        %1388 = vdwg.mxu0
        %s1389 = scalar_lea.vmem %s6, 8
        %v1390 = vld [vmem:[%s1389] sm:$0x7]
        %s1391 = scalar_lea.vmem %s3, 64
        %v1392 = vld [vmem:[%s1391] sm:$0xff]
        %v1393 = vld [vmem:[%s1391 + $0x8] sm:$0xff]
        %v1394 = vld [vmem:[%s1391 + $0x10] sm:$0xff]
        %v1395 = vld [vmem:[%s1391 + $0x18] sm:$0xff]
        %v1396 = vlaneseq
        %v1397 = vshrl.u32 %v1396, 7
        %v1398 = vsub.s32 0, %v1397
        %v1399 = vrot.slane %v1390, %v1398
        %1400 = vmatprep.subr.mxu0 0.0
        %1401 = vmatpush1.msra.mxu0 %v1392
        %1402 = vmatprep.subr.mxu0 0.0
        %1403 = vmatpush1.msra.mxu0 %v1393
        %1404 = vmatprep.subr.mxu0 0.0
        %1405 = vmatpush1.msra.mxu0 %v1394
        %1406 = vmatprep.subr.mxu0 0.0
        %1407 = vmatpush1.msra.mxu0 %v1395
        %1408 = vmatprep.subr.mxu0 0.0
        %1409 = vmatpush1.msra.mxu0 0.0
        %1410 = vmatprep.subr.mxu0 0.0
        %1411 = vmatpush1.msra.mxu0 0.0
        %1412 = vmatprep.subr.mxu0 0.0
        %1413 = vmatpush1.msra.mxu0 0.0
        %1414 = vmatprep.subr.mxu0 0.0
        %1415 = vmatpush1.msra.mxu0 0.0
        %1416 = vmatprep.subr.mxu0 0.0
        %1417 = vmatpush1.msra.mxu0 0.0
        %1418 = vmatprep.subr.mxu0 0.0
        %1419 = vmatpush1.msra.mxu0 0.0
        %1420 = vmatprep.subr.mxu0 0.0
        %1421 = vmatpush1.msra.mxu0 0.0
        %1422 = vmatprep.subr.mxu0 0.0
        %1423 = vmatpush1.msra.mxu0 0.0
        %1424 = vmatprep.subr.mxu0 0.0
        %1425 = vmatpush1.msra.mxu0 0.0
        %1426 = vmatprep.subr.mxu0 0.0
        %1427 = vmatpush1.msra.mxu0 0.0
        %1428 = vmatprep.subr.mxu0 0.0
        %1429 = vmatpush1.msra.mxu0 0.0
        %1430 = vmatprep.subr.mxu0 0.0
        %1431 = vmatpush1.msra.mxu0 0.0
        %1432 = vmatprep.subr.mxu0 0.0
        %1433 = vmatpush1.msra.mxu0 0.0
        %1434 = vmatprep.subr.mxu0 0.0
        %1435 = vmatpush1.msra.mxu0 0.0
        %1436 = vmatprep.subr.mxu0 0.0
        %1437 = vmatpush1.msra.mxu0 0.0
        %1438 = vmatprep.subr.mxu0 0.0
        %1439 = vmatpush1.msra.mxu0 0.0
        %1440 = vmatprep.subr.mxu0 0.0
        %1441 = vmatpush1.msra.mxu0 0.0
        %1442 = vmatprep.subr.mxu0 0.0
        %1443 = vmatpush1.msra.mxu0 0.0
        %1444 = vmatprep.subr.mxu0 0.0
        %1445 = vmatpush1.msra.mxu0 0.0
        %1446 = vmatprep.subr.mxu0 0.0
        %1447 = vmatpush1.msra.mxu0 0.0
        %1448 = vmatprep.subr.mxu0 0.0
        %1449 = vmatpush1.msra.mxu0 0.0
        %1450 = vmatprep.subr.mxu0 0.0
        %1451 = vmatpush1.msra.mxu0 0.0
        %1452 = vmatprep.subr.mxu0 0.0
        %1453 = vmatpush1.msra.mxu0 0.0
        %1454 = vmatprep.subr.mxu0 0.0
        %1455 = vmatpush1.msra.mxu0 0.0
        %1456 = vmatprep.subr.mxu0 0.0
        %1457 = vmatpush1.msra.mxu0 0.0
        %1458 = vmatprep.subr.mxu0 0.0
        %1459 = vmatpush1.msra.mxu0 0.0
        %1460 = vmatprep.subr.mxu0 0.0
        %1461 = vmatpush1.msra.mxu0 0.0
        %1462 = vmatprep.subr.mxu0 0.0
        %1463 = vmatpush1.msra.mxu0 0.0
        %1464 = vmatprep.mubr.f32.mxu0 0.0
        %1465 = vmatmul.mubr.f32.gmra.mrb[0].mxu0 %v599
        %v1466 = vpop.f32.mrb[0].mxu0
        %v1467 = vadd.f32 %v1399, %v1466
        %v1468 = vpop.f32.mrb[0].mxu0
        %1469 = vdwg.mxu0
        %s1470 = scalar_lea.vmem %s4, 64
        %v1471 = vld [vmem:[%s1470] sm:$0xff]
        %v1472 = vld [vmem:[%s1470 + $0x8] sm:$0xff]
        %v1473 = vld [vmem:[%s1470 + $0x10] sm:$0xff]
        %v1474 = vld [vmem:[%s1470 + $0x18] sm:$0xff]
        %v1475 = vlaneseq
        %v1476 = vshrl.u32 %v1475, 7
        %v1477 = vsub.s32 1, %v1476
        %v1478 = vrot.slane %v1390, %v1477
        %1479 = vmatprep.subr.mxu0 0.0
        %1480 = vmatpush1.msra.mxu0 %v1471
        %1481 = vmatprep.subr.mxu0 0.0
        %1482 = vmatpush1.msra.mxu0 %v1472
        %1483 = vmatprep.subr.mxu0 0.0
        %1484 = vmatpush1.msra.mxu0 %v1473
        %1485 = vmatprep.subr.mxu0 0.0
        %1486 = vmatpush1.msra.mxu0 %v1474
        %1487 = vmatprep.subr.mxu0 0.0
        %1488 = vmatpush1.msra.mxu0 0.0
        %1489 = vmatprep.subr.mxu0 0.0
        %1490 = vmatpush1.msra.mxu0 0.0
        %1491 = vmatprep.subr.mxu0 0.0
        %1492 = vmatpush1.msra.mxu0 0.0
        %1493 = vmatprep.subr.mxu0 0.0
        %1494 = vmatpush1.msra.mxu0 0.0
        %1495 = vmatprep.subr.mxu0 0.0
        %1496 = vmatpush1.msra.mxu0 0.0
        %1497 = vmatprep.subr.mxu0 0.0
        %1498 = vmatpush1.msra.mxu0 0.0
        %1499 = vmatprep.subr.mxu0 0.0
        %1500 = vmatpush1.msra.mxu0 0.0
        %1501 = vmatprep.subr.mxu0 0.0
        %1502 = vmatpush1.msra.mxu0 0.0
        %1503 = vmatprep.subr.mxu0 0.0
        %1504 = vmatpush1.msra.mxu0 0.0
        %1505 = vmatprep.subr.mxu0 0.0
        %1506 = vmatpush1.msra.mxu0 0.0
        %1507 = vmatprep.subr.mxu0 0.0
        %1508 = vmatpush1.msra.mxu0 0.0
        %1509 = vmatprep.subr.mxu0 0.0
        %1510 = vmatpush1.msra.mxu0 0.0
        %1511 = vmatprep.subr.mxu0 0.0
        %1512 = vmatpush1.msra.mxu0 0.0
        %1513 = vmatprep.subr.mxu0 0.0
        %1514 = vmatpush1.msra.mxu0 0.0
        %1515 = vmatprep.subr.mxu0 0.0
        %1516 = vmatpush1.msra.mxu0 0.0
        %1517 = vmatprep.subr.mxu0 0.0
        %1518 = vmatpush1.msra.mxu0 0.0
        %1519 = vmatprep.subr.mxu0 0.0
        %1520 = vmatpush1.msra.mxu0 0.0
        %1521 = vmatprep.subr.mxu0 0.0
        %1522 = vmatpush1.msra.mxu0 0.0
        %1523 = vmatprep.subr.mxu0 0.0
        %1524 = vmatpush1.msra.mxu0 0.0
        %1525 = vmatprep.subr.mxu0 0.0
        %1526 = vmatpush1.msra.mxu0 0.0
        %1527 = vmatprep.subr.mxu0 0.0
        %1528 = vmatpush1.msra.mxu0 0.0
        %1529 = vmatprep.subr.mxu0 0.0
        %1530 = vmatpush1.msra.mxu0 0.0
        %1531 = vmatprep.subr.mxu0 0.0
        %1532 = vmatpush1.msra.mxu0 0.0
        %1533 = vmatprep.subr.mxu0 0.0
        %1534 = vmatpush1.msra.mxu0 0.0
        %1535 = vmatprep.subr.mxu0 0.0
        %1536 = vmatpush1.msra.mxu0 0.0
        %1537 = vmatprep.subr.mxu0 0.0
        %1538 = vmatpush1.msra.mxu0 0.0
        %1539 = vmatprep.subr.mxu0 0.0
        %1540 = vmatpush1.msra.mxu0 0.0
        %1541 = vmatprep.subr.mxu0 0.0
        %1542 = vmatpush1.msra.mxu0 0.0
        %1543 = vmatprep.mubr.f32.mxu0 0.0
        %1544 = vmatmul.mubr.f32.gmra.mrb[0].mxu0 %v599
        %v1545 = vpop.f32.mrb[0].mxu0
        %v1546 = vadd.f32 %v1478, %v1545
        %v1547 = vpop.f32.mrb[0].mxu0
        %1548 = vdwg.mxu0
        %s1549 = scalar_lea.vmem %s5, 64
        %v1550 = vld [vmem:[%s1549] sm:$0xff]
        %v1551 = vld [vmem:[%s1549 + $0x8] sm:$0xff]
        %v1552 = vld [vmem:[%s1549 + $0x10] sm:$0xff]
        %v1553 = vld [vmem:[%s1549 + $0x18] sm:$0xff]
        %v1554 = vlaneseq
        %v1555 = vshrl.u32 %v1554, 7
        %v1556 = vsub.s32 2, %v1555
        %v1557 = vrot.slane %v1390, %v1556
        %1558 = vmatprep.subr.mxu0 0.0
        %1559 = vmatpush1.msra.mxu0 %v1550
        %1560 = vmatprep.subr.mxu0 0.0
        %1561 = vmatpush1.msra.mxu0 %v1551
        %1562 = vmatprep.subr.mxu0 0.0
        %1563 = vmatpush1.msra.mxu0 %v1552
        %1564 = vmatprep.subr.mxu0 0.0
        %1565 = vmatpush1.msra.mxu0 %v1553
        %1566 = vmatprep.subr.mxu0 0.0
        %1567 = vmatpush1.msra.mxu0 0.0
        %1568 = vmatprep.subr.mxu0 0.0
        %1569 = vmatpush1.msra.mxu0 0.0
        %1570 = vmatprep.subr.mxu0 0.0
        %1571 = vmatpush1.msra.mxu0 0.0
        %1572 = vmatprep.subr.mxu0 0.0
        %1573 = vmatpush1.msra.mxu0 0.0
        %1574 = vmatprep.subr.mxu0 0.0
        %1575 = vmatpush1.msra.mxu0 0.0
        %1576 = vmatprep.subr.mxu0 0.0
        %1577 = vmatpush1.msra.mxu0 0.0
        %1578 = vmatprep.subr.mxu0 0.0
        %1579 = vmatpush1.msra.mxu0 0.0
        %1580 = vmatprep.subr.mxu0 0.0
        %1581 = vmatpush1.msra.mxu0 0.0
        %1582 = vmatprep.subr.mxu0 0.0
        %1583 = vmatpush1.msra.mxu0 0.0
        %1584 = vmatprep.subr.mxu0 0.0
        %1585 = vmatpush1.msra.mxu0 0.0
        %1586 = vmatprep.subr.mxu0 0.0
        %1587 = vmatpush1.msra.mxu0 0.0
        %1588 = vmatprep.subr.mxu0 0.0
        %1589 = vmatpush1.msra.mxu0 0.0
        %1590 = vmatprep.subr.mxu0 0.0
        %1591 = vmatpush1.msra.mxu0 0.0
        %1592 = vmatprep.subr.mxu0 0.0
        %1593 = vmatpush1.msra.mxu0 0.0
        %1594 = vmatprep.subr.mxu0 0.0
        %1595 = vmatpush1.msra.mxu0 0.0
        %1596 = vmatprep.subr.mxu0 0.0
        %1597 = vmatpush1.msra.mxu0 0.0
        %1598 = vmatprep.subr.mxu0 0.0
        %1599 = vmatpush1.msra.mxu0 0.0
        %1600 = vmatprep.subr.mxu0 0.0
        %1601 = vmatpush1.msra.mxu0 0.0
        %1602 = vmatprep.subr.mxu0 0.0
        %1603 = vmatpush1.msra.mxu0 0.0
        %1604 = vmatprep.subr.mxu0 0.0
        %1605 = vmatpush1.msra.mxu0 0.0
        %1606 = vmatprep.subr.mxu0 0.0
        %1607 = vmatpush1.msra.mxu0 0.0
        %1608 = vmatprep.subr.mxu0 0.0
        %1609 = vmatpush1.msra.mxu0 0.0
        %1610 = vmatprep.subr.mxu0 0.0
        %1611 = vmatpush1.msra.mxu0 0.0
        %1612 = vmatprep.subr.mxu0 0.0
        %1613 = vmatpush1.msra.mxu0 0.0
        %1614 = vmatprep.subr.mxu0 0.0
        %1615 = vmatpush1.msra.mxu0 0.0
        %1616 = vmatprep.subr.mxu0 0.0
        %1617 = vmatpush1.msra.mxu0 0.0
        %1618 = vmatprep.subr.mxu0 0.0
        %1619 = vmatpush1.msra.mxu0 0.0
        %1620 = vmatprep.subr.mxu0 0.0
        %1621 = vmatpush1.msra.mxu0 0.0
        %1622 = vmatprep.mubr.f32.mxu0 0.0
        %1623 = vmatmul.mubr.f32.gmra.mrb[0].mxu0 %v599
        %v1624 = vpop.f32.mrb[0].mxu0
        %v1625 = vadd.f32 %v1557, %v1624
        %v1626 = vpop.f32.mrb[0].mxu0
        %1627 = vdwg.mxu0
        %v1629 = vsel %vm827, %v1467, 0
        %v1632 = vsel %vm827, %v1546, 0
        %1634 = vmatprep.subr.mxu0 0.0
        %1635 = vmatpush1.xpose.msra.mxu0 %v1632
        %1636 = vmatprep.subr.mxu0 0.0
        %1637 = vmatpush1.xpose.msra.mxu0 0.0
        %1638 = vmatprep.subr.mxu0 0.0
        %1639 = vmatpush1.xpose.msra.mxu0 0.0
        %1640 = vmatprep.subr.mxu0 0.0
        %1641 = vmatpush1.xpose.msra.mxu0 0.0
        %1642 = vmatprep.subr.mxu0 0.0
        %1643 = vmatpush1.xpose.msra.mxu0 0.0
        %1644 = vmatprep.subr.mxu0 0.0
        %1645 = vmatpush1.xpose.msra.mxu0 0.0
        %1646 = vmatprep.subr.mxu0 0.0
        %1647 = vmatpush1.xpose.msra.mxu0 0.0
        %1648 = vmatprep.subr.mxu0 0.0
        %1649 = vmatpush1.xpose.msra.mxu0 0.0
        %1650 = vmatprep.subr.mxu0 0.0
        %1651 = vmatpush1.xpose.msra.mxu0 0.0
        %1652 = vmatprep.subr.mxu0 0.0
        %1653 = vmatpush1.xpose.msra.mxu0 0.0
        %1654 = vmatprep.subr.mxu0 0.0
        %1655 = vmatpush1.xpose.msra.mxu0 0.0
        %1656 = vmatprep.subr.mxu0 0.0
        %1657 = vmatpush1.xpose.msra.mxu0 0.0
        %1658 = vmatprep.subr.mxu0 0.0
        %1659 = vmatpush1.xpose.msra.mxu0 0.0
        %1660 = vmatprep.subr.mxu0 0.0
        %1661 = vmatpush1.xpose.msra.mxu0 0.0
        %1662 = vmatprep.subr.mxu0 0.0
        %1663 = vmatpush1.xpose.msra.mxu0 0.0
        %1664 = vmatprep.subr.mxu0 0.0
        %1665 = vmatpush1.xpose.msra.mxu0 0.0
        %1666 = vmatprep.subr.mxu0 0.0
        %1667 = vmatpush1.xpose.msra.mxu0 0.0
        %1668 = vmatprep.subr.mxu0 0.0
        %1669 = vmatpush1.xpose.msra.mxu0 0.0
        %1670 = vmatprep.subr.mxu0 0.0
        %1671 = vmatpush1.xpose.msra.mxu0 0.0
        %1672 = vmatprep.subr.mxu0 0.0
        %1673 = vmatpush1.xpose.msra.mxu0 0.0
        %1674 = vmatprep.subr.mxu0 0.0
        %1675 = vmatpush1.xpose.msra.mxu0 0.0
        %1676 = vmatprep.subr.mxu0 0.0
        %1677 = vmatpush1.xpose.msra.mxu0 0.0
        %1678 = vmatprep.subr.mxu0 0.0
        %1679 = vmatpush1.xpose.msra.mxu0 0.0
        %1680 = vmatprep.subr.mxu0 0.0
        %1681 = vmatpush1.xpose.msra.mxu0 0.0
        %1682 = vmatprep.subr.mxu0 0.0
        %1683 = vmatpush1.xpose.msra.mxu0 0.0
        %1684 = vmatprep.subr.mxu0 0.0
        %1685 = vmatpush1.xpose.msra.mxu0 0.0
        %1686 = vmatprep.subr.mxu0 0.0
        %1687 = vmatpush1.xpose.msra.mxu0 0.0
        %1688 = vmatprep.subr.mxu0 0.0
        %1689 = vmatpush1.xpose.msra.mxu0 0.0
        %1690 = vmatprep.subr.mxu0 0.0
        %1691 = vmatpush1.xpose.msra.mxu0 0.0
        %1692 = vmatprep.subr.mxu0 0.0
        %1693 = vmatpush1.xpose.msra.mxu0 0.0
        %1694 = vmatprep.subr.mxu0 0.0
        %1695 = vmatpush1.xpose.msra.mxu0 0.0
        %1696 = vmatprep.subr.mxu0 0.0
        %1697 = vmatpush1.xpose.msra.mxu0 0.0
        %1698 = vmatprep.mubr.f32.mxu0 0.0
        %1699 = vmatmul.mubr.f32.gmra.mrb[0].mxu0 %v1629
        %v1700 = vpop.f32.mrb[0].mxu0
        %v1701 = vadd.f32 0.0, %v1700
        %v1702 = vpop.f32.mrb[0].mxu0
        %1703 = vdwg.mxu0
        %v1704 = vmul.f32 %v1701, 0.35355338
        %v1705 = vsel %vm827, %v1704, -inf
        %1706 = vmax.xlane.f32.xlu0 %v1705
        %v1707 = vpop.xlane.xlu0 %1706
        %v1708 = vsub.f32 %v1704, %v1707
        %v1709 = vmul.f32 %v1708, 1.442695
        %v1710 = vpow.pop %v1709
        %v1711 = vsel %vm827, %v1710, 0.0
        %1712 = vadd.xlane.f32.xlu0 %v1711
        %v1713 = vpop.xlane.xlu0 %1712
        %v1714 = vrcp.pop %v1713
        %v1715 = vmul.f32 %v1710, %v1714
        %v1717 = vsel %vm827, %v1715, 0
        %1719 = vmatprep.subr.mxu0 0.0
        %1720 = vmatpush1.msra.mxu0 %v1625
        %1721 = vmatprep.subr.mxu0 0.0
        %1722 = vmatpush1.msra.mxu0 0.0
        %1723 = vmatprep.subr.mxu0 0.0
        %1724 = vmatpush1.msra.mxu0 0.0
        %1725 = vmatprep.subr.mxu0 0.0
        %1726 = vmatpush1.msra.mxu0 0.0
        %1727 = vmatprep.subr.mxu0 0.0
        %1728 = vmatpush1.msra.mxu0 0.0
        %1729 = vmatprep.subr.mxu0 0.0
        %1730 = vmatpush1.msra.mxu0 0.0
        %1731 = vmatprep.subr.mxu0 0.0
        %1732 = vmatpush1.msra.mxu0 0.0
        %1733 = vmatprep.subr.mxu0 0.0
        %1734 = vmatpush1.msra.mxu0 0.0
        %1735 = vmatprep.subr.mxu0 0.0
        %1736 = vmatpush1.msra.mxu0 0.0
        %1737 = vmatprep.subr.mxu0 0.0
        %1738 = vmatpush1.msra.mxu0 0.0
        %1739 = vmatprep.subr.mxu0 0.0
        %1740 = vmatpush1.msra.mxu0 0.0
        %1741 = vmatprep.subr.mxu0 0.0
        %1742 = vmatpush1.msra.mxu0 0.0
        %1743 = vmatprep.subr.mxu0 0.0
        %1744 = vmatpush1.msra.mxu0 0.0
        %1745 = vmatprep.subr.mxu0 0.0
        %1746 = vmatpush1.msra.mxu0 0.0
        %1747 = vmatprep.subr.mxu0 0.0
        %1748 = vmatpush1.msra.mxu0 0.0
        %1749 = vmatprep.subr.mxu0 0.0
        %1750 = vmatpush1.msra.mxu0 0.0
        %1751 = vmatprep.subr.mxu0 0.0
        %1752 = vmatpush1.msra.mxu0 0.0
        %1753 = vmatprep.subr.mxu0 0.0
        %1754 = vmatpush1.msra.mxu0 0.0
        %1755 = vmatprep.subr.mxu0 0.0
        %1756 = vmatpush1.msra.mxu0 0.0
        %1757 = vmatprep.subr.mxu0 0.0
        %1758 = vmatpush1.msra.mxu0 0.0
        %1759 = vmatprep.subr.mxu0 0.0
        %1760 = vmatpush1.msra.mxu0 0.0
        %1761 = vmatprep.subr.mxu0 0.0
        %1762 = vmatpush1.msra.mxu0 0.0
        %1763 = vmatprep.subr.mxu0 0.0
        %1764 = vmatpush1.msra.mxu0 0.0
        %1765 = vmatprep.subr.mxu0 0.0
        %1766 = vmatpush1.msra.mxu0 0.0
        %1767 = vmatprep.subr.mxu0 0.0
        %1768 = vmatpush1.msra.mxu0 0.0
        %1769 = vmatprep.subr.mxu0 0.0
        %1770 = vmatpush1.msra.mxu0 0.0
        %1771 = vmatprep.subr.mxu0 0.0
        %1772 = vmatpush1.msra.mxu0 0.0
        %1773 = vmatprep.subr.mxu0 0.0
        %1774 = vmatpush1.msra.mxu0 0.0
        %1775 = vmatprep.subr.mxu0 0.0
        %1776 = vmatpush1.msra.mxu0 0.0
        %1777 = vmatprep.subr.mxu0 0.0
        %1778 = vmatpush1.msra.mxu0 0.0
        %1779 = vmatprep.subr.mxu0 0.0
        %1780 = vmatpush1.msra.mxu0 0.0
        %1781 = vmatprep.subr.mxu0 0.0
        %1782 = vmatpush1.msra.mxu0 0.0
        %1783 = vmatprep.mubr.f32.mxu0 0.0
        %1784 = vmatmul.mubr.f32.gmra.mrb[0].mxu0 %v1717
        %v1785 = vpop.f32.mrb[0].mxu0
        %v1786 = vadd.f32 0.0, %v1785
        %v1787 = vpop.f32.mrb[0].mxu0
        %1788 = vdwg.mxu0
        %s1789 = scalar_lea.vmem %s6, 12
        %v1790 = vld [vmem:[%s1789] sm:$0x7]
        %s1791 = scalar_lea.vmem %s3, 96
        %v1792 = vld [vmem:[%s1791] sm:$0xff]
        %v1793 = vld [vmem:[%s1791 + $0x8] sm:$0xff]
        %v1794 = vld [vmem:[%s1791 + $0x10] sm:$0xff]
        %v1795 = vld [vmem:[%s1791 + $0x18] sm:$0xff]
        %v1796 = vlaneseq
        %v1797 = vshrl.u32 %v1796, 7
        %v1798 = vsub.s32 0, %v1797
        %v1799 = vrot.slane %v1790, %v1798
        %1800 = vmatprep.subr.mxu0 0.0
        %1801 = vmatpush1.msra.mxu0 %v1792
        %1802 = vmatprep.subr.mxu0 0.0
        %1803 = vmatpush1.msra.mxu0 %v1793
        %1804 = vmatprep.subr.mxu0 0.0
        %1805 = vmatpush1.msra.mxu0 %v1794
        %1806 = vmatprep.subr.mxu0 0.0
        %1807 = vmatpush1.msra.mxu0 %v1795
        %1808 = vmatprep.subr.mxu0 0.0
        %1809 = vmatpush1.msra.mxu0 0.0
        %1810 = vmatprep.subr.mxu0 0.0
        %1811 = vmatpush1.msra.mxu0 0.0
        %1812 = vmatprep.subr.mxu0 0.0
        %1813 = vmatpush1.msra.mxu0 0.0
        %1814 = vmatprep.subr.mxu0 0.0
        %1815 = vmatpush1.msra.mxu0 0.0
        %1816 = vmatprep.subr.mxu0 0.0
        %1817 = vmatpush1.msra.mxu0 0.0
        %1818 = vmatprep.subr.mxu0 0.0
        %1819 = vmatpush1.msra.mxu0 0.0
        %1820 = vmatprep.subr.mxu0 0.0
        %1821 = vmatpush1.msra.mxu0 0.0
        %1822 = vmatprep.subr.mxu0 0.0
        %1823 = vmatpush1.msra.mxu0 0.0
        %1824 = vmatprep.subr.mxu0 0.0
        %1825 = vmatpush1.msra.mxu0 0.0
        %1826 = vmatprep.subr.mxu0 0.0
        %1827 = vmatpush1.msra.mxu0 0.0
        %1828 = vmatprep.subr.mxu0 0.0
        %1829 = vmatpush1.msra.mxu0 0.0
        %1830 = vmatprep.subr.mxu0 0.0
        %1831 = vmatpush1.msra.mxu0 0.0
        %1832 = vmatprep.subr.mxu0 0.0
        %1833 = vmatpush1.msra.mxu0 0.0
        %1834 = vmatprep.subr.mxu0 0.0
        %1835 = vmatpush1.msra.mxu0 0.0
        %1836 = vmatprep.subr.mxu0 0.0
        %1837 = vmatpush1.msra.mxu0 0.0
        %1838 = vmatprep.subr.mxu0 0.0
        %1839 = vmatpush1.msra.mxu0 0.0
        %1840 = vmatprep.subr.mxu0 0.0
        %1841 = vmatpush1.msra.mxu0 0.0
        %1842 = vmatprep.subr.mxu0 0.0
        %1843 = vmatpush1.msra.mxu0 0.0
        %1844 = vmatprep.subr.mxu0 0.0
        %1845 = vmatpush1.msra.mxu0 0.0
        %1846 = vmatprep.subr.mxu0 0.0
        %1847 = vmatpush1.msra.mxu0 0.0
        %1848 = vmatprep.subr.mxu0 0.0
        %1849 = vmatpush1.msra.mxu0 0.0
        %1850 = vmatprep.subr.mxu0 0.0
        %1851 = vmatpush1.msra.mxu0 0.0
        %1852 = vmatprep.subr.mxu0 0.0
        %1853 = vmatpush1.msra.mxu0 0.0
        %1854 = vmatprep.subr.mxu0 0.0
        %1855 = vmatpush1.msra.mxu0 0.0
        %1856 = vmatprep.subr.mxu0 0.0
        %1857 = vmatpush1.msra.mxu0 0.0
        %1858 = vmatprep.subr.mxu0 0.0
        %1859 = vmatpush1.msra.mxu0 0.0
        %1860 = vmatprep.subr.mxu0 0.0
        %1861 = vmatpush1.msra.mxu0 0.0
        %1862 = vmatprep.subr.mxu0 0.0
        %1863 = vmatpush1.msra.mxu0 0.0
        %1864 = vmatprep.mubr.f32.mxu0 0.0
        %1865 = vmatmul.mubr.f32.gmra.mrb[0].mxu0 %v599
        %v1866 = vpop.f32.mrb[0].mxu0
        %v1867 = vadd.f32 %v1799, %v1866
        %v1868 = vpop.f32.mrb[0].mxu0
        %1869 = vdwg.mxu0
        %s1870 = scalar_lea.vmem %s4, 96
        %v1871 = vld [vmem:[%s1870] sm:$0xff]
        %v1872 = vld [vmem:[%s1870 + $0x8] sm:$0xff]
        %v1873 = vld [vmem:[%s1870 + $0x10] sm:$0xff]
        %v1874 = vld [vmem:[%s1870 + $0x18] sm:$0xff]
        %v1875 = vlaneseq
        %v1876 = vshrl.u32 %v1875, 7
        %v1877 = vsub.s32 1, %v1876
        %v1878 = vrot.slane %v1790, %v1877
        %1879 = vmatprep.subr.mxu0 0.0
        %1880 = vmatpush1.msra.mxu0 %v1871
        %1881 = vmatprep.subr.mxu0 0.0
        %1882 = vmatpush1.msra.mxu0 %v1872
        %1883 = vmatprep.subr.mxu0 0.0
        %1884 = vmatpush1.msra.mxu0 %v1873
        %1885 = vmatprep.subr.mxu0 0.0
        %1886 = vmatpush1.msra.mxu0 %v1874
        %1887 = vmatprep.subr.mxu0 0.0
        %1888 = vmatpush1.msra.mxu0 0.0
        %1889 = vmatprep.subr.mxu0 0.0
        %1890 = vmatpush1.msra.mxu0 0.0
        %1891 = vmatprep.subr.mxu0 0.0
        %1892 = vmatpush1.msra.mxu0 0.0
        %1893 = vmatprep.subr.mxu0 0.0
        %1894 = vmatpush1.msra.mxu0 0.0
        %1895 = vmatprep.subr.mxu0 0.0
        %1896 = vmatpush1.msra.mxu0 0.0
        %1897 = vmatprep.subr.mxu0 0.0
        %1898 = vmatpush1.msra.mxu0 0.0
        %1899 = vmatprep.subr.mxu0 0.0
        %1900 = vmatpush1.msra.mxu0 0.0
        %1901 = vmatprep.subr.mxu0 0.0
        %1902 = vmatpush1.msra.mxu0 0.0
        %1903 = vmatprep.subr.mxu0 0.0
        %1904 = vmatpush1.msra.mxu0 0.0
        %1905 = vmatprep.subr.mxu0 0.0
        %1906 = vmatpush1.msra.mxu0 0.0
        %1907 = vmatprep.subr.mxu0 0.0
        %1908 = vmatpush1.msra.mxu0 0.0
        %1909 = vmatprep.subr.mxu0 0.0
        %1910 = vmatpush1.msra.mxu0 0.0
        %1911 = vmatprep.subr.mxu0 0.0
        %1912 = vmatpush1.msra.mxu0 0.0
        %1913 = vmatprep.subr.mxu0 0.0
        %1914 = vmatpush1.msra.mxu0 0.0
        %1915 = vmatprep.subr.mxu0 0.0
        %1916 = vmatpush1.msra.mxu0 0.0
        %1917 = vmatprep.subr.mxu0 0.0
        %1918 = vmatpush1.msra.mxu0 0.0
        %1919 = vmatprep.subr.mxu0 0.0
        %1920 = vmatpush1.msra.mxu0 0.0
        %1921 = vmatprep.subr.mxu0 0.0
        %1922 = vmatpush1.msra.mxu0 0.0
        %1923 = vmatprep.subr.mxu0 0.0
        %1924 = vmatpush1.msra.mxu0 0.0
        %1925 = vmatprep.subr.mxu0 0.0
        %1926 = vmatpush1.msra.mxu0 0.0
        %1927 = vmatprep.subr.mxu0 0.0
        %1928 = vmatpush1.msra.mxu0 0.0
        %1929 = vmatprep.subr.mxu0 0.0
        %1930 = vmatpush1.msra.mxu0 0.0
        %1931 = vmatprep.subr.mxu0 0.0
        %1932 = vmatpush1.msra.mxu0 0.0
        %1933 = vmatprep.subr.mxu0 0.0
        %1934 = vmatpush1.msra.mxu0 0.0
        %1935 = vmatprep.subr.mxu0 0.0
        %1936 = vmatpush1.msra.mxu0 0.0
        %1937 = vmatprep.subr.mxu0 0.0
        %1938 = vmatpush1.msra.mxu0 0.0
        %1939 = vmatprep.subr.mxu0 0.0
        %1940 = vmatpush1.msra.mxu0 0.0
        %1941 = vmatprep.subr.mxu0 0.0
        %1942 = vmatpush1.msra.mxu0 0.0
        %1943 = vmatprep.mubr.f32.mxu0 0.0
        %1944 = vmatmul.mubr.f32.gmra.mrb[0].mxu0 %v599
        %v1945 = vpop.f32.mrb[0].mxu0
        %v1946 = vadd.f32 %v1878, %v1945
        %v1947 = vpop.f32.mrb[0].mxu0
        %1948 = vdwg.mxu0
        %s1949 = scalar_lea.vmem %s5, 96
        %v1950 = vld [vmem:[%s1949] sm:$0xff]
        %v1951 = vld [vmem:[%s1949 + $0x8] sm:$0xff]
        %v1952 = vld [vmem:[%s1949 + $0x10] sm:$0xff]
        %v1953 = vld [vmem:[%s1949 + $0x18] sm:$0xff]
        %v1954 = vlaneseq
        %v1955 = vshrl.u32 %v1954, 7
        %v1956 = vsub.s32 2, %v1955
        %v1957 = vrot.slane %v1790, %v1956
        %1958 = vmatprep.subr.mxu0 0.0
        %1959 = vmatpush1.msra.mxu0 %v1950
        %1960 = vmatprep.subr.mxu0 0.0
        %1961 = vmatpush1.msra.mxu0 %v1951
        %1962 = vmatprep.subr.mxu0 0.0
        %1963 = vmatpush1.msra.mxu0 %v1952
        %1964 = vmatprep.subr.mxu0 0.0
        %1965 = vmatpush1.msra.mxu0 %v1953
        %1966 = vmatprep.subr.mxu0 0.0
        %1967 = vmatpush1.msra.mxu0 0.0
        %1968 = vmatprep.subr.mxu0 0.0
        %1969 = vmatpush1.msra.mxu0 0.0
        %1970 = vmatprep.subr.mxu0 0.0
        %1971 = vmatpush1.msra.mxu0 0.0
        %1972 = vmatprep.subr.mxu0 0.0
        %1973 = vmatpush1.msra.mxu0 0.0
        %1974 = vmatprep.subr.mxu0 0.0
        %1975 = vmatpush1.msra.mxu0 0.0
        %1976 = vmatprep.subr.mxu0 0.0
        %1977 = vmatpush1.msra.mxu0 0.0
        %1978 = vmatprep.subr.mxu0 0.0
        %1979 = vmatpush1.msra.mxu0 0.0
        %1980 = vmatprep.subr.mxu0 0.0
        %1981 = vmatpush1.msra.mxu0 0.0
        %1982 = vmatprep.subr.mxu0 0.0
        %1983 = vmatpush1.msra.mxu0 0.0
        %1984 = vmatprep.subr.mxu0 0.0
        %1985 = vmatpush1.msra.mxu0 0.0
        %1986 = vmatprep.subr.mxu0 0.0
        %1987 = vmatpush1.msra.mxu0 0.0
        %1988 = vmatprep.subr.mxu0 0.0
        %1989 = vmatpush1.msra.mxu0 0.0
        %1990 = vmatprep.subr.mxu0 0.0
        %1991 = vmatpush1.msra.mxu0 0.0
        %1992 = vmatprep.subr.mxu0 0.0
        %1993 = vmatpush1.msra.mxu0 0.0
        %1994 = vmatprep.subr.mxu0 0.0
        %1995 = vmatpush1.msra.mxu0 0.0
        %1996 = vmatprep.subr.mxu0 0.0
        %1997 = vmatpush1.msra.mxu0 0.0
        %1998 = vmatprep.subr.mxu0 0.0
        %1999 = vmatpush1.msra.mxu0 0.0
        %2000 = vmatprep.subr.mxu0 0.0
        %2001 = vmatpush1.msra.mxu0 0.0
        %2002 = vmatprep.subr.mxu0 0.0
        %2003 = vmatpush1.msra.mxu0 0.0
        %2004 = vmatprep.subr.mxu0 0.0
        %2005 = vmatpush1.msra.mxu0 0.0
        %2006 = vmatprep.subr.mxu0 0.0
        %2007 = vmatpush1.msra.mxu0 0.0
        %2008 = vmatprep.subr.mxu0 0.0
        %2009 = vmatpush1.msra.mxu0 0.0
        %2010 = vmatprep.subr.mxu0 0.0
        %2011 = vmatpush1.msra.mxu0 0.0
        %2012 = vmatprep.subr.mxu0 0.0
        %2013 = vmatpush1.msra.mxu0 0.0
        %2014 = vmatprep.subr.mxu0 0.0
        %2015 = vmatpush1.msra.mxu0 0.0
        %2016 = vmatprep.subr.mxu0 0.0
        %2017 = vmatpush1.msra.mxu0 0.0
        %2018 = vmatprep.subr.mxu0 0.0
        %2019 = vmatpush1.msra.mxu0 0.0
        %2020 = vmatprep.subr.mxu0 0.0
        %2021 = vmatpush1.msra.mxu0 0.0
        %2022 = vmatprep.mubr.f32.mxu0 0.0
        %2023 = vmatmul.mubr.f32.gmra.mrb[0].mxu0 %v599
        %v2024 = vpop.f32.mrb[0].mxu0
        %v2025 = vadd.f32 %v1957, %v2024
        %v2026 = vpop.f32.mrb[0].mxu0
        %2027 = vdwg.mxu0
        %v2029 = vsel %vm827, %v1867, 0
        %v2032 = vsel %vm827, %v1946, 0
        %2034 = vmatprep.subr.mxu0 0.0
        %2035 = vmatpush1.xpose.msra.mxu0 %v2032
        %2036 = vmatprep.subr.mxu0 0.0
        %2037 = vmatpush1.xpose.msra.mxu0 0.0
        %2038 = vmatprep.subr.mxu0 0.0
        %2039 = vmatpush1.xpose.msra.mxu0 0.0
        %2040 = vmatprep.subr.mxu0 0.0
        %2041 = vmatpush1.xpose.msra.mxu0 0.0
        %2042 = vmatprep.subr.mxu0 0.0
        %2043 = vmatpush1.xpose.msra.mxu0 0.0
        %2044 = vmatprep.subr.mxu0 0.0
        %2045 = vmatpush1.xpose.msra.mxu0 0.0
        %2046 = vmatprep.subr.mxu0 0.0
        %2047 = vmatpush1.xpose.msra.mxu0 0.0
        %2048 = vmatprep.subr.mxu0 0.0
        %2049 = vmatpush1.xpose.msra.mxu0 0.0
        %2050 = vmatprep.subr.mxu0 0.0
        %2051 = vmatpush1.xpose.msra.mxu0 0.0
        %2052 = vmatprep.subr.mxu0 0.0
        %2053 = vmatpush1.xpose.msra.mxu0 0.0
        %2054 = vmatprep.subr.mxu0 0.0
        %2055 = vmatpush1.xpose.msra.mxu0 0.0
        %2056 = vmatprep.subr.mxu0 0.0
        %2057 = vmatpush1.xpose.msra.mxu0 0.0
        %2058 = vmatprep.subr.mxu0 0.0
        %2059 = vmatpush1.xpose.msra.mxu0 0.0
        %2060 = vmatprep.subr.mxu0 0.0
        %2061 = vmatpush1.xpose.msra.mxu0 0.0
        %2062 = vmatprep.subr.mxu0 0.0
        %2063 = vmatpush1.xpose.msra.mxu0 0.0
        %2064 = vmatprep.subr.mxu0 0.0
        %2065 = vmatpush1.xpose.msra.mxu0 0.0
        %2066 = vmatprep.subr.mxu0 0.0
        %2067 = vmatpush1.xpose.msra.mxu0 0.0
        %2068 = vmatprep.subr.mxu0 0.0
        %2069 = vmatpush1.xpose.msra.mxu0 0.0
        %2070 = vmatprep.subr.mxu0 0.0
        %2071 = vmatpush1.xpose.msra.mxu0 0.0
        %2072 = vmatprep.subr.mxu0 0.0
        %2073 = vmatpush1.xpose.msra.mxu0 0.0
        %2074 = vmatprep.subr.mxu0 0.0
        %2075 = vmatpush1.xpose.msra.mxu0 0.0
        %2076 = vmatprep.subr.mxu0 0.0
        %2077 = vmatpush1.xpose.msra.mxu0 0.0
        %2078 = vmatprep.subr.mxu0 0.0
        %2079 = vmatpush1.xpose.msra.mxu0 0.0
        %2080 = vmatprep.subr.mxu0 0.0
        %2081 = vmatpush1.xpose.msra.mxu0 0.0
        %2082 = vmatprep.subr.mxu0 0.0
        %2083 = vmatpush1.xpose.msra.mxu0 0.0
        %2084 = vmatprep.subr.mxu0 0.0
        %2085 = vmatpush1.xpose.msra.mxu0 0.0
        %2086 = vmatprep.subr.mxu0 0.0
        %2087 = vmatpush1.xpose.msra.mxu0 0.0
        %2088 = vmatprep.subr.mxu0 0.0
        %2089 = vmatpush1.xpose.msra.mxu0 0.0
        %2090 = vmatprep.subr.mxu0 0.0
        %2091 = vmatpush1.xpose.msra.mxu0 0.0
        %2092 = vmatprep.subr.mxu0 0.0
        %2093 = vmatpush1.xpose.msra.mxu0 0.0
        %2094 = vmatprep.subr.mxu0 0.0
        %2095 = vmatpush1.xpose.msra.mxu0 0.0
        %2096 = vmatprep.subr.mxu0 0.0
        %2097 = vmatpush1.xpose.msra.mxu0 0.0
        %2098 = vmatprep.mubr.f32.mxu0 0.0
        %2099 = vmatmul.mubr.f32.gmra.mrb[0].mxu0 %v2029
        %v2100 = vpop.f32.mrb[0].mxu0
        %v2101 = vadd.f32 0.0, %v2100
        %v2102 = vpop.f32.mrb[0].mxu0
        %2103 = vdwg.mxu0
        %v2104 = vmul.f32 %v2101, 0.35355338
        %v2105 = vsel %vm827, %v2104, -inf
        %2106 = vmax.xlane.f32.xlu0 %v2105
        %v2107 = vpop.xlane.xlu0 %2106
        %v2108 = vsub.f32 %v2104, %v2107
        %v2109 = vmul.f32 %v2108, 1.442695
        %v2110 = vpow.pop %v2109
        %v2111 = vsel %vm827, %v2110, 0.0
        %2112 = vadd.xlane.f32.xlu0 %v2111
        %v2113 = vpop.xlane.xlu0 %2112
        %v2114 = vrcp.pop %v2113
        %v2115 = vmul.f32 %v2110, %v2114
        %v2117 = vsel %vm827, %v2115, 0
        %2119 = vmatprep.subr.mxu0 0.0
        %2120 = vmatpush1.msra.mxu0 %v2025
        %2121 = vmatprep.subr.mxu0 0.0
        %2122 = vmatpush1.msra.mxu0 0.0
        %2123 = vmatprep.subr.mxu0 0.0
        %2124 = vmatpush1.msra.mxu0 0.0
        %2125 = vmatprep.subr.mxu0 0.0
        %2126 = vmatpush1.msra.mxu0 0.0
        %2127 = vmatprep.subr.mxu0 0.0
        %2128 = vmatpush1.msra.mxu0 0.0
        %2129 = vmatprep.subr.mxu0 0.0
        %2130 = vmatpush1.msra.mxu0 0.0
        %2131 = vmatprep.subr.mxu0 0.0
        %2132 = vmatpush1.msra.mxu0 0.0
        %2133 = vmatprep.subr.mxu0 0.0
        %2134 = vmatpush1.msra.mxu0 0.0
        %2135 = vmatprep.subr.mxu0 0.0
        %2136 = vmatpush1.msra.mxu0 0.0
        %2137 = vmatprep.subr.mxu0 0.0
        %2138 = vmatpush1.msra.mxu0 0.0
        %2139 = vmatprep.subr.mxu0 0.0
        %2140 = vmatpush1.msra.mxu0 0.0
        %2141 = vmatprep.subr.mxu0 0.0
        %2142 = vmatpush1.msra.mxu0 0.0
        %2143 = vmatprep.subr.mxu0 0.0
        %2144 = vmatpush1.msra.mxu0 0.0
        %2145 = vmatprep.subr.mxu0 0.0
        %2146 = vmatpush1.msra.mxu0 0.0
        %2147 = vmatprep.subr.mxu0 0.0
        %2148 = vmatpush1.msra.mxu0 0.0
        %2149 = vmatprep.subr.mxu0 0.0
        %2150 = vmatpush1.msra.mxu0 0.0
        %2151 = vmatprep.subr.mxu0 0.0
        %2152 = vmatpush1.msra.mxu0 0.0
        %2153 = vmatprep.subr.mxu0 0.0
        %2154 = vmatpush1.msra.mxu0 0.0
        %2155 = vmatprep.subr.mxu0 0.0
        %2156 = vmatpush1.msra.mxu0 0.0
        %2157 = vmatprep.subr.mxu0 0.0
        %2158 = vmatpush1.msra.mxu0 0.0
        %2159 = vmatprep.subr.mxu0 0.0
        %2160 = vmatpush1.msra.mxu0 0.0
        %2161 = vmatprep.subr.mxu0 0.0
        %2162 = vmatpush1.msra.mxu0 0.0
        %2163 = vmatprep.subr.mxu0 0.0
        %2164 = vmatpush1.msra.mxu0 0.0
        %2165 = vmatprep.subr.mxu0 0.0
        %2166 = vmatpush1.msra.mxu0 0.0
        %2167 = vmatprep.subr.mxu0 0.0
        %2168 = vmatpush1.msra.mxu0 0.0
        %2169 = vmatprep.subr.mxu0 0.0
        %2170 = vmatpush1.msra.mxu0 0.0
        %2171 = vmatprep.subr.mxu0 0.0
        %2172 = vmatpush1.msra.mxu0 0.0
        %2173 = vmatprep.subr.mxu0 0.0
        %2174 = vmatpush1.msra.mxu0 0.0
        %2175 = vmatprep.subr.mxu0 0.0
        %2176 = vmatpush1.msra.mxu0 0.0
        %2177 = vmatprep.subr.mxu0 0.0
        %2178 = vmatpush1.msra.mxu0 0.0
        %2179 = vmatprep.subr.mxu0 0.0
        %2180 = vmatpush1.msra.mxu0 0.0
        %2181 = vmatprep.subr.mxu0 0.0
        %2182 = vmatpush1.msra.mxu0 0.0
        %2183 = vmatprep.mubr.f32.mxu0 0.0
        %2184 = vmatmul.mubr.f32.gmra.mrb[0].mxu0 %v2117
        %v2185 = vpop.f32.mrb[0].mxu0
        %v2186 = vadd.f32 0.0, %v2185
        %v2187 = vpop.f32.mrb[0].mxu0
        %2188 = vdwg.mxu0
        %2190 = vrot.lane.b32.xlu0 %v1386, 8
        %v2191 = vpop.permute.xlu0 %2190
        %2194 = vrot.lane.b32.xlu0 %v1786, 16
        %v2195 = vpop.permute.xlu0 %2194
        %2198 = vrot.lane.b32.xlu0 %v2186, 24
        %v2199 = vpop.permute.xlu0 %2198
        %v2201 = vsel %vm827, %v986, %v2191
        %v2202 = vsel %vm513, %v2201, %v2195
        %vm2203 = vcmask 195584
        %v2204 = vsel %vm2203, %v2202, %v2199
        %v2205 = vld [vmem:[%s7] sm:$0xff]
        %v2206 = vld [vmem:[%s7 + $0x8] sm:$0xff]
        %v2207 = vld [vmem:[%s7 + $0x10] sm:$0xff]
        %v2208 = vld [vmem:[%s7 + $0x18] sm:$0xff]
        %v2209 = vlaneseq
        %v2210 = vshrl.u32 %v2209, 7
        %v2211 = vsub.s32 0, %v2210
        %v2212 = vrot.slane %v587, %v2211
        %v2214 = vsel %vm597, %v2204, 0
        %2216 = vmatprep.subr.mxu0 0.0
        %2217 = vmatpush1.msra.mxu0 %v2205
        %2218 = vmatprep.subr.mxu0 0.0
        %2219 = vmatpush1.msra.mxu0 %v2206
        %2220 = vmatprep.subr.mxu0 0.0
        %2221 = vmatpush1.msra.mxu0 %v2207
        %2222 = vmatprep.subr.mxu0 0.0
        %2223 = vmatpush1.msra.mxu0 %v2208
        %2224 = vmatprep.subr.mxu0 0.0
        %2225 = vmatpush1.msra.mxu0 0.0
        %2226 = vmatprep.subr.mxu0 0.0
        %2227 = vmatpush1.msra.mxu0 0.0
        %2228 = vmatprep.subr.mxu0 0.0
        %2229 = vmatpush1.msra.mxu0 0.0
        %2230 = vmatprep.subr.mxu0 0.0
        %2231 = vmatpush1.msra.mxu0 0.0
        %2232 = vmatprep.subr.mxu0 0.0
        %2233 = vmatpush1.msra.mxu0 0.0
        %2234 = vmatprep.subr.mxu0 0.0
        %2235 = vmatpush1.msra.mxu0 0.0
        %2236 = vmatprep.subr.mxu0 0.0
        %2237 = vmatpush1.msra.mxu0 0.0
        %2238 = vmatprep.subr.mxu0 0.0
        %2239 = vmatpush1.msra.mxu0 0.0
        %2240 = vmatprep.subr.mxu0 0.0
        %2241 = vmatpush1.msra.mxu0 0.0
        %2242 = vmatprep.subr.mxu0 0.0
        %2243 = vmatpush1.msra.mxu0 0.0
        %2244 = vmatprep.subr.mxu0 0.0
        %2245 = vmatpush1.msra.mxu0 0.0
        %2246 = vmatprep.subr.mxu0 0.0
        %2247 = vmatpush1.msra.mxu0 0.0
        %2248 = vmatprep.subr.mxu0 0.0
        %2249 = vmatpush1.msra.mxu0 0.0
        %2250 = vmatprep.subr.mxu0 0.0
        %2251 = vmatpush1.msra.mxu0 0.0
        %2252 = vmatprep.subr.mxu0 0.0
        %2253 = vmatpush1.msra.mxu0 0.0
        %2254 = vmatprep.subr.mxu0 0.0
        %2255 = vmatpush1.msra.mxu0 0.0
        %2256 = vmatprep.subr.mxu0 0.0
        %2257 = vmatpush1.msra.mxu0 0.0
        %2258 = vmatprep.subr.mxu0 0.0
        %2259 = vmatpush1.msra.mxu0 0.0
        %2260 = vmatprep.subr.mxu0 0.0
        %2261 = vmatpush1.msra.mxu0 0.0
        %2262 = vmatprep.subr.mxu0 0.0
        %2263 = vmatpush1.msra.mxu0 0.0
        %2264 = vmatprep.subr.mxu0 0.0
        %2265 = vmatpush1.msra.mxu0 0.0
        %2266 = vmatprep.subr.mxu0 0.0
        %2267 = vmatpush1.msra.mxu0 0.0
        %2268 = vmatprep.subr.mxu0 0.0
        %2269 = vmatpush1.msra.mxu0 0.0
        %2270 = vmatprep.subr.mxu0 0.0
        %2271 = vmatpush1.msra.mxu0 0.0
        %2272 = vmatprep.subr.mxu0 0.0
        %2273 = vmatpush1.msra.mxu0 0.0
        %2274 = vmatprep.subr.mxu0 0.0
        %2275 = vmatpush1.msra.mxu0 0.0
        %2276 = vmatprep.subr.mxu0 0.0
        %2277 = vmatpush1.msra.mxu0 0.0
        %2278 = vmatprep.subr.mxu0 0.0
        %2279 = vmatpush1.msra.mxu0 0.0
        %2280 = vmatprep.mubr.f32.mxu0 0.0
        %2281 = vmatmul.mubr.f32.gmra.mrb[0].mxu0 %v2214
        %v2282 = vpop.f32.mrb[0].mxu0
        %v2283 = vadd.f32 %v2212, %v2282
        %v2284 = vpop.f32.mrb[0].mxu0
        %2285 = vdwg.mxu0
        %v2286 = vadd.f32 %v584, %v2283
        %v2287 = vsel %vm597, %v2286, 0.0
        %2288 = vadd.xlane.f32.xlu0 %v2287
        %v2289 = vpop.xlane.xlu0 %2288
        %v2290 = vrcp.pop 32.0
        %v2291 = vmul.f32 %v2289, %v2290
        %v2292 = vsub.f32 %v2286, %v2291
        %v2293 = vmul.f32 %v2292, %v2292
        %v2294 = vsel %vm597, %v2293, 0.0
        %2295 = vadd.xlane.f32.xlu0 %v2294
        %v2296 = vpop.xlane.xlu0 %2295
        %v2297 = vmul.f32 %v2296, %v2290
        %v2298 = vadd.f32 %v2297, 1e-05
        %v2299 = vrsqrt.pop %v2298
        %v2300 = vmul.f32 %v2292, %v2299
        %v2301 = vlaneseq
        %v2302 = vshrl.u32 %v2301, 7
        %v2303 = vsub.s32 1, %v2302
        %v2304 = vrot.slane %v587, %v2303
        %v2305 = vmul.f32 %v2300, %v2304
        %v2306 = vlaneseq
        %v2307 = vshrl.u32 %v2306, 7
        %v2308 = vsub.s32 2, %v2307
        %v2309 = vrot.slane %v587, %v2308
        %v2310 = vadd.f32 %v2305, %v2309
        %v2311 = vld [vmem:[%s8] sm:$0xff]
        %v2312 = vld [vmem:[%s8 + $0x8] sm:$0xff]
        %v2313 = vld [vmem:[%s8 + $0x10] sm:$0xff]
        %v2314 = vld [vmem:[%s8 + $0x18] sm:$0xff]
        %v2315 = vld [vmem:[%s9] sm:$0x1]
        %v2317 = vlaneseq
        %v2318 = vshrl.u32 %v2317, 7
        %v2319 = vsub.s32 0, %v2318
        %v2320 = vrot.slane %v2315, %v2319
        %v2323 = vsel %vm597, %v2310, 0
        %2325 = vmatprep.subr.mxu0 0.0
        %2326 = vmatpush1.msra.mxu0 %v2311
        %2327 = vmatprep.subr.mxu0 0.0
        %2328 = vmatpush1.msra.mxu0 %v2312
        %2329 = vmatprep.subr.mxu0 0.0
        %2330 = vmatpush1.msra.mxu0 %v2313
        %2331 = vmatprep.subr.mxu0 0.0
        %2332 = vmatpush1.msra.mxu0 %v2314
        %2333 = vmatprep.subr.mxu0 0.0
        %2334 = vmatpush1.msra.mxu0 0.0
        %2335 = vmatprep.subr.mxu0 0.0
        %2336 = vmatpush1.msra.mxu0 0.0
        %2337 = vmatprep.subr.mxu0 0.0
        %2338 = vmatpush1.msra.mxu0 0.0
        %2339 = vmatprep.subr.mxu0 0.0
        %2340 = vmatpush1.msra.mxu0 0.0
        %2341 = vmatprep.subr.mxu0 0.0
        %2342 = vmatpush1.msra.mxu0 0.0
        %2343 = vmatprep.subr.mxu0 0.0
        %2344 = vmatpush1.msra.mxu0 0.0
        %2345 = vmatprep.subr.mxu0 0.0
        %2346 = vmatpush1.msra.mxu0 0.0
        %2347 = vmatprep.subr.mxu0 0.0
        %2348 = vmatpush1.msra.mxu0 0.0
        %2349 = vmatprep.subr.mxu0 0.0
        %2350 = vmatpush1.msra.mxu0 0.0
        %2351 = vmatprep.subr.mxu0 0.0
        %2352 = vmatpush1.msra.mxu0 0.0
        %2353 = vmatprep.subr.mxu0 0.0
        %2354 = vmatpush1.msra.mxu0 0.0
        %2355 = vmatprep.subr.mxu0 0.0
        %2356 = vmatpush1.msra.mxu0 0.0
        %2357 = vmatprep.subr.mxu0 0.0
        %2358 = vmatpush1.msra.mxu0 0.0
        %2359 = vmatprep.subr.mxu0 0.0
        %2360 = vmatpush1.msra.mxu0 0.0
        %2361 = vmatprep.subr.mxu0 0.0
        %2362 = vmatpush1.msra.mxu0 0.0
        %2363 = vmatprep.subr.mxu0 0.0
        %2364 = vmatpush1.msra.mxu0 0.0
        %2365 = vmatprep.subr.mxu0 0.0
        %2366 = vmatpush1.msra.mxu0 0.0
        %2367 = vmatprep.subr.mxu0 0.0
        %2368 = vmatpush1.msra.mxu0 0.0
        %2369 = vmatprep.subr.mxu0 0.0
        %2370 = vmatpush1.msra.mxu0 0.0
        %2371 = vmatprep.subr.mxu0 0.0
        %2372 = vmatpush1.msra.mxu0 0.0
        %2373 = vmatprep.subr.mxu0 0.0
        %2374 = vmatpush1.msra.mxu0 0.0
        %2375 = vmatprep.subr.mxu0 0.0
        %2376 = vmatpush1.msra.mxu0 0.0
        %2377 = vmatprep.subr.mxu0 0.0
        %2378 = vmatpush1.msra.mxu0 0.0
        %2379 = vmatprep.subr.mxu0 0.0
        %2380 = vmatpush1.msra.mxu0 0.0
        %2381 = vmatprep.subr.mxu0 0.0
        %2382 = vmatpush1.msra.mxu0 0.0
        %2383 = vmatprep.subr.mxu0 0.0
        %2384 = vmatpush1.msra.mxu0 0.0
        %2385 = vmatprep.subr.mxu0 0.0
        %2386 = vmatpush1.msra.mxu0 0.0
        %2387 = vmatprep.subr.mxu0 0.0
        %2388 = vmatpush1.msra.mxu0 0.0
        %2389 = vmatprep.mubr.f32.mxu0 0.0
        %2390 = vmatmul.mubr.f32.gmra.mrb[0].mxu0 %v2323
        %v2391 = vpop.f32.mrb[0].mxu0
        %v2392 = vadd.f32 %v2320, %v2391
        %v2393 = vpop.f32.mrb[0].mxu0
        %2394 = vdwg.mxu0
        %v2395 = vmax.f32 %v2392, 0.0
        %v2396 = vld [vmem:[%s10] sm:$0xff]
        %v2397 = vld [vmem:[%s10 + $0x8] sm:$0xff]
        %v2398 = vld [vmem:[%s10 + $0x10] sm:$0xff]
        %v2399 = vld [vmem:[%s10 + $0x18] sm:$0xff]
        %v2400 = vld [vmem:[%s10 + $0x20] sm:$0xff]
        %v2401 = vld [vmem:[%s10 + $0x28] sm:$0xff]
        %v2402 = vld [vmem:[%s10 + $0x30] sm:$0xff]
        %v2403 = vld [vmem:[%s10 + $0x38] sm:$0xff]
        %v2404 = vlaneseq
        %v2405 = vshrl.u32 %v2404, 7
        %v2406 = vsub.s32 3, %v2405
        %v2407 = vrot.slane %v587, %v2406
        %vm2408 = vcmask 523264
        %v2410 = vsel %vm2408, %v2395, 0
        %2412 = vmatprep.subr.mxu0 0.0
        %2413 = vmatpush1.msra.mxu0 %v2396
        %2414 = vmatprep.subr.mxu0 0.0
        %2415 = vmatpush1.msra.mxu0 %v2397
        %2416 = vmatprep.subr.mxu0 0.0
        %2417 = vmatpush1.msra.mxu0 %v2398
        %2418 = vmatprep.subr.mxu0 0.0
        %2419 = vmatpush1.msra.mxu0 %v2399
        %2420 = vmatprep.subr.mxu0 0.0
        %2421 = vmatpush1.msra.mxu0 %v2400
        %2422 = vmatprep.subr.mxu0 0.0
        %2423 = vmatpush1.msra.mxu0 %v2401
        %2424 = vmatprep.subr.mxu0 0.0
        %2425 = vmatpush1.msra.mxu0 %v2402
        %2426 = vmatprep.subr.mxu0 0.0
        %2427 = vmatpush1.msra.mxu0 %v2403
        %2428 = vmatprep.subr.mxu0 0.0
        %2429 = vmatpush1.msra.mxu0 0.0
        %2430 = vmatprep.subr.mxu0 0.0
        %2431 = vmatpush1.msra.mxu0 0.0
        %2432 = vmatprep.subr.mxu0 0.0
        %2433 = vmatpush1.msra.mxu0 0.0
        %2434 = vmatprep.subr.mxu0 0.0
        %2435 = vmatpush1.msra.mxu0 0.0
        %2436 = vmatprep.subr.mxu0 0.0
        %2437 = vmatpush1.msra.mxu0 0.0
        %2438 = vmatprep.subr.mxu0 0.0
        %2439 = vmatpush1.msra.mxu0 0.0
        %2440 = vmatprep.subr.mxu0 0.0
        %2441 = vmatpush1.msra.mxu0 0.0
        %2442 = vmatprep.subr.mxu0 0.0
        %2443 = vmatpush1.msra.mxu0 0.0
        %2444 = vmatprep.subr.mxu0 0.0
        %2445 = vmatpush1.msra.mxu0 0.0
        %2446 = vmatprep.subr.mxu0 0.0
        %2447 = vmatpush1.msra.mxu0 0.0
        %2448 = vmatprep.subr.mxu0 0.0
        %2449 = vmatpush1.msra.mxu0 0.0
        %2450 = vmatprep.subr.mxu0 0.0
        %2451 = vmatpush1.msra.mxu0 0.0
        %2452 = vmatprep.subr.mxu0 0.0
        %2453 = vmatpush1.msra.mxu0 0.0
        %2454 = vmatprep.subr.mxu0 0.0
        %2455 = vmatpush1.msra.mxu0 0.0
        %2456 = vmatprep.subr.mxu0 0.0
        %2457 = vmatpush1.msra.mxu0 0.0
        %2458 = vmatprep.subr.mxu0 0.0
        %2459 = vmatpush1.msra.mxu0 0.0
        %2460 = vmatprep.subr.mxu0 0.0
        %2461 = vmatpush1.msra.mxu0 0.0
        %2462 = vmatprep.subr.mxu0 0.0
        %2463 = vmatpush1.msra.mxu0 0.0
        %2464 = vmatprep.subr.mxu0 0.0
        %2465 = vmatpush1.msra.mxu0 0.0
        %2466 = vmatprep.subr.mxu0 0.0
        %2467 = vmatpush1.msra.mxu0 0.0
        %2468 = vmatprep.subr.mxu0 0.0
        %2469 = vmatpush1.msra.mxu0 0.0
        %2470 = vmatprep.subr.mxu0 0.0
        %2471 = vmatpush1.msra.mxu0 0.0
        %2472 = vmatprep.subr.mxu0 0.0
        %2473 = vmatpush1.msra.mxu0 0.0
        %2474 = vmatprep.subr.mxu0 0.0
        %2475 = vmatpush1.msra.mxu0 0.0
        %2476 = vmatprep.mubr.f32.mxu0 0.0
        %2477 = vmatmul.mubr.f32.gmra.mrb[0].mxu0 %v2410
        %v2478 = vpop.f32.mrb[0].mxu0
        %v2479 = vadd.f32 %v2407, %v2478
        %v2480 = vpop.f32.mrb[0].mxu0
        %2481 = vdwg.mxu0
        %v2482 = vadd.f32 %v2310, %v2479
        %v2483 = vsel %vm597, %v2482, 0.0
        %2484 = vadd.xlane.f32.xlu0 %v2483
        %v2485 = vpop.xlane.xlu0 %2484
        %v2486 = vmul.f32 %v2485, %v2290
        %v2487 = vsub.f32 %v2482, %v2486
        %v2488 = vmul.f32 %v2487, %v2487
        %v2489 = vsel %vm597, %v2488, 0.0
        %2490 = vadd.xlane.f32.xlu0 %v2489
        %v2491 = vpop.xlane.xlu0 %2490
        %v2492 = vmul.f32 %v2491, %v2290
        %v2493 = vadd.f32 %v2492, 1e-05
        %v2494 = vrsqrt.pop %v2493
        %v2495 = vmul.f32 %v2487, %v2494
        %v2496 = vlaneseq
        %v2497 = vshrl.u32 %v2496, 7
        %v2498 = vsub.s32 4, %v2497
        %v2499 = vrot.slane %v587, %v2498
        %v2500 = vmul.f32 %v2495, %v2499
        %v2501 = vlaneseq
        %v2502 = vshrl.u32 %v2501, 7
        %v2503 = vsub.s32 5, %v2502
        %v2504 = vrot.slane %v587, %v2503
        %v2505 = vadd.f32 %v2500, %v2504
        %s2506 = scalar_lea.vmem %s11, 8
        %v2507 = vld [vmem:[%s2506] sm:$0x3f]
        %s2508 = scalar_lea.vmem %s6, 16
        %v2509 = vld [vmem:[%s2508] sm:$0x7]
        %s2510 = scalar_lea.vmem %s3, 128
        %v2511 = vld [vmem:[%s2510] sm:$0xff]
        %v2512 = vld [vmem:[%s2510 + $0x8] sm:$0xff]
        %v2513 = vld [vmem:[%s2510 + $0x10] sm:$0xff]
        %v2514 = vld [vmem:[%s2510 + $0x18] sm:$0xff]
        %v2515 = vlaneseq
        %v2516 = vshrl.u32 %v2515, 7
        %v2517 = vsub.s32 0, %v2516
        %v2518 = vrot.slane %v2509, %v2517
        %v2520 = vsel %vm597, %v2505, 0
        %2522 = vmatprep.subr.mxu0 0.0
        %2523 = vmatpush1.msra.mxu0 %v2511
        %2524 = vmatprep.subr.mxu0 0.0
        %2525 = vmatpush1.msra.mxu0 %v2512
        %2526 = vmatprep.subr.mxu0 0.0
        %2527 = vmatpush1.msra.mxu0 %v2513
        %2528 = vmatprep.subr.mxu0 0.0
        %2529 = vmatpush1.msra.mxu0 %v2514
        %2530 = vmatprep.subr.mxu0 0.0
        %2531 = vmatpush1.msra.mxu0 0.0
        %2532 = vmatprep.subr.mxu0 0.0
        %2533 = vmatpush1.msra.mxu0 0.0
        %2534 = vmatprep.subr.mxu0 0.0
        %2535 = vmatpush1.msra.mxu0 0.0
        %2536 = vmatprep.subr.mxu0 0.0
        %2537 = vmatpush1.msra.mxu0 0.0
        %2538 = vmatprep.subr.mxu0 0.0
        %2539 = vmatpush1.msra.mxu0 0.0
        %2540 = vmatprep.subr.mxu0 0.0
        %2541 = vmatpush1.msra.mxu0 0.0
        %2542 = vmatprep.subr.mxu0 0.0
        %2543 = vmatpush1.msra.mxu0 0.0
        %2544 = vmatprep.subr.mxu0 0.0
        %2545 = vmatpush1.msra.mxu0 0.0
        %2546 = vmatprep.subr.mxu0 0.0
        %2547 = vmatpush1.msra.mxu0 0.0
        %2548 = vmatprep.subr.mxu0 0.0
        %2549 = vmatpush1.msra.mxu0 0.0
        %2550 = vmatprep.subr.mxu0 0.0
        %2551 = vmatpush1.msra.mxu0 0.0
        %2552 = vmatprep.subr.mxu0 0.0
        %2553 = vmatpush1.msra.mxu0 0.0
        %2554 = vmatprep.subr.mxu0 0.0
        %2555 = vmatpush1.msra.mxu0 0.0
        %2556 = vmatprep.subr.mxu0 0.0
        %2557 = vmatpush1.msra.mxu0 0.0
        %2558 = vmatprep.subr.mxu0 0.0
        %2559 = vmatpush1.msra.mxu0 0.0
        %2560 = vmatprep.subr.mxu0 0.0
        %2561 = vmatpush1.msra.mxu0 0.0
        %2562 = vmatprep.subr.mxu0 0.0
        %2563 = vmatpush1.msra.mxu0 0.0
        %2564 = vmatprep.subr.mxu0 0.0
        %2565 = vmatpush1.msra.mxu0 0.0
        %2566 = vmatprep.subr.mxu0 0.0
        %2567 = vmatpush1.msra.mxu0 0.0
        %2568 = vmatprep.subr.mxu0 0.0
        %2569 = vmatpush1.msra.mxu0 0.0
        %2570 = vmatprep.subr.mxu0 0.0
        %2571 = vmatpush1.msra.mxu0 0.0
        %2572 = vmatprep.subr.mxu0 0.0
        %2573 = vmatpush1.msra.mxu0 0.0
        %2574 = vmatprep.subr.mxu0 0.0
        %2575 = vmatpush1.msra.mxu0 0.0
        %2576 = vmatprep.subr.mxu0 0.0
        %2577 = vmatpush1.msra.mxu0 0.0
        %2578 = vmatprep.subr.mxu0 0.0
        %2579 = vmatpush1.msra.mxu0 0.0
        %2580 = vmatprep.subr.mxu0 0.0
        %2581 = vmatpush1.msra.mxu0 0.0
        %2582 = vmatprep.subr.mxu0 0.0
        %2583 = vmatpush1.msra.mxu0 0.0
        %2584 = vmatprep.subr.mxu0 0.0
        %2585 = vmatpush1.msra.mxu0 0.0
        %2586 = vmatprep.mubr.f32.mxu0 0.0
        %2587 = vmatmul.mubr.f32.gmra.mrb[0].mxu0 %v2520
        %v2588 = vpop.f32.mrb[0].mxu0
        %v2589 = vadd.f32 %v2518, %v2588
        %v2590 = vpop.f32.mrb[0].mxu0
        %2591 = vdwg.mxu0
        %s2592 = scalar_lea.vmem %s4, 128
        %v2593 = vld [vmem:[%s2592] sm:$0xff]
        %v2594 = vld [vmem:[%s2592 + $0x8] sm:$0xff]
        %v2595 = vld [vmem:[%s2592 + $0x10] sm:$0xff]
        %v2596 = vld [vmem:[%s2592 + $0x18] sm:$0xff]
        %v2597 = vlaneseq
        %v2598 = vshrl.u32 %v2597, 7
        %v2599 = vsub.s32 1, %v2598
        %v2600 = vrot.slane %v2509, %v2599
        %2601 = vmatprep.subr.mxu0 0.0
        %2602 = vmatpush1.msra.mxu0 %v2593
        %2603 = vmatprep.subr.mxu0 0.0
        %2604 = vmatpush1.msra.mxu0 %v2594
        %2605 = vmatprep.subr.mxu0 0.0
        %2606 = vmatpush1.msra.mxu0 %v2595
        %2607 = vmatprep.subr.mxu0 0.0
        %2608 = vmatpush1.msra.mxu0 %v2596
        %2609 = vmatprep.subr.mxu0 0.0
        %2610 = vmatpush1.msra.mxu0 0.0
        %2611 = vmatprep.subr.mxu0 0.0
        %2612 = vmatpush1.msra.mxu0 0.0
        %2613 = vmatprep.subr.mxu0 0.0
        %2614 = vmatpush1.msra.mxu0 0.0
        %2615 = vmatprep.subr.mxu0 0.0
        %2616 = vmatpush1.msra.mxu0 0.0
        %2617 = vmatprep.subr.mxu0 0.0
        %2618 = vmatpush1.msra.mxu0 0.0
        %2619 = vmatprep.subr.mxu0 0.0
        %2620 = vmatpush1.msra.mxu0 0.0
        %2621 = vmatprep.subr.mxu0 0.0
        %2622 = vmatpush1.msra.mxu0 0.0
        %2623 = vmatprep.subr.mxu0 0.0
        %2624 = vmatpush1.msra.mxu0 0.0
        %2625 = vmatprep.subr.mxu0 0.0
        %2626 = vmatpush1.msra.mxu0 0.0
        %2627 = vmatprep.subr.mxu0 0.0
        %2628 = vmatpush1.msra.mxu0 0.0
        %2629 = vmatprep.subr.mxu0 0.0
        %2630 = vmatpush1.msra.mxu0 0.0
        %2631 = vmatprep.subr.mxu0 0.0
        %2632 = vmatpush1.msra.mxu0 0.0
        %2633 = vmatprep.subr.mxu0 0.0
        %2634 = vmatpush1.msra.mxu0 0.0
        %2635 = vmatprep.subr.mxu0 0.0
        %2636 = vmatpush1.msra.mxu0 0.0
        %2637 = vmatprep.subr.mxu0 0.0
        %2638 = vmatpush1.msra.mxu0 0.0
        %2639 = vmatprep.subr.mxu0 0.0
        %2640 = vmatpush1.msra.mxu0 0.0
        %2641 = vmatprep.subr.mxu0 0.0
        %2642 = vmatpush1.msra.mxu0 0.0
        %2643 = vmatprep.subr.mxu0 0.0
        %2644 = vmatpush1.msra.mxu0 0.0
        %2645 = vmatprep.subr.mxu0 0.0
        %2646 = vmatpush1.msra.mxu0 0.0
        %2647 = vmatprep.subr.mxu0 0.0
        %2648 = vmatpush1.msra.mxu0 0.0
        %2649 = vmatprep.subr.mxu0 0.0
        %2650 = vmatpush1.msra.mxu0 0.0
        %2651 = vmatprep.subr.mxu0 0.0
        %2652 = vmatpush1.msra.mxu0 0.0
        %2653 = vmatprep.subr.mxu0 0.0
        %2654 = vmatpush1.msra.mxu0 0.0
        %2655 = vmatprep.subr.mxu0 0.0
        %2656 = vmatpush1.msra.mxu0 0.0
        %2657 = vmatprep.subr.mxu0 0.0
        %2658 = vmatpush1.msra.mxu0 0.0
        %2659 = vmatprep.subr.mxu0 0.0
        %2660 = vmatpush1.msra.mxu0 0.0
        %2661 = vmatprep.subr.mxu0 0.0
        %2662 = vmatpush1.msra.mxu0 0.0
        %2663 = vmatprep.subr.mxu0 0.0
        %2664 = vmatpush1.msra.mxu0 0.0
        %2665 = vmatprep.mubr.f32.mxu0 0.0
        %2666 = vmatmul.mubr.f32.gmra.mrb[0].mxu0 %v2520
        %v2667 = vpop.f32.mrb[0].mxu0
        %v2668 = vadd.f32 %v2600, %v2667
        %v2669 = vpop.f32.mrb[0].mxu0
        %2670 = vdwg.mxu0
        %s2671 = scalar_lea.vmem %s5, 128
        %v2672 = vld [vmem:[%s2671] sm:$0xff]
        %v2673 = vld [vmem:[%s2671 + $0x8] sm:$0xff]
        %v2674 = vld [vmem:[%s2671 + $0x10] sm:$0xff]
        %v2675 = vld [vmem:[%s2671 + $0x18] sm:$0xff]
        %v2676 = vlaneseq
        %v2677 = vshrl.u32 %v2676, 7
        %v2678 = vsub.s32 2, %v2677
        %v2679 = vrot.slane %v2509, %v2678
        %2680 = vmatprep.subr.mxu0 0.0
        %2681 = vmatpush1.msra.mxu0 %v2672
        %2682 = vmatprep.subr.mxu0 0.0
        %2683 = vmatpush1.msra.mxu0 %v2673
        %2684 = vmatprep.subr.mxu0 0.0
        %2685 = vmatpush1.msra.mxu0 %v2674
        %2686 = vmatprep.subr.mxu0 0.0
        %2687 = vmatpush1.msra.mxu0 %v2675
        %2688 = vmatprep.subr.mxu0 0.0
        %2689 = vmatpush1.msra.mxu0 0.0
        %2690 = vmatprep.subr.mxu0 0.0
        %2691 = vmatpush1.msra.mxu0 0.0
        %2692 = vmatprep.subr.mxu0 0.0
        %2693 = vmatpush1.msra.mxu0 0.0
        %2694 = vmatprep.subr.mxu0 0.0
        %2695 = vmatpush1.msra.mxu0 0.0
        %2696 = vmatprep.subr.mxu0 0.0
        %2697 = vmatpush1.msra.mxu0 0.0
        %2698 = vmatprep.subr.mxu0 0.0
        %2699 = vmatpush1.msra.mxu0 0.0
        %2700 = vmatprep.subr.mxu0 0.0
        %2701 = vmatpush1.msra.mxu0 0.0
        %2702 = vmatprep.subr.mxu0 0.0
        %2703 = vmatpush1.msra.mxu0 0.0
        %2704 = vmatprep.subr.mxu0 0.0
        %2705 = vmatpush1.msra.mxu0 0.0
        %2706 = vmatprep.subr.mxu0 0.0
        %2707 = vmatpush1.msra.mxu0 0.0
        %2708 = vmatprep.subr.mxu0 0.0
        %2709 = vmatpush1.msra.mxu0 0.0
        %2710 = vmatprep.subr.mxu0 0.0
        %2711 = vmatpush1.msra.mxu0 0.0
        %2712 = vmatprep.subr.mxu0 0.0
        %2713 = vmatpush1.msra.mxu0 0.0
        %2714 = vmatprep.subr.mxu0 0.0
        %2715 = vmatpush1.msra.mxu0 0.0
        %2716 = vmatprep.subr.mxu0 0.0
        %2717 = vmatpush1.msra.mxu0 0.0
        %2718 = vmatprep.subr.mxu0 0.0
        %2719 = vmatpush1.msra.mxu0 0.0
        %2720 = vmatprep.subr.mxu0 0.0
        %2721 = vmatpush1.msra.mxu0 0.0
        %2722 = vmatprep.subr.mxu0 0.0
        %2723 = vmatpush1.msra.mxu0 0.0
        %2724 = vmatprep.subr.mxu0 0.0
        %2725 = vmatpush1.msra.mxu0 0.0
        %2726 = vmatprep.subr.mxu0 0.0
        %2727 = vmatpush1.msra.mxu0 0.0
        %2728 = vmatprep.subr.mxu0 0.0
        %2729 = vmatpush1.msra.mxu0 0.0
        %2730 = vmatprep.subr.mxu0 0.0
        %2731 = vmatpush1.msra.mxu0 0.0
        %2732 = vmatprep.subr.mxu0 0.0
        %2733 = vmatpush1.msra.mxu0 0.0
        %2734 = vmatprep.subr.mxu0 0.0
        %2735 = vmatpush1.msra.mxu0 0.0
        %2736 = vmatprep.subr.mxu0 0.0
        %2737 = vmatpush1.msra.mxu0 0.0
        %2738 = vmatprep.subr.mxu0 0.0
        %2739 = vmatpush1.msra.mxu0 0.0
        %2740 = vmatprep.subr.mxu0 0.0
        %2741 = vmatpush1.msra.mxu0 0.0
        %2742 = vmatprep.subr.mxu0 0.0
        %2743 = vmatpush1.msra.mxu0 0.0
        %2744 = vmatprep.mubr.f32.mxu0 0.0
        %2745 = vmatmul.mubr.f32.gmra.mrb[0].mxu0 %v2520
        %v2746 = vpop.f32.mrb[0].mxu0
        %v2747 = vadd.f32 %v2679, %v2746
        %v2748 = vpop.f32.mrb[0].mxu0
        %2749 = vdwg.mxu0
        %v2751 = vsel %vm827, %v2589, 0
        %v2754 = vsel %vm827, %v2668, 0
        %2756 = vmatprep.subr.mxu0 0.0
        %2757 = vmatpush1.xpose.msra.mxu0 %v2754
        %2758 = vmatprep.subr.mxu0 0.0
        %2759 = vmatpush1.xpose.msra.mxu0 0.0
        %2760 = vmatprep.subr.mxu0 0.0
        %2761 = vmatpush1.xpose.msra.mxu0 0.0
        %2762 = vmatprep.subr.mxu0 0.0
        %2763 = vmatpush1.xpose.msra.mxu0 0.0
        %2764 = vmatprep.subr.mxu0 0.0
        %2765 = vmatpush1.xpose.msra.mxu0 0.0
        %2766 = vmatprep.subr.mxu0 0.0
        %2767 = vmatpush1.xpose.msra.mxu0 0.0
        %2768 = vmatprep.subr.mxu0 0.0
        %2769 = vmatpush1.xpose.msra.mxu0 0.0
        %2770 = vmatprep.subr.mxu0 0.0
        %2771 = vmatpush1.xpose.msra.mxu0 0.0
        %2772 = vmatprep.subr.mxu0 0.0
        %2773 = vmatpush1.xpose.msra.mxu0 0.0
        %2774 = vmatprep.subr.mxu0 0.0
        %2775 = vmatpush1.xpose.msra.mxu0 0.0
        %2776 = vmatprep.subr.mxu0 0.0
        %2777 = vmatpush1.xpose.msra.mxu0 0.0
        %2778 = vmatprep.subr.mxu0 0.0
        %2779 = vmatpush1.xpose.msra.mxu0 0.0
        %2780 = vmatprep.subr.mxu0 0.0
        %2781 = vmatpush1.xpose.msra.mxu0 0.0
        %2782 = vmatprep.subr.mxu0 0.0
        %2783 = vmatpush1.xpose.msra.mxu0 0.0
        %2784 = vmatprep.subr.mxu0 0.0
        %2785 = vmatpush1.xpose.msra.mxu0 0.0
        %2786 = vmatprep.subr.mxu0 0.0
        %2787 = vmatpush1.xpose.msra.mxu0 0.0
        %2788 = vmatprep.subr.mxu0 0.0
        %2789 = vmatpush1.xpose.msra.mxu0 0.0
        %2790 = vmatprep.subr.mxu0 0.0
        %2791 = vmatpush1.xpose.msra.mxu0 0.0
        %2792 = vmatprep.subr.mxu0 0.0
        %2793 = vmatpush1.xpose.msra.mxu0 0.0
        %2794 = vmatprep.subr.mxu0 0.0
        %2795 = vmatpush1.xpose.msra.mxu0 0.0
        %2796 = vmatprep.subr.mxu0 0.0
        %2797 = vmatpush1.xpose.msra.mxu0 0.0
        %2798 = vmatprep.subr.mxu0 0.0
        %2799 = vmatpush1.xpose.msra.mxu0 0.0
        %2800 = vmatprep.subr.mxu0 0.0
        %2801 = vmatpush1.xpose.msra.mxu0 0.0
        %2802 = vmatprep.subr.mxu0 0.0
        %2803 = vmatpush1.xpose.msra.mxu0 0.0
        %2804 = vmatprep.subr.mxu0 0.0
        %2805 = vmatpush1.xpose.msra.mxu0 0.0
        %2806 = vmatprep.subr.mxu0 0.0
        %2807 = vmatpush1.xpose.msra.mxu0 0.0
        %2808 = vmatprep.subr.mxu0 0.0
        %2809 = vmatpush1.xpose.msra.mxu0 0.0
        %2810 = vmatprep.subr.mxu0 0.0
        %2811 = vmatpush1.xpose.msra.mxu0 0.0
        %2812 = vmatprep.subr.mxu0 0.0
        %2813 = vmatpush1.xpose.msra.mxu0 0.0
        %2814 = vmatprep.subr.mxu0 0.0
        %2815 = vmatpush1.xpose.msra.mxu0 0.0
        %2816 = vmatprep.subr.mxu0 0.0
        %2817 = vmatpush1.xpose.msra.mxu0 0.0
        %2818 = vmatprep.subr.mxu0 0.0
        %2819 = vmatpush1.xpose.msra.mxu0 0.0
        %2820 = vmatprep.mubr.f32.mxu0 0.0
        %2821 = vmatmul.mubr.f32.gmra.mrb[0].mxu0 %v2751
        %v2822 = vpop.f32.mrb[0].mxu0
        %v2823 = vadd.f32 0.0, %v2822
        %v2824 = vpop.f32.mrb[0].mxu0
        %2825 = vdwg.mxu0
        %v2826 = vmul.f32 %v2823, 0.35355338
        %v2827 = vsel %vm827, %v2826, -inf
        %2828 = vmax.xlane.f32.xlu0 %v2827
        %v2829 = vpop.xlane.xlu0 %2828
        %v2830 = vsub.f32 %v2826, %v2829
        %v2831 = vmul.f32 %v2830, 1.442695
        %v2832 = vpow.pop %v2831
        %v2833 = vsel %vm827, %v2832, 0.0
        %2834 = vadd.xlane.f32.xlu0 %v2833
        %v2835 = vpop.xlane.xlu0 %2834
        %v2836 = vrcp.pop %v2835
        %v2837 = vmul.f32 %v2832, %v2836
        %v2839 = vsel %vm827, %v2837, 0
        %2841 = vmatprep.subr.mxu0 0.0
        %2842 = vmatpush1.msra.mxu0 %v2747
        %2843 = vmatprep.subr.mxu0 0.0
        %2844 = vmatpush1.msra.mxu0 0.0
        %2845 = vmatprep.subr.mxu0 0.0
        %2846 = vmatpush1.msra.mxu0 0.0
        %2847 = vmatprep.subr.mxu0 0.0
        %2848 = vmatpush1.msra.mxu0 0.0
        %2849 = vmatprep.subr.mxu0 0.0
        %2850 = vmatpush1.msra.mxu0 0.0
        %2851 = vmatprep.subr.mxu0 0.0
        %2852 = vmatpush1.msra.mxu0 0.0
        %2853 = vmatprep.subr.mxu0 0.0
        %2854 = vmatpush1.msra.mxu0 0.0
        %2855 = vmatprep.subr.mxu0 0.0
        %2856 = vmatpush1.msra.mxu0 0.0
        %2857 = vmatprep.subr.mxu0 0.0
        %2858 = vmatpush1.msra.mxu0 0.0
        %2859 = vmatprep.subr.mxu0 0.0
        %2860 = vmatpush1.msra.mxu0 0.0
        %2861 = vmatprep.subr.mxu0 0.0
        %2862 = vmatpush1.msra.mxu0 0.0
        %2863 = vmatprep.subr.mxu0 0.0
        %2864 = vmatpush1.msra.mxu0 0.0
        %2865 = vmatprep.subr.mxu0 0.0
        %2866 = vmatpush1.msra.mxu0 0.0
        %2867 = vmatprep.subr.mxu0 0.0
        %2868 = vmatpush1.msra.mxu0 0.0
        %2869 = vmatprep.subr.mxu0 0.0
        %2870 = vmatpush1.msra.mxu0 0.0
        %2871 = vmatprep.subr.mxu0 0.0
        %2872 = vmatpush1.msra.mxu0 0.0
        %2873 = vmatprep.subr.mxu0 0.0
        %2874 = vmatpush1.msra.mxu0 0.0
        %2875 = vmatprep.subr.mxu0 0.0
        %2876 = vmatpush1.msra.mxu0 0.0
        %2877 = vmatprep.subr.mxu0 0.0
        %2878 = vmatpush1.msra.mxu0 0.0
        %2879 = vmatprep.subr.mxu0 0.0
        %2880 = vmatpush1.msra.mxu0 0.0
        %2881 = vmatprep.subr.mxu0 0.0
        %2882 = vmatpush1.msra.mxu0 0.0
        %2883 = vmatprep.subr.mxu0 0.0
        %2884 = vmatpush1.msra.mxu0 0.0
        %2885 = vmatprep.subr.mxu0 0.0
        %2886 = vmatpush1.msra.mxu0 0.0
        %2887 = vmatprep.subr.mxu0 0.0
        %2888 = vmatpush1.msra.mxu0 0.0
        %2889 = vmatprep.subr.mxu0 0.0
        %2890 = vmatpush1.msra.mxu0 0.0
        %2891 = vmatprep.subr.mxu0 0.0
        %2892 = vmatpush1.msra.mxu0 0.0
        %2893 = vmatprep.subr.mxu0 0.0
        %2894 = vmatpush1.msra.mxu0 0.0
        %2895 = vmatprep.subr.mxu0 0.0
        %2896 = vmatpush1.msra.mxu0 0.0
        %2897 = vmatprep.subr.mxu0 0.0
        %2898 = vmatpush1.msra.mxu0 0.0
        %2899 = vmatprep.subr.mxu0 0.0
        %2900 = vmatpush1.msra.mxu0 0.0
        %2901 = vmatprep.subr.mxu0 0.0
        %2902 = vmatpush1.msra.mxu0 0.0
        %2903 = vmatprep.subr.mxu0 0.0
        %2904 = vmatpush1.msra.mxu0 0.0
        %2905 = vmatprep.mubr.f32.mxu0 0.0
        %2906 = vmatmul.mubr.f32.gmra.mrb[0].mxu0 %v2839
        %v2907 = vpop.f32.mrb[0].mxu0
        %v2908 = vadd.f32 0.0, %v2907
        %v2909 = vpop.f32.mrb[0].mxu0
        %2910 = vdwg.mxu0
        %s2911 = scalar_lea.vmem %s6, 20
        %v2912 = vld [vmem:[%s2911] sm:$0x7]
        %s2913 = scalar_lea.vmem %s3, 160
        %v2914 = vld [vmem:[%s2913] sm:$0xff]
        %v2915 = vld [vmem:[%s2913 + $0x8] sm:$0xff]
        %v2916 = vld [vmem:[%s2913 + $0x10] sm:$0xff]
        %v2917 = vld [vmem:[%s2913 + $0x18] sm:$0xff]
        %v2918 = vlaneseq
        %v2919 = vshrl.u32 %v2918, 7
        %v2920 = vsub.s32 0, %v2919
        %v2921 = vrot.slane %v2912, %v2920
        %2922 = vmatprep.subr.mxu0 0.0
        %2923 = vmatpush1.msra.mxu0 %v2914
        %2924 = vmatprep.subr.mxu0 0.0
        %2925 = vmatpush1.msra.mxu0 %v2915
        %2926 = vmatprep.subr.mxu0 0.0
        %2927 = vmatpush1.msra.mxu0 %v2916
        %2928 = vmatprep.subr.mxu0 0.0
        %2929 = vmatpush1.msra.mxu0 %v2917
        %2930 = vmatprep.subr.mxu0 0.0
        %2931 = vmatpush1.msra.mxu0 0.0
        %2932 = vmatprep.subr.mxu0 0.0
        %2933 = vmatpush1.msra.mxu0 0.0
        %2934 = vmatprep.subr.mxu0 0.0
        %2935 = vmatpush1.msra.mxu0 0.0
        %2936 = vmatprep.subr.mxu0 0.0
        %2937 = vmatpush1.msra.mxu0 0.0
        %2938 = vmatprep.subr.mxu0 0.0
        %2939 = vmatpush1.msra.mxu0 0.0
        %2940 = vmatprep.subr.mxu0 0.0
        %2941 = vmatpush1.msra.mxu0 0.0
        %2942 = vmatprep.subr.mxu0 0.0
        %2943 = vmatpush1.msra.mxu0 0.0
        %2944 = vmatprep.subr.mxu0 0.0
        %2945 = vmatpush1.msra.mxu0 0.0
        %2946 = vmatprep.subr.mxu0 0.0
        %2947 = vmatpush1.msra.mxu0 0.0
        %2948 = vmatprep.subr.mxu0 0.0
        %2949 = vmatpush1.msra.mxu0 0.0
        %2950 = vmatprep.subr.mxu0 0.0
        %2951 = vmatpush1.msra.mxu0 0.0
        %2952 = vmatprep.subr.mxu0 0.0
        %2953 = vmatpush1.msra.mxu0 0.0
        %2954 = vmatprep.subr.mxu0 0.0
        %2955 = vmatpush1.msra.mxu0 0.0
        %2956 = vmatprep.subr.mxu0 0.0
        %2957 = vmatpush1.msra.mxu0 0.0
        %2958 = vmatprep.subr.mxu0 0.0
        %2959 = vmatpush1.msra.mxu0 0.0
        %2960 = vmatprep.subr.mxu0 0.0
        %2961 = vmatpush1.msra.mxu0 0.0
        %2962 = vmatprep.subr.mxu0 0.0
        %2963 = vmatpush1.msra.mxu0 0.0
        %2964 = vmatprep.subr.mxu0 0.0
        %2965 = vmatpush1.msra.mxu0 0.0
        %2966 = vmatprep.subr.mxu0 0.0
        %2967 = vmatpush1.msra.mxu0 0.0
        %2968 = vmatprep.subr.mxu0 0.0
        %2969 = vmatpush1.msra.mxu0 0.0
        %2970 = vmatprep.subr.mxu0 0.0
        %2971 = vmatpush1.msra.mxu0 0.0
        %2972 = vmatprep.subr.mxu0 0.0
        %2973 = vmatpush1.msra.mxu0 0.0
        %2974 = vmatprep.subr.mxu0 0.0
        %2975 = vmatpush1.msra.mxu0 0.0
        %2976 = vmatprep.subr.mxu0 0.0
        %2977 = vmatpush1.msra.mxu0 0.0
        %2978 = vmatprep.subr.mxu0 0.0
        %2979 = vmatpush1.msra.mxu0 0.0
        %2980 = vmatprep.subr.mxu0 0.0
        %2981 = vmatpush1.msra.mxu0 0.0
        %2982 = vmatprep.subr.mxu0 0.0
        %2983 = vmatpush1.msra.mxu0 0.0
        %2984 = vmatprep.subr.mxu0 0.0
        %2985 = vmatpush1.msra.mxu0 0.0
        %2986 = vmatprep.mubr.f32.mxu0 0.0
        %2987 = vmatmul.mubr.f32.gmra.mrb[0].mxu0 %v2520
        %v2988 = vpop.f32.mrb[0].mxu0
        %v2989 = vadd.f32 %v2921, %v2988
        %v2990 = vpop.f32.mrb[0].mxu0
        %2991 = vdwg.mxu0
        %s2992 = scalar_lea.vmem %s4, 160
        %v2993 = vld [vmem:[%s2992] sm:$0xff]
        %v2994 = vld [vmem:[%s2992 + $0x8] sm:$0xff]
        %v2995 = vld [vmem:[%s2992 + $0x10] sm:$0xff]
        %v2996 = vld [vmem:[%s2992 + $0x18] sm:$0xff]
        %v2997 = vlaneseq
        %v2998 = vshrl.u32 %v2997, 7
        %v2999 = vsub.s32 1, %v2998
        %v3000 = vrot.slane %v2912, %v2999
        %3001 = vmatprep.subr.mxu0 0.0
        %3002 = vmatpush1.msra.mxu0 %v2993
        %3003 = vmatprep.subr.mxu0 0.0
        %3004 = vmatpush1.msra.mxu0 %v2994
        %3005 = vmatprep.subr.mxu0 0.0
        %3006 = vmatpush1.msra.mxu0 %v2995
        %3007 = vmatprep.subr.mxu0 0.0
        %3008 = vmatpush1.msra.mxu0 %v2996
        %3009 = vmatprep.subr.mxu0 0.0
        %3010 = vmatpush1.msra.mxu0 0.0
        %3011 = vmatprep.subr.mxu0 0.0
        %3012 = vmatpush1.msra.mxu0 0.0
        %3013 = vmatprep.subr.mxu0 0.0
        %3014 = vmatpush1.msra.mxu0 0.0
        %3015 = vmatprep.subr.mxu0 0.0
        %3016 = vmatpush1.msra.mxu0 0.0
        %3017 = vmatprep.subr.mxu0 0.0
        %3018 = vmatpush1.msra.mxu0 0.0
        %3019 = vmatprep.subr.mxu0 0.0
        %3020 = vmatpush1.msra.mxu0 0.0
        %3021 = vmatprep.subr.mxu0 0.0
        %3022 = vmatpush1.msra.mxu0 0.0
        %3023 = vmatprep.subr.mxu0 0.0
        %3024 = vmatpush1.msra.mxu0 0.0
        %3025 = vmatprep.subr.mxu0 0.0
        %3026 = vmatpush1.msra.mxu0 0.0
        %3027 = vmatprep.subr.mxu0 0.0
        %3028 = vmatpush1.msra.mxu0 0.0
        %3029 = vmatprep.subr.mxu0 0.0
        %3030 = vmatpush1.msra.mxu0 0.0
        %3031 = vmatprep.subr.mxu0 0.0
        %3032 = vmatpush1.msra.mxu0 0.0
        %3033 = vmatprep.subr.mxu0 0.0
        %3034 = vmatpush1.msra.mxu0 0.0
        %3035 = vmatprep.subr.mxu0 0.0
        %3036 = vmatpush1.msra.mxu0 0.0
        %3037 = vmatprep.subr.mxu0 0.0
        %3038 = vmatpush1.msra.mxu0 0.0
        %3039 = vmatprep.subr.mxu0 0.0
        %3040 = vmatpush1.msra.mxu0 0.0
        %3041 = vmatprep.subr.mxu0 0.0
        %3042 = vmatpush1.msra.mxu0 0.0
        %3043 = vmatprep.subr.mxu0 0.0
        %3044 = vmatpush1.msra.mxu0 0.0
        %3045 = vmatprep.subr.mxu0 0.0
        %3046 = vmatpush1.msra.mxu0 0.0
        %3047 = vmatprep.subr.mxu0 0.0
        %3048 = vmatpush1.msra.mxu0 0.0
        %3049 = vmatprep.subr.mxu0 0.0
        %3050 = vmatpush1.msra.mxu0 0.0
        %3051 = vmatprep.subr.mxu0 0.0
        %3052 = vmatpush1.msra.mxu0 0.0
        %3053 = vmatprep.subr.mxu0 0.0
        %3054 = vmatpush1.msra.mxu0 0.0
        %3055 = vmatprep.subr.mxu0 0.0
        %3056 = vmatpush1.msra.mxu0 0.0
        %3057 = vmatprep.subr.mxu0 0.0
        %3058 = vmatpush1.msra.mxu0 0.0
        %3059 = vmatprep.subr.mxu0 0.0
        %3060 = vmatpush1.msra.mxu0 0.0
        %3061 = vmatprep.subr.mxu0 0.0
        %3062 = vmatpush1.msra.mxu0 0.0
        %3063 = vmatprep.subr.mxu0 0.0
        %3064 = vmatpush1.msra.mxu0 0.0
        %3065 = vmatprep.mubr.f32.mxu0 0.0
        %3066 = vmatmul.mubr.f32.gmra.mrb[0].mxu0 %v2520
        %v3067 = vpop.f32.mrb[0].mxu0
        %v3068 = vadd.f32 %v3000, %v3067
        %v3069 = vpop.f32.mrb[0].mxu0
        %3070 = vdwg.mxu0
        %s3071 = scalar_lea.vmem %s5, 160
        %v3072 = vld [vmem:[%s3071] sm:$0xff]
        %v3073 = vld [vmem:[%s3071 + $0x8] sm:$0xff]
        %v3074 = vld [vmem:[%s3071 + $0x10] sm:$0xff]
        %v3075 = vld [vmem:[%s3071 + $0x18] sm:$0xff]
        %v3076 = vlaneseq
        %v3077 = vshrl.u32 %v3076, 7
        %v3078 = vsub.s32 2, %v3077
        %v3079 = vrot.slane %v2912, %v3078
        %3080 = vmatprep.subr.mxu0 0.0
        %3081 = vmatpush1.msra.mxu0 %v3072
        %3082 = vmatprep.subr.mxu0 0.0
        %3083 = vmatpush1.msra.mxu0 %v3073
        %3084 = vmatprep.subr.mxu0 0.0
        %3085 = vmatpush1.msra.mxu0 %v3074
        %3086 = vmatprep.subr.mxu0 0.0
        %3087 = vmatpush1.msra.mxu0 %v3075
        %3088 = vmatprep.subr.mxu0 0.0
        %3089 = vmatpush1.msra.mxu0 0.0
        %3090 = vmatprep.subr.mxu0 0.0
        %3091 = vmatpush1.msra.mxu0 0.0
        %3092 = vmatprep.subr.mxu0 0.0
        %3093 = vmatpush1.msra.mxu0 0.0
        %3094 = vmatprep.subr.mxu0 0.0
        %3095 = vmatpush1.msra.mxu0 0.0
        %3096 = vmatprep.subr.mxu0 0.0
        %3097 = vmatpush1.msra.mxu0 0.0
        %3098 = vmatprep.subr.mxu0 0.0
        %3099 = vmatpush1.msra.mxu0 0.0
        %3100 = vmatprep.subr.mxu0 0.0
        %3101 = vmatpush1.msra.mxu0 0.0
        %3102 = vmatprep.subr.mxu0 0.0
        %3103 = vmatpush1.msra.mxu0 0.0
        %3104 = vmatprep.subr.mxu0 0.0
        %3105 = vmatpush1.msra.mxu0 0.0
        %3106 = vmatprep.subr.mxu0 0.0
        %3107 = vmatpush1.msra.mxu0 0.0
        %3108 = vmatprep.subr.mxu0 0.0
        %3109 = vmatpush1.msra.mxu0 0.0
        %3110 = vmatprep.subr.mxu0 0.0
        %3111 = vmatpush1.msra.mxu0 0.0
        %3112 = vmatprep.subr.mxu0 0.0
        %3113 = vmatpush1.msra.mxu0 0.0
        %3114 = vmatprep.subr.mxu0 0.0
        %3115 = vmatpush1.msra.mxu0 0.0
        %3116 = vmatprep.subr.mxu0 0.0
        %3117 = vmatpush1.msra.mxu0 0.0
        %3118 = vmatprep.subr.mxu0 0.0
        %3119 = vmatpush1.msra.mxu0 0.0
        %3120 = vmatprep.subr.mxu0 0.0
        %3121 = vmatpush1.msra.mxu0 0.0
        %3122 = vmatprep.subr.mxu0 0.0
        %3123 = vmatpush1.msra.mxu0 0.0
        %3124 = vmatprep.subr.mxu0 0.0
        %3125 = vmatpush1.msra.mxu0 0.0
        %3126 = vmatprep.subr.mxu0 0.0
        %3127 = vmatpush1.msra.mxu0 0.0
        %3128 = vmatprep.subr.mxu0 0.0
        %3129 = vmatpush1.msra.mxu0 0.0
        %3130 = vmatprep.subr.mxu0 0.0
        %3131 = vmatpush1.msra.mxu0 0.0
        %3132 = vmatprep.subr.mxu0 0.0
        %3133 = vmatpush1.msra.mxu0 0.0
        %3134 = vmatprep.subr.mxu0 0.0
        %3135 = vmatpush1.msra.mxu0 0.0
        %3136 = vmatprep.subr.mxu0 0.0
        %3137 = vmatpush1.msra.mxu0 0.0
        %3138 = vmatprep.subr.mxu0 0.0
        %3139 = vmatpush1.msra.mxu0 0.0
        %3140 = vmatprep.subr.mxu0 0.0
        %3141 = vmatpush1.msra.mxu0 0.0
        %3142 = vmatprep.subr.mxu0 0.0
        %3143 = vmatpush1.msra.mxu0 0.0
        %3144 = vmatprep.mubr.f32.mxu0 0.0
        %3145 = vmatmul.mubr.f32.gmra.mrb[0].mxu0 %v2520
        %v3146 = vpop.f32.mrb[0].mxu0
        %v3147 = vadd.f32 %v3079, %v3146
        %v3148 = vpop.f32.mrb[0].mxu0
        %3149 = vdwg.mxu0
        %v3151 = vsel %vm827, %v2989, 0
        %v3154 = vsel %vm827, %v3068, 0
        %3156 = vmatprep.subr.mxu0 0.0
        %3157 = vmatpush1.xpose.msra.mxu0 %v3154
        %3158 = vmatprep.subr.mxu0 0.0
        %3159 = vmatpush1.xpose.msra.mxu0 0.0
        %3160 = vmatprep.subr.mxu0 0.0
        %3161 = vmatpush1.xpose.msra.mxu0 0.0
        %3162 = vmatprep.subr.mxu0 0.0
        %3163 = vmatpush1.xpose.msra.mxu0 0.0
        %3164 = vmatprep.subr.mxu0 0.0
        %3165 = vmatpush1.xpose.msra.mxu0 0.0
        %3166 = vmatprep.subr.mxu0 0.0
        %3167 = vmatpush1.xpose.msra.mxu0 0.0
        %3168 = vmatprep.subr.mxu0 0.0
        %3169 = vmatpush1.xpose.msra.mxu0 0.0
        %3170 = vmatprep.subr.mxu0 0.0
        %3171 = vmatpush1.xpose.msra.mxu0 0.0
        %3172 = vmatprep.subr.mxu0 0.0
        %3173 = vmatpush1.xpose.msra.mxu0 0.0
        %3174 = vmatprep.subr.mxu0 0.0
        %3175 = vmatpush1.xpose.msra.mxu0 0.0
        %3176 = vmatprep.subr.mxu0 0.0
        %3177 = vmatpush1.xpose.msra.mxu0 0.0
        %3178 = vmatprep.subr.mxu0 0.0
        %3179 = vmatpush1.xpose.msra.mxu0 0.0
        %3180 = vmatprep.subr.mxu0 0.0
        %3181 = vmatpush1.xpose.msra.mxu0 0.0
        %3182 = vmatprep.subr.mxu0 0.0
        %3183 = vmatpush1.xpose.msra.mxu0 0.0
        %3184 = vmatprep.subr.mxu0 0.0
        %3185 = vmatpush1.xpose.msra.mxu0 0.0
        %3186 = vmatprep.subr.mxu0 0.0
        %3187 = vmatpush1.xpose.msra.mxu0 0.0
        %3188 = vmatprep.subr.mxu0 0.0
        %3189 = vmatpush1.xpose.msra.mxu0 0.0
        %3190 = vmatprep.subr.mxu0 0.0
        %3191 = vmatpush1.xpose.msra.mxu0 0.0
        %3192 = vmatprep.subr.mxu0 0.0
        %3193 = vmatpush1.xpose.msra.mxu0 0.0
        %3194 = vmatprep.subr.mxu0 0.0
        %3195 = vmatpush1.xpose.msra.mxu0 0.0
        %3196 = vmatprep.subr.mxu0 0.0
        %3197 = vmatpush1.xpose.msra.mxu0 0.0
        %3198 = vmatprep.subr.mxu0 0.0
        %3199 = vmatpush1.xpose.msra.mxu0 0.0
        %3200 = vmatprep.subr.mxu0 0.0
        %3201 = vmatpush1.xpose.msra.mxu0 0.0
        %3202 = vmatprep.subr.mxu0 0.0
        %3203 = vmatpush1.xpose.msra.mxu0 0.0
        %3204 = vmatprep.subr.mxu0 0.0
        %3205 = vmatpush1.xpose.msra.mxu0 0.0
        %3206 = vmatprep.subr.mxu0 0.0
        %3207 = vmatpush1.xpose.msra.mxu0 0.0
        %3208 = vmatprep.subr.mxu0 0.0
        %3209 = vmatpush1.xpose.msra.mxu0 0.0
        %3210 = vmatprep.subr.mxu0 0.0
        %3211 = vmatpush1.xpose.msra.mxu0 0.0
        %3212 = vmatprep.subr.mxu0 0.0
        %3213 = vmatpush1.xpose.msra.mxu0 0.0
        %3214 = vmatprep.subr.mxu0 0.0
        %3215 = vmatpush1.xpose.msra.mxu0 0.0
        %3216 = vmatprep.subr.mxu0 0.0
        %3217 = vmatpush1.xpose.msra.mxu0 0.0
        %3218 = vmatprep.subr.mxu0 0.0
        %3219 = vmatpush1.xpose.msra.mxu0 0.0
        %3220 = vmatprep.mubr.f32.mxu0 0.0
        %3221 = vmatmul.mubr.f32.gmra.mrb[0].mxu0 %v3151
        %v3222 = vpop.f32.mrb[0].mxu0
        %v3223 = vadd.f32 0.0, %v3222
        %v3224 = vpop.f32.mrb[0].mxu0
        %3225 = vdwg.mxu0
        %v3226 = vmul.f32 %v3223, 0.35355338
        %v3227 = vsel %vm827, %v3226, -inf
        %3228 = vmax.xlane.f32.xlu0 %v3227
        %v3229 = vpop.xlane.xlu0 %3228
        %v3230 = vsub.f32 %v3226, %v3229
        %v3231 = vmul.f32 %v3230, 1.442695
        %v3232 = vpow.pop %v3231
        %v3233 = vsel %vm827, %v3232, 0.0
        %3234 = vadd.xlane.f32.xlu0 %v3233
        %v3235 = vpop.xlane.xlu0 %3234
        %v3236 = vrcp.pop %v3235
        %v3237 = vmul.f32 %v3232, %v3236
        %v3239 = vsel %vm827, %v3237, 0
        %3241 = vmatprep.subr.mxu0 0.0
        %3242 = vmatpush1.msra.mxu0 %v3147
        %3243 = vmatprep.subr.mxu0 0.0
        %3244 = vmatpush1.msra.mxu0 0.0
        %3245 = vmatprep.subr.mxu0 0.0
        %3246 = vmatpush1.msra.mxu0 0.0
        %3247 = vmatprep.subr.mxu0 0.0
        %3248 = vmatpush1.msra.mxu0 0.0
        %3249 = vmatprep.subr.mxu0 0.0
        %3250 = vmatpush1.msra.mxu0 0.0
        %3251 = vmatprep.subr.mxu0 0.0
        %3252 = vmatpush1.msra.mxu0 0.0
        %3253 = vmatprep.subr.mxu0 0.0
        %3254 = vmatpush1.msra.mxu0 0.0
        %3255 = vmatprep.subr.mxu0 0.0
        %3256 = vmatpush1.msra.mxu0 0.0
        %3257 = vmatprep.subr.mxu0 0.0
        %3258 = vmatpush1.msra.mxu0 0.0
        %3259 = vmatprep.subr.mxu0 0.0
        %3260 = vmatpush1.msra.mxu0 0.0
        %3261 = vmatprep.subr.mxu0 0.0
        %3262 = vmatpush1.msra.mxu0 0.0
        %3263 = vmatprep.subr.mxu0 0.0
        %3264 = vmatpush1.msra.mxu0 0.0
        %3265 = vmatprep.subr.mxu0 0.0
        %3266 = vmatpush1.msra.mxu0 0.0
        %3267 = vmatprep.subr.mxu0 0.0
        %3268 = vmatpush1.msra.mxu0 0.0
        %3269 = vmatprep.subr.mxu0 0.0
        %3270 = vmatpush1.msra.mxu0 0.0
        %3271 = vmatprep.subr.mxu0 0.0
        %3272 = vmatpush1.msra.mxu0 0.0
        %3273 = vmatprep.subr.mxu0 0.0
        %3274 = vmatpush1.msra.mxu0 0.0
        %3275 = vmatprep.subr.mxu0 0.0
        %3276 = vmatpush1.msra.mxu0 0.0
        %3277 = vmatprep.subr.mxu0 0.0
        %3278 = vmatpush1.msra.mxu0 0.0
        %3279 = vmatprep.subr.mxu0 0.0
        %3280 = vmatpush1.msra.mxu0 0.0
        %3281 = vmatprep.subr.mxu0 0.0
        %3282 = vmatpush1.msra.mxu0 0.0
        %3283 = vmatprep.subr.mxu0 0.0
        %3284 = vmatpush1.msra.mxu0 0.0
        %3285 = vmatprep.subr.mxu0 0.0
        %3286 = vmatpush1.msra.mxu0 0.0
        %3287 = vmatprep.subr.mxu0 0.0
        %3288 = vmatpush1.msra.mxu0 0.0
        %3289 = vmatprep.subr.mxu0 0.0
        %3290 = vmatpush1.msra.mxu0 0.0
        %3291 = vmatprep.subr.mxu0 0.0
        %3292 = vmatpush1.msra.mxu0 0.0
        %3293 = vmatprep.subr.mxu0 0.0
        %3294 = vmatpush1.msra.mxu0 0.0
        %3295 = vmatprep.subr.mxu0 0.0
        %3296 = vmatpush1.msra.mxu0 0.0
        %3297 = vmatprep.subr.mxu0 0.0
        %3298 = vmatpush1.msra.mxu0 0.0
        %3299 = vmatprep.subr.mxu0 0.0
        %3300 = vmatpush1.msra.mxu0 0.0
        %3301 = vmatprep.subr.mxu0 0.0
        %3302 = vmatpush1.msra.mxu0 0.0
        %3303 = vmatprep.subr.mxu0 0.0
        %3304 = vmatpush1.msra.mxu0 0.0
        %3305 = vmatprep.mubr.f32.mxu0 0.0
        %3306 = vmatmul.mubr.f32.gmra.mrb[0].mxu0 %v3239
        %v3307 = vpop.f32.mrb[0].mxu0
        %v3308 = vadd.f32 0.0, %v3307
        %v3309 = vpop.f32.mrb[0].mxu0
        %3310 = vdwg.mxu0
        %s3311 = scalar_lea.vmem %s6, 24
        %v3312 = vld [vmem:[%s3311] sm:$0x7]
        %s3313 = scalar_lea.vmem %s3, 192
        %v3314 = vld [vmem:[%s3313] sm:$0xff]
        %v3315 = vld [vmem:[%s3313 + $0x8] sm:$0xff]
        %v3316 = vld [vmem:[%s3313 + $0x10] sm:$0xff]
        %v3317 = vld [vmem:[%s3313 + $0x18] sm:$0xff]
        %v3318 = vlaneseq
        %v3319 = vshrl.u32 %v3318, 7
        %v3320 = vsub.s32 0, %v3319
        %v3321 = vrot.slane %v3312, %v3320
        %3322 = vmatprep.subr.mxu0 0.0
        %3323 = vmatpush1.msra.mxu0 %v3314
        %3324 = vmatprep.subr.mxu0 0.0
        %3325 = vmatpush1.msra.mxu0 %v3315
        %3326 = vmatprep.subr.mxu0 0.0
        %3327 = vmatpush1.msra.mxu0 %v3316
        %3328 = vmatprep.subr.mxu0 0.0
        %3329 = vmatpush1.msra.mxu0 %v3317
        %3330 = vmatprep.subr.mxu0 0.0
        %3331 = vmatpush1.msra.mxu0 0.0
        %3332 = vmatprep.subr.mxu0 0.0
        %3333 = vmatpush1.msra.mxu0 0.0
        %3334 = vmatprep.subr.mxu0 0.0
        %3335 = vmatpush1.msra.mxu0 0.0
        %3336 = vmatprep.subr.mxu0 0.0
        %3337 = vmatpush1.msra.mxu0 0.0
        %3338 = vmatprep.subr.mxu0 0.0
        %3339 = vmatpush1.msra.mxu0 0.0
        %3340 = vmatprep.subr.mxu0 0.0
        %3341 = vmatpush1.msra.mxu0 0.0
        %3342 = vmatprep.subr.mxu0 0.0
        %3343 = vmatpush1.msra.mxu0 0.0
        %3344 = vmatprep.subr.mxu0 0.0
        %3345 = vmatpush1.msra.mxu0 0.0
        %3346 = vmatprep.subr.mxu0 0.0
        %3347 = vmatpush1.msra.mxu0 0.0
        %3348 = vmatprep.subr.mxu0 0.0
        %3349 = vmatpush1.msra.mxu0 0.0
        %3350 = vmatprep.subr.mxu0 0.0
        %3351 = vmatpush1.msra.mxu0 0.0
        %3352 = vmatprep.subr.mxu0 0.0
        %3353 = vmatpush1.msra.mxu0 0.0
        %3354 = vmatprep.subr.mxu0 0.0
        %3355 = vmatpush1.msra.mxu0 0.0
        %3356 = vmatprep.subr.mxu0 0.0
        %3357 = vmatpush1.msra.mxu0 0.0
        %3358 = vmatprep.subr.mxu0 0.0
        %3359 = vmatpush1.msra.mxu0 0.0
        %3360 = vmatprep.subr.mxu0 0.0
        %3361 = vmatpush1.msra.mxu0 0.0
        %3362 = vmatprep.subr.mxu0 0.0
        %3363 = vmatpush1.msra.mxu0 0.0
        %3364 = vmatprep.subr.mxu0 0.0
        %3365 = vmatpush1.msra.mxu0 0.0
        %3366 = vmatprep.subr.mxu0 0.0
        %3367 = vmatpush1.msra.mxu0 0.0
        %3368 = vmatprep.subr.mxu0 0.0
        %3369 = vmatpush1.msra.mxu0 0.0
        %3370 = vmatprep.subr.mxu0 0.0
        %3371 = vmatpush1.msra.mxu0 0.0
        %3372 = vmatprep.subr.mxu0 0.0
        %3373 = vmatpush1.msra.mxu0 0.0
        %3374 = vmatprep.subr.mxu0 0.0
        %3375 = vmatpush1.msra.mxu0 0.0
        %3376 = vmatprep.subr.mxu0 0.0
        %3377 = vmatpush1.msra.mxu0 0.0
        %3378 = vmatprep.subr.mxu0 0.0
        %3379 = vmatpush1.msra.mxu0 0.0
        %3380 = vmatprep.subr.mxu0 0.0
        %3381 = vmatpush1.msra.mxu0 0.0
        %3382 = vmatprep.subr.mxu0 0.0
        %3383 = vmatpush1.msra.mxu0 0.0
        %3384 = vmatprep.subr.mxu0 0.0
        %3385 = vmatpush1.msra.mxu0 0.0
        %3386 = vmatprep.mubr.f32.mxu0 0.0
        %3387 = vmatmul.mubr.f32.gmra.mrb[0].mxu0 %v2520
        %v3388 = vpop.f32.mrb[0].mxu0
        %v3389 = vadd.f32 %v3321, %v3388
        %v3390 = vpop.f32.mrb[0].mxu0
        %3391 = vdwg.mxu0
        %s3392 = scalar_lea.vmem %s4, 192
        %v3393 = vld [vmem:[%s3392] sm:$0xff]
        %v3394 = vld [vmem:[%s3392 + $0x8] sm:$0xff]
        %v3395 = vld [vmem:[%s3392 + $0x10] sm:$0xff]
        %v3396 = vld [vmem:[%s3392 + $0x18] sm:$0xff]
        %v3397 = vlaneseq
        %v3398 = vshrl.u32 %v3397, 7
        %v3399 = vsub.s32 1, %v3398
        %v3400 = vrot.slane %v3312, %v3399
        %3401 = vmatprep.subr.mxu0 0.0
        %3402 = vmatpush1.msra.mxu0 %v3393
        %3403 = vmatprep.subr.mxu0 0.0
        %3404 = vmatpush1.msra.mxu0 %v3394
        %3405 = vmatprep.subr.mxu0 0.0
        %3406 = vmatpush1.msra.mxu0 %v3395
        %3407 = vmatprep.subr.mxu0 0.0
        %3408 = vmatpush1.msra.mxu0 %v3396
        %3409 = vmatprep.subr.mxu0 0.0
        %3410 = vmatpush1.msra.mxu0 0.0
        %3411 = vmatprep.subr.mxu0 0.0
        %3412 = vmatpush1.msra.mxu0 0.0
        %3413 = vmatprep.subr.mxu0 0.0
        %3414 = vmatpush1.msra.mxu0 0.0
        %3415 = vmatprep.subr.mxu0 0.0
        %3416 = vmatpush1.msra.mxu0 0.0
        %3417 = vmatprep.subr.mxu0 0.0
        %3418 = vmatpush1.msra.mxu0 0.0
        %3419 = vmatprep.subr.mxu0 0.0
        %3420 = vmatpush1.msra.mxu0 0.0
        %3421 = vmatprep.subr.mxu0 0.0
        %3422 = vmatpush1.msra.mxu0 0.0
        %3423 = vmatprep.subr.mxu0 0.0
        %3424 = vmatpush1.msra.mxu0 0.0
        %3425 = vmatprep.subr.mxu0 0.0
        %3426 = vmatpush1.msra.mxu0 0.0
        %3427 = vmatprep.subr.mxu0 0.0
        %3428 = vmatpush1.msra.mxu0 0.0
        %3429 = vmatprep.subr.mxu0 0.0
        %3430 = vmatpush1.msra.mxu0 0.0
        %3431 = vmatprep.subr.mxu0 0.0
        %3432 = vmatpush1.msra.mxu0 0.0
        %3433 = vmatprep.subr.mxu0 0.0
        %3434 = vmatpush1.msra.mxu0 0.0
        %3435 = vmatprep.subr.mxu0 0.0
        %3436 = vmatpush1.msra.mxu0 0.0
        %3437 = vmatprep.subr.mxu0 0.0
        %3438 = vmatpush1.msra.mxu0 0.0
        %3439 = vmatprep.subr.mxu0 0.0
        %3440 = vmatpush1.msra.mxu0 0.0
        %3441 = vmatprep.subr.mxu0 0.0
        %3442 = vmatpush1.msra.mxu0 0.0
        %3443 = vmatprep.subr.mxu0 0.0
        %3444 = vmatpush1.msra.mxu0 0.0
        %3445 = vmatprep.subr.mxu0 0.0
        %3446 = vmatpush1.msra.mxu0 0.0
        %3447 = vmatprep.subr.mxu0 0.0
        %3448 = vmatpush1.msra.mxu0 0.0
        %3449 = vmatprep.subr.mxu0 0.0
        %3450 = vmatpush1.msra.mxu0 0.0
        %3451 = vmatprep.subr.mxu0 0.0
        %3452 = vmatpush1.msra.mxu0 0.0
        %3453 = vmatprep.subr.mxu0 0.0
        %3454 = vmatpush1.msra.mxu0 0.0
        %3455 = vmatprep.subr.mxu0 0.0
        %3456 = vmatpush1.msra.mxu0 0.0
        %3457 = vmatprep.subr.mxu0 0.0
        %3458 = vmatpush1.msra.mxu0 0.0
        %3459 = vmatprep.subr.mxu0 0.0
        %3460 = vmatpush1.msra.mxu0 0.0
        %3461 = vmatprep.subr.mxu0 0.0
        %3462 = vmatpush1.msra.mxu0 0.0
        %3463 = vmatprep.subr.mxu0 0.0
        %3464 = vmatpush1.msra.mxu0 0.0
        %3465 = vmatprep.mubr.f32.mxu0 0.0
        %3466 = vmatmul.mubr.f32.gmra.mrb[0].mxu0 %v2520
        %v3467 = vpop.f32.mrb[0].mxu0
        %v3468 = vadd.f32 %v3400, %v3467
        %v3469 = vpop.f32.mrb[0].mxu0
        %3470 = vdwg.mxu0
        %s3471 = scalar_lea.vmem %s5, 192
        %v3472 = vld [vmem:[%s3471] sm:$0xff]
        %v3473 = vld [vmem:[%s3471 + $0x8] sm:$0xff]
        %v3474 = vld [vmem:[%s3471 + $0x10] sm:$0xff]
        %v3475 = vld [vmem:[%s3471 + $0x18] sm:$0xff]
        %v3476 = vlaneseq
        %v3477 = vshrl.u32 %v3476, 7
        %v3478 = vsub.s32 2, %v3477
        %v3479 = vrot.slane %v3312, %v3478
        %3480 = vmatprep.subr.mxu0 0.0
        %3481 = vmatpush1.msra.mxu0 %v3472
        %3482 = vmatprep.subr.mxu0 0.0
        %3483 = vmatpush1.msra.mxu0 %v3473
        %3484 = vmatprep.subr.mxu0 0.0
        %3485 = vmatpush1.msra.mxu0 %v3474
        %3486 = vmatprep.subr.mxu0 0.0
        %3487 = vmatpush1.msra.mxu0 %v3475
        %3488 = vmatprep.subr.mxu0 0.0
        %3489 = vmatpush1.msra.mxu0 0.0
        %3490 = vmatprep.subr.mxu0 0.0
        %3491 = vmatpush1.msra.mxu0 0.0
        %3492 = vmatprep.subr.mxu0 0.0
        %3493 = vmatpush1.msra.mxu0 0.0
        %3494 = vmatprep.subr.mxu0 0.0
        %3495 = vmatpush1.msra.mxu0 0.0
        %3496 = vmatprep.subr.mxu0 0.0
        %3497 = vmatpush1.msra.mxu0 0.0
        %3498 = vmatprep.subr.mxu0 0.0
        %3499 = vmatpush1.msra.mxu0 0.0
        %3500 = vmatprep.subr.mxu0 0.0
        %3501 = vmatpush1.msra.mxu0 0.0
        %3502 = vmatprep.subr.mxu0 0.0
        %3503 = vmatpush1.msra.mxu0 0.0
        %3504 = vmatprep.subr.mxu0 0.0
        %3505 = vmatpush1.msra.mxu0 0.0
        %3506 = vmatprep.subr.mxu0 0.0
        %3507 = vmatpush1.msra.mxu0 0.0
        %3508 = vmatprep.subr.mxu0 0.0
        %3509 = vmatpush1.msra.mxu0 0.0
        %3510 = vmatprep.subr.mxu0 0.0
        %3511 = vmatpush1.msra.mxu0 0.0
        %3512 = vmatprep.subr.mxu0 0.0
        %3513 = vmatpush1.msra.mxu0 0.0
        %3514 = vmatprep.subr.mxu0 0.0
        %3515 = vmatpush1.msra.mxu0 0.0
        %3516 = vmatprep.subr.mxu0 0.0
        %3517 = vmatpush1.msra.mxu0 0.0
        %3518 = vmatprep.subr.mxu0 0.0
        %3519 = vmatpush1.msra.mxu0 0.0
        %3520 = vmatprep.subr.mxu0 0.0
        %3521 = vmatpush1.msra.mxu0 0.0
        %3522 = vmatprep.subr.mxu0 0.0
        %3523 = vmatpush1.msra.mxu0 0.0
        %3524 = vmatprep.subr.mxu0 0.0
        %3525 = vmatpush1.msra.mxu0 0.0
        %3526 = vmatprep.subr.mxu0 0.0
        %3527 = vmatpush1.msra.mxu0 0.0
        %3528 = vmatprep.subr.mxu0 0.0
        %3529 = vmatpush1.msra.mxu0 0.0
        %3530 = vmatprep.subr.mxu0 0.0
        %3531 = vmatpush1.msra.mxu0 0.0
        %3532 = vmatprep.subr.mxu0 0.0
        %3533 = vmatpush1.msra.mxu0 0.0
        %3534 = vmatprep.subr.mxu0 0.0
        %3535 = vmatpush1.msra.mxu0 0.0
        %3536 = vmatprep.subr.mxu0 0.0
        %3537 = vmatpush1.msra.mxu0 0.0
        %3538 = vmatprep.subr.mxu0 0.0
        %3539 = vmatpush1.msra.mxu0 0.0
        %3540 = vmatprep.subr.mxu0 0.0
        %3541 = vmatpush1.msra.mxu0 0.0
        %3542 = vmatprep.subr.mxu0 0.0
        %3543 = vmatpush1.msra.mxu0 0.0
        %3544 = vmatprep.mubr.f32.mxu0 0.0
        %3545 = vmatmul.mubr.f32.gmra.mrb[0].mxu0 %v2520
        %v3546 = vpop.f32.mrb[0].mxu0
        %v3547 = vadd.f32 %v3479, %v3546
        %v3548 = vpop.f32.mrb[0].mxu0
        %3549 = vdwg.mxu0
        %v3551 = vsel %vm827, %v3389, 0
        %v3554 = vsel %vm827, %v3468, 0
        %3556 = vmatprep.subr.mxu0 0.0
        %3557 = vmatpush1.xpose.msra.mxu0 %v3554
        %3558 = vmatprep.subr.mxu0 0.0
        %3559 = vmatpush1.xpose.msra.mxu0 0.0
        %3560 = vmatprep.subr.mxu0 0.0
        %3561 = vmatpush1.xpose.msra.mxu0 0.0
        %3562 = vmatprep.subr.mxu0 0.0
        %3563 = vmatpush1.xpose.msra.mxu0 0.0
        %3564 = vmatprep.subr.mxu0 0.0
        %3565 = vmatpush1.xpose.msra.mxu0 0.0
        %3566 = vmatprep.subr.mxu0 0.0
        %3567 = vmatpush1.xpose.msra.mxu0 0.0
        %3568 = vmatprep.subr.mxu0 0.0
        %3569 = vmatpush1.xpose.msra.mxu0 0.0
        %3570 = vmatprep.subr.mxu0 0.0
        %3571 = vmatpush1.xpose.msra.mxu0 0.0
        %3572 = vmatprep.subr.mxu0 0.0
        %3573 = vmatpush1.xpose.msra.mxu0 0.0
        %3574 = vmatprep.subr.mxu0 0.0
        %3575 = vmatpush1.xpose.msra.mxu0 0.0
        %3576 = vmatprep.subr.mxu0 0.0
        %3577 = vmatpush1.xpose.msra.mxu0 0.0
        %3578 = vmatprep.subr.mxu0 0.0
        %3579 = vmatpush1.xpose.msra.mxu0 0.0
        %3580 = vmatprep.subr.mxu0 0.0
        %3581 = vmatpush1.xpose.msra.mxu0 0.0
        %3582 = vmatprep.subr.mxu0 0.0
        %3583 = vmatpush1.xpose.msra.mxu0 0.0
        %3584 = vmatprep.subr.mxu0 0.0
        %3585 = vmatpush1.xpose.msra.mxu0 0.0
        %3586 = vmatprep.subr.mxu0 0.0
        %3587 = vmatpush1.xpose.msra.mxu0 0.0
        %3588 = vmatprep.subr.mxu0 0.0
        %3589 = vmatpush1.xpose.msra.mxu0 0.0
        %3590 = vmatprep.subr.mxu0 0.0
        %3591 = vmatpush1.xpose.msra.mxu0 0.0
        %3592 = vmatprep.subr.mxu0 0.0
        %3593 = vmatpush1.xpose.msra.mxu0 0.0
        %3594 = vmatprep.subr.mxu0 0.0
        %3595 = vmatpush1.xpose.msra.mxu0 0.0
        %3596 = vmatprep.subr.mxu0 0.0
        %3597 = vmatpush1.xpose.msra.mxu0 0.0
        %3598 = vmatprep.subr.mxu0 0.0
        %3599 = vmatpush1.xpose.msra.mxu0 0.0
        %3600 = vmatprep.subr.mxu0 0.0
        %3601 = vmatpush1.xpose.msra.mxu0 0.0
        %3602 = vmatprep.subr.mxu0 0.0
        %3603 = vmatpush1.xpose.msra.mxu0 0.0
        %3604 = vmatprep.subr.mxu0 0.0
        %3605 = vmatpush1.xpose.msra.mxu0 0.0
        %3606 = vmatprep.subr.mxu0 0.0
        %3607 = vmatpush1.xpose.msra.mxu0 0.0
        %3608 = vmatprep.subr.mxu0 0.0
        %3609 = vmatpush1.xpose.msra.mxu0 0.0
        %3610 = vmatprep.subr.mxu0 0.0
        %3611 = vmatpush1.xpose.msra.mxu0 0.0
        %3612 = vmatprep.subr.mxu0 0.0
        %3613 = vmatpush1.xpose.msra.mxu0 0.0
        %3614 = vmatprep.subr.mxu0 0.0
        %3615 = vmatpush1.xpose.msra.mxu0 0.0
        %3616 = vmatprep.subr.mxu0 0.0
        %3617 = vmatpush1.xpose.msra.mxu0 0.0
        %3618 = vmatprep.subr.mxu0 0.0
        %3619 = vmatpush1.xpose.msra.mxu0 0.0
        %3620 = vmatprep.mubr.f32.mxu0 0.0
        %3621 = vmatmul.mubr.f32.gmra.mrb[0].mxu0 %v3551
        %v3622 = vpop.f32.mrb[0].mxu0
        %v3623 = vadd.f32 0.0, %v3622
        %v3624 = vpop.f32.mrb[0].mxu0
        %3625 = vdwg.mxu0
        %v3626 = vmul.f32 %v3623, 0.35355338
        %v3627 = vsel %vm827, %v3626, -inf
        %3628 = vmax.xlane.f32.xlu0 %v3627
        %v3629 = vpop.xlane.xlu0 %3628
        %v3630 = vsub.f32 %v3626, %v3629
        %v3631 = vmul.f32 %v3630, 1.442695
        %v3632 = vpow.pop %v3631
        %v3633 = vsel %vm827, %v3632, 0.0
        %3634 = vadd.xlane.f32.xlu0 %v3633
        %v3635 = vpop.xlane.xlu0 %3634
        %v3636 = vrcp.pop %v3635
        %v3637 = vmul.f32 %v3632, %v3636
        %v3639 = vsel %vm827, %v3637, 0
        %3641 = vmatprep.subr.mxu0 0.0
        %3642 = vmatpush1.msra.mxu0 %v3547
        %3643 = vmatprep.subr.mxu0 0.0
        %3644 = vmatpush1.msra.mxu0 0.0
        %3645 = vmatprep.subr.mxu0 0.0
        %3646 = vmatpush1.msra.mxu0 0.0
        %3647 = vmatprep.subr.mxu0 0.0
        %3648 = vmatpush1.msra.mxu0 0.0
        %3649 = vmatprep.subr.mxu0 0.0
        %3650 = vmatpush1.msra.mxu0 0.0
        %3651 = vmatprep.subr.mxu0 0.0
        %3652 = vmatpush1.msra.mxu0 0.0
        %3653 = vmatprep.subr.mxu0 0.0
        %3654 = vmatpush1.msra.mxu0 0.0
        %3655 = vmatprep.subr.mxu0 0.0
        %3656 = vmatpush1.msra.mxu0 0.0
        %3657 = vmatprep.subr.mxu0 0.0
        %3658 = vmatpush1.msra.mxu0 0.0
        %3659 = vmatprep.subr.mxu0 0.0
        %3660 = vmatpush1.msra.mxu0 0.0
        %3661 = vmatprep.subr.mxu0 0.0
        %3662 = vmatpush1.msra.mxu0 0.0
        %3663 = vmatprep.subr.mxu0 0.0
        %3664 = vmatpush1.msra.mxu0 0.0
        %3665 = vmatprep.subr.mxu0 0.0
        %3666 = vmatpush1.msra.mxu0 0.0
        %3667 = vmatprep.subr.mxu0 0.0
        %3668 = vmatpush1.msra.mxu0 0.0
        %3669 = vmatprep.subr.mxu0 0.0
        %3670 = vmatpush1.msra.mxu0 0.0
        %3671 = vmatprep.subr.mxu0 0.0
        %3672 = vmatpush1.msra.mxu0 0.0
        %3673 = vmatprep.subr.mxu0 0.0
        %3674 = vmatpush1.msra.mxu0 0.0
        %3675 = vmatprep.subr.mxu0 0.0
        %3676 = vmatpush1.msra.mxu0 0.0
        %3677 = vmatprep.subr.mxu0 0.0
        %3678 = vmatpush1.msra.mxu0 0.0
        %3679 = vmatprep.subr.mxu0 0.0
        %3680 = vmatpush1.msra.mxu0 0.0
        %3681 = vmatprep.subr.mxu0 0.0
        %3682 = vmatpush1.msra.mxu0 0.0
        %3683 = vmatprep.subr.mxu0 0.0
        %3684 = vmatpush1.msra.mxu0 0.0
        %3685 = vmatprep.subr.mxu0 0.0
        %3686 = vmatpush1.msra.mxu0 0.0
        %3687 = vmatprep.subr.mxu0 0.0
        %3688 = vmatpush1.msra.mxu0 0.0
        %3689 = vmatprep.subr.mxu0 0.0
        %3690 = vmatpush1.msra.mxu0 0.0
        %3691 = vmatprep.subr.mxu0 0.0
        %3692 = vmatpush1.msra.mxu0 0.0
        %3693 = vmatprep.subr.mxu0 0.0
        %3694 = vmatpush1.msra.mxu0 0.0
        %3695 = vmatprep.subr.mxu0 0.0
        %3696 = vmatpush1.msra.mxu0 0.0
        %3697 = vmatprep.subr.mxu0 0.0
        %3698 = vmatpush1.msra.mxu0 0.0
        %3699 = vmatprep.subr.mxu0 0.0
        %3700 = vmatpush1.msra.mxu0 0.0
        %3701 = vmatprep.subr.mxu0 0.0
        %3702 = vmatpush1.msra.mxu0 0.0
        %3703 = vmatprep.subr.mxu0 0.0
        %3704 = vmatpush1.msra.mxu0 0.0
        %3705 = vmatprep.mubr.f32.mxu0 0.0
        %3706 = vmatmul.mubr.f32.gmra.mrb[0].mxu0 %v3639
        %v3707 = vpop.f32.mrb[0].mxu0
        %v3708 = vadd.f32 0.0, %v3707
        %v3709 = vpop.f32.mrb[0].mxu0
        %3710 = vdwg.mxu0
        %s3711 = scalar_lea.vmem %s6, 28
        %v3712 = vld [vmem:[%s3711] sm:$0x7]
        %s3713 = scalar_lea.vmem %s3, 224
        %v3714 = vld [vmem:[%s3713] sm:$0xff]
        %v3715 = vld [vmem:[%s3713 + $0x8] sm:$0xff]
        %v3716 = vld [vmem:[%s3713 + $0x10] sm:$0xff]
        %v3717 = vld [vmem:[%s3713 + $0x18] sm:$0xff]
        %v3718 = vlaneseq
        %v3719 = vshrl.u32 %v3718, 7
        %v3720 = vsub.s32 0, %v3719
        %v3721 = vrot.slane %v3712, %v3720
        %3722 = vmatprep.subr.mxu0 0.0
        %3723 = vmatpush1.msra.mxu0 %v3714
        %3724 = vmatprep.subr.mxu0 0.0
        %3725 = vmatpush1.msra.mxu0 %v3715
        %3726 = vmatprep.subr.mxu0 0.0
        %3727 = vmatpush1.msra.mxu0 %v3716
        %3728 = vmatprep.subr.mxu0 0.0
        %3729 = vmatpush1.msra.mxu0 %v3717
        %3730 = vmatprep.subr.mxu0 0.0
        %3731 = vmatpush1.msra.mxu0 0.0
        %3732 = vmatprep.subr.mxu0 0.0
        %3733 = vmatpush1.msra.mxu0 0.0
        %3734 = vmatprep.subr.mxu0 0.0
        %3735 = vmatpush1.msra.mxu0 0.0
        %3736 = vmatprep.subr.mxu0 0.0
        %3737 = vmatpush1.msra.mxu0 0.0
        %3738 = vmatprep.subr.mxu0 0.0
        %3739 = vmatpush1.msra.mxu0 0.0
        %3740 = vmatprep.subr.mxu0 0.0
        %3741 = vmatpush1.msra.mxu0 0.0
        %3742 = vmatprep.subr.mxu0 0.0
        %3743 = vmatpush1.msra.mxu0 0.0
        %3744 = vmatprep.subr.mxu0 0.0
        %3745 = vmatpush1.msra.mxu0 0.0
        %3746 = vmatprep.subr.mxu0 0.0
        %3747 = vmatpush1.msra.mxu0 0.0
        %3748 = vmatprep.subr.mxu0 0.0
        %3749 = vmatpush1.msra.mxu0 0.0
        %3750 = vmatprep.subr.mxu0 0.0
        %3751 = vmatpush1.msra.mxu0 0.0
        %3752 = vmatprep.subr.mxu0 0.0
        %3753 = vmatpush1.msra.mxu0 0.0
        %3754 = vmatprep.subr.mxu0 0.0
        %3755 = vmatpush1.msra.mxu0 0.0
        %3756 = vmatprep.subr.mxu0 0.0
        %3757 = vmatpush1.msra.mxu0 0.0
        %3758 = vmatprep.subr.mxu0 0.0
        %3759 = vmatpush1.msra.mxu0 0.0
        %3760 = vmatprep.subr.mxu0 0.0
        %3761 = vmatpush1.msra.mxu0 0.0
        %3762 = vmatprep.subr.mxu0 0.0
        %3763 = vmatpush1.msra.mxu0 0.0
        %3764 = vmatprep.subr.mxu0 0.0
        %3765 = vmatpush1.msra.mxu0 0.0
        %3766 = vmatprep.subr.mxu0 0.0
        %3767 = vmatpush1.msra.mxu0 0.0
        %3768 = vmatprep.subr.mxu0 0.0
        %3769 = vmatpush1.msra.mxu0 0.0
        %3770 = vmatprep.subr.mxu0 0.0
        %3771 = vmatpush1.msra.mxu0 0.0
        %3772 = vmatprep.subr.mxu0 0.0
        %3773 = vmatpush1.msra.mxu0 0.0
        %3774 = vmatprep.subr.mxu0 0.0
        %3775 = vmatpush1.msra.mxu0 0.0
        %3776 = vmatprep.subr.mxu0 0.0
        %3777 = vmatpush1.msra.mxu0 0.0
        %3778 = vmatprep.subr.mxu0 0.0
        %3779 = vmatpush1.msra.mxu0 0.0
        %3780 = vmatprep.subr.mxu0 0.0
        %3781 = vmatpush1.msra.mxu0 0.0
        %3782 = vmatprep.subr.mxu0 0.0
        %3783 = vmatpush1.msra.mxu0 0.0
        %3784 = vmatprep.subr.mxu0 0.0
        %3785 = vmatpush1.msra.mxu0 0.0
        %3786 = vmatprep.mubr.f32.mxu0 0.0
        %3787 = vmatmul.mubr.f32.gmra.mrb[0].mxu0 %v2520
        %v3788 = vpop.f32.mrb[0].mxu0
        %v3789 = vadd.f32 %v3721, %v3788
        %v3790 = vpop.f32.mrb[0].mxu0
        %3791 = vdwg.mxu0
        %s3792 = scalar_lea.vmem %s4, 224
        %v3793 = vld [vmem:[%s3792] sm:$0xff]
        %v3794 = vld [vmem:[%s3792 + $0x8] sm:$0xff]
        %v3795 = vld [vmem:[%s3792 + $0x10] sm:$0xff]
        %v3796 = vld [vmem:[%s3792 + $0x18] sm:$0xff]
        %v3797 = vlaneseq
        %v3798 = vshrl.u32 %v3797, 7
        %v3799 = vsub.s32 1, %v3798
        %v3800 = vrot.slane %v3712, %v3799
        %3801 = vmatprep.subr.mxu0 0.0
        %3802 = vmatpush1.msra.mxu0 %v3793
        %3803 = vmatprep.subr.mxu0 0.0
        %3804 = vmatpush1.msra.mxu0 %v3794
        %3805 = vmatprep.subr.mxu0 0.0
        %3806 = vmatpush1.msra.mxu0 %v3795
        %3807 = vmatprep.subr.mxu0 0.0
        %3808 = vmatpush1.msra.mxu0 %v3796
        %3809 = vmatprep.subr.mxu0 0.0
        %3810 = vmatpush1.msra.mxu0 0.0
        %3811 = vmatprep.subr.mxu0 0.0
        %3812 = vmatpush1.msra.mxu0 0.0
        %3813 = vmatprep.subr.mxu0 0.0
        %3814 = vmatpush1.msra.mxu0 0.0
        %3815 = vmatprep.subr.mxu0 0.0
        %3816 = vmatpush1.msra.mxu0 0.0
        %3817 = vmatprep.subr.mxu0 0.0
        %3818 = vmatpush1.msra.mxu0 0.0
        %3819 = vmatprep.subr.mxu0 0.0
        %3820 = vmatpush1.msra.mxu0 0.0
        %3821 = vmatprep.subr.mxu0 0.0
        %3822 = vmatpush1.msra.mxu0 0.0
        %3823 = vmatprep.subr.mxu0 0.0
        %3824 = vmatpush1.msra.mxu0 0.0
        %3825 = vmatprep.subr.mxu0 0.0
        %3826 = vmatpush1.msra.mxu0 0.0
        %3827 = vmatprep.subr.mxu0 0.0
        %3828 = vmatpush1.msra.mxu0 0.0
        %3829 = vmatprep.subr.mxu0 0.0
        %3830 = vmatpush1.msra.mxu0 0.0
        %3831 = vmatprep.subr.mxu0 0.0
        %3832 = vmatpush1.msra.mxu0 0.0
        %3833 = vmatprep.subr.mxu0 0.0
        %3834 = vmatpush1.msra.mxu0 0.0
        %3835 = vmatprep.subr.mxu0 0.0
        %3836 = vmatpush1.msra.mxu0 0.0
        %3837 = vmatprep.subr.mxu0 0.0
        %3838 = vmatpush1.msra.mxu0 0.0
        %3839 = vmatprep.subr.mxu0 0.0
        %3840 = vmatpush1.msra.mxu0 0.0
        %3841 = vmatprep.subr.mxu0 0.0
        %3842 = vmatpush1.msra.mxu0 0.0
        %3843 = vmatprep.subr.mxu0 0.0
        %3844 = vmatpush1.msra.mxu0 0.0
        %3845 = vmatprep.subr.mxu0 0.0
        %3846 = vmatpush1.msra.mxu0 0.0
        %3847 = vmatprep.subr.mxu0 0.0
        %3848 = vmatpush1.msra.mxu0 0.0
        %3849 = vmatprep.subr.mxu0 0.0
        %3850 = vmatpush1.msra.mxu0 0.0
        %3851 = vmatprep.subr.mxu0 0.0
        %3852 = vmatpush1.msra.mxu0 0.0
        %3853 = vmatprep.subr.mxu0 0.0
        %3854 = vmatpush1.msra.mxu0 0.0
        %3855 = vmatprep.subr.mxu0 0.0
        %3856 = vmatpush1.msra.mxu0 0.0
        %3857 = vmatprep.subr.mxu0 0.0
        %3858 = vmatpush1.msra.mxu0 0.0
        %3859 = vmatprep.subr.mxu0 0.0
        %3860 = vmatpush1.msra.mxu0 0.0
        %3861 = vmatprep.subr.mxu0 0.0
        %3862 = vmatpush1.msra.mxu0 0.0
        %3863 = vmatprep.subr.mxu0 0.0
        %3864 = vmatpush1.msra.mxu0 0.0
        %3865 = vmatprep.mubr.f32.mxu0 0.0
        %3866 = vmatmul.mubr.f32.gmra.mrb[0].mxu0 %v2520
        %v3867 = vpop.f32.mrb[0].mxu0
        %v3868 = vadd.f32 %v3800, %v3867
        %v3869 = vpop.f32.mrb[0].mxu0
        %3870 = vdwg.mxu0
        %s3871 = scalar_lea.vmem %s5, 224
        %v3872 = vld [vmem:[%s3871] sm:$0xff]
        %v3873 = vld [vmem:[%s3871 + $0x8] sm:$0xff]
        %v3874 = vld [vmem:[%s3871 + $0x10] sm:$0xff]
        %v3875 = vld [vmem:[%s3871 + $0x18] sm:$0xff]
        %v3876 = vlaneseq
        %v3877 = vshrl.u32 %v3876, 7
        %v3878 = vsub.s32 2, %v3877
        %v3879 = vrot.slane %v3712, %v3878
        %3880 = vmatprep.subr.mxu0 0.0
        %3881 = vmatpush1.msra.mxu0 %v3872
        %3882 = vmatprep.subr.mxu0 0.0
        %3883 = vmatpush1.msra.mxu0 %v3873
        %3884 = vmatprep.subr.mxu0 0.0
        %3885 = vmatpush1.msra.mxu0 %v3874
        %3886 = vmatprep.subr.mxu0 0.0
        %3887 = vmatpush1.msra.mxu0 %v3875
        %3888 = vmatprep.subr.mxu0 0.0
        %3889 = vmatpush1.msra.mxu0 0.0
        %3890 = vmatprep.subr.mxu0 0.0
        %3891 = vmatpush1.msra.mxu0 0.0
        %3892 = vmatprep.subr.mxu0 0.0
        %3893 = vmatpush1.msra.mxu0 0.0
        %3894 = vmatprep.subr.mxu0 0.0
        %3895 = vmatpush1.msra.mxu0 0.0
        %3896 = vmatprep.subr.mxu0 0.0
        %3897 = vmatpush1.msra.mxu0 0.0
        %3898 = vmatprep.subr.mxu0 0.0
        %3899 = vmatpush1.msra.mxu0 0.0
        %3900 = vmatprep.subr.mxu0 0.0
        %3901 = vmatpush1.msra.mxu0 0.0
        %3902 = vmatprep.subr.mxu0 0.0
        %3903 = vmatpush1.msra.mxu0 0.0
        %3904 = vmatprep.subr.mxu0 0.0
        %3905 = vmatpush1.msra.mxu0 0.0
        %3906 = vmatprep.subr.mxu0 0.0
        %3907 = vmatpush1.msra.mxu0 0.0
        %3908 = vmatprep.subr.mxu0 0.0
        %3909 = vmatpush1.msra.mxu0 0.0
        %3910 = vmatprep.subr.mxu0 0.0
        %3911 = vmatpush1.msra.mxu0 0.0
        %3912 = vmatprep.subr.mxu0 0.0
        %3913 = vmatpush1.msra.mxu0 0.0
        %3914 = vmatprep.subr.mxu0 0.0
        %3915 = vmatpush1.msra.mxu0 0.0
        %3916 = vmatprep.subr.mxu0 0.0
        %3917 = vmatpush1.msra.mxu0 0.0
        %3918 = vmatprep.subr.mxu0 0.0
        %3919 = vmatpush1.msra.mxu0 0.0
        %3920 = vmatprep.subr.mxu0 0.0
        %3921 = vmatpush1.msra.mxu0 0.0
        %3922 = vmatprep.subr.mxu0 0.0
        %3923 = vmatpush1.msra.mxu0 0.0
        %3924 = vmatprep.subr.mxu0 0.0
        %3925 = vmatpush1.msra.mxu0 0.0
        %3926 = vmatprep.subr.mxu0 0.0
        %3927 = vmatpush1.msra.mxu0 0.0
        %3928 = vmatprep.subr.mxu0 0.0
        %3929 = vmatpush1.msra.mxu0 0.0
        %3930 = vmatprep.subr.mxu0 0.0
        %3931 = vmatpush1.msra.mxu0 0.0
        %3932 = vmatprep.subr.mxu0 0.0
        %3933 = vmatpush1.msra.mxu0 0.0
        %3934 = vmatprep.subr.mxu0 0.0
        %3935 = vmatpush1.msra.mxu0 0.0
        %3936 = vmatprep.subr.mxu0 0.0
        %3937 = vmatpush1.msra.mxu0 0.0
        %3938 = vmatprep.subr.mxu0 0.0
        %3939 = vmatpush1.msra.mxu0 0.0
        %3940 = vmatprep.subr.mxu0 0.0
        %3941 = vmatpush1.msra.mxu0 0.0
        %3942 = vmatprep.subr.mxu0 0.0
        %3943 = vmatpush1.msra.mxu0 0.0
        %3944 = vmatprep.mubr.f32.mxu0 0.0
        %3945 = vmatmul.mubr.f32.gmra.mrb[0].mxu0 %v2520
        %v3946 = vpop.f32.mrb[0].mxu0
        %v3947 = vadd.f32 %v3879, %v3946
        %v3948 = vpop.f32.mrb[0].mxu0
        %3949 = vdwg.mxu0
        %v3951 = vsel %vm827, %v3789, 0
        %v3954 = vsel %vm827, %v3868, 0
        %3956 = vmatprep.subr.mxu0 0.0
        %3957 = vmatpush1.xpose.msra.mxu0 %v3954
        %3958 = vmatprep.subr.mxu0 0.0
        %3959 = vmatpush1.xpose.msra.mxu0 0.0
        %3960 = vmatprep.subr.mxu0 0.0
        %3961 = vmatpush1.xpose.msra.mxu0 0.0
        %3962 = vmatprep.subr.mxu0 0.0
        %3963 = vmatpush1.xpose.msra.mxu0 0.0
        %3964 = vmatprep.subr.mxu0 0.0
        %3965 = vmatpush1.xpose.msra.mxu0 0.0
        %3966 = vmatprep.subr.mxu0 0.0
        %3967 = vmatpush1.xpose.msra.mxu0 0.0
        %3968 = vmatprep.subr.mxu0 0.0
        %3969 = vmatpush1.xpose.msra.mxu0 0.0
        %3970 = vmatprep.subr.mxu0 0.0
        %3971 = vmatpush1.xpose.msra.mxu0 0.0
        %3972 = vmatprep.subr.mxu0 0.0
        %3973 = vmatpush1.xpose.msra.mxu0 0.0
        %3974 = vmatprep.subr.mxu0 0.0
        %3975 = vmatpush1.xpose.msra.mxu0 0.0
        %3976 = vmatprep.subr.mxu0 0.0
        %3977 = vmatpush1.xpose.msra.mxu0 0.0
        %3978 = vmatprep.subr.mxu0 0.0
        %3979 = vmatpush1.xpose.msra.mxu0 0.0
        %3980 = vmatprep.subr.mxu0 0.0
        %3981 = vmatpush1.xpose.msra.mxu0 0.0
        %3982 = vmatprep.subr.mxu0 0.0
        %3983 = vmatpush1.xpose.msra.mxu0 0.0
        %3984 = vmatprep.subr.mxu0 0.0
        %3985 = vmatpush1.xpose.msra.mxu0 0.0
        %3986 = vmatprep.subr.mxu0 0.0
        %3987 = vmatpush1.xpose.msra.mxu0 0.0
        %3988 = vmatprep.subr.mxu0 0.0
        %3989 = vmatpush1.xpose.msra.mxu0 0.0
        %3990 = vmatprep.subr.mxu0 0.0
        %3991 = vmatpush1.xpose.msra.mxu0 0.0
        %3992 = vmatprep.subr.mxu0 0.0
        %3993 = vmatpush1.xpose.msra.mxu0 0.0
        %3994 = vmatprep.subr.mxu0 0.0
        %3995 = vmatpush1.xpose.msra.mxu0 0.0
        %3996 = vmatprep.subr.mxu0 0.0
        %3997 = vmatpush1.xpose.msra.mxu0 0.0
        %3998 = vmatprep.subr.mxu0 0.0
        %3999 = vmatpush1.xpose.msra.mxu0 0.0
        %4000 = vmatprep.subr.mxu0 0.0
        %4001 = vmatpush1.xpose.msra.mxu0 0.0
        %4002 = vmatprep.subr.mxu0 0.0
        %4003 = vmatpush1.xpose.msra.mxu0 0.0
        %4004 = vmatprep.subr.mxu0 0.0
        %4005 = vmatpush1.xpose.msra.mxu0 0.0
        %4006 = vmatprep.subr.mxu0 0.0
        %4007 = vmatpush1.xpose.msra.mxu0 0.0
        %4008 = vmatprep.subr.mxu0 0.0
        %4009 = vmatpush1.xpose.msra.mxu0 0.0
        %4010 = vmatprep.subr.mxu0 0.0
        %4011 = vmatpush1.xpose.msra.mxu0 0.0
        %4012 = vmatprep.subr.mxu0 0.0
        %4013 = vmatpush1.xpose.msra.mxu0 0.0
        %4014 = vmatprep.subr.mxu0 0.0
        %4015 = vmatpush1.xpose.msra.mxu0 0.0
        %4016 = vmatprep.subr.mxu0 0.0
        %4017 = vmatpush1.xpose.msra.mxu0 0.0
        %4018 = vmatprep.subr.mxu0 0.0
        %4019 = vmatpush1.xpose.msra.mxu0 0.0
        %4020 = vmatprep.mubr.f32.mxu0 0.0
        %4021 = vmatmul.mubr.f32.gmra.mrb[0].mxu0 %v3951
        %v4022 = vpop.f32.mrb[0].mxu0
        %v4023 = vadd.f32 0.0, %v4022
        %v4024 = vpop.f32.mrb[0].mxu0
        %4025 = vdwg.mxu0
        %v4026 = vmul.f32 %v4023, 0.35355338
        %v4027 = vsel %vm827, %v4026, -inf
        %4028 = vmax.xlane.f32.xlu0 %v4027
        %v4029 = vpop.xlane.xlu0 %4028
        %v4030 = vsub.f32 %v4026, %v4029
        %v4031 = vmul.f32 %v4030, 1.442695
        %v4032 = vpow.pop %v4031
        %v4033 = vsel %vm827, %v4032, 0.0
        %4034 = vadd.xlane.f32.xlu0 %v4033
        %v4035 = vpop.xlane.xlu0 %4034
        %v4036 = vrcp.pop %v4035
        %v4037 = vmul.f32 %v4032, %v4036
        %v4039 = vsel %vm827, %v4037, 0
        %4041 = vmatprep.subr.mxu0 0.0
        %4042 = vmatpush1.msra.mxu0 %v3947
        %4043 = vmatprep.subr.mxu0 0.0
        %4044 = vmatpush1.msra.mxu0 0.0
        %4045 = vmatprep.subr.mxu0 0.0
        %4046 = vmatpush1.msra.mxu0 0.0
        %4047 = vmatprep.subr.mxu0 0.0
        %4048 = vmatpush1.msra.mxu0 0.0
        %4049 = vmatprep.subr.mxu0 0.0
        %4050 = vmatpush1.msra.mxu0 0.0
        %4051 = vmatprep.subr.mxu0 0.0
        %4052 = vmatpush1.msra.mxu0 0.0
        %4053 = vmatprep.subr.mxu0 0.0
        %4054 = vmatpush1.msra.mxu0 0.0
        %4055 = vmatprep.subr.mxu0 0.0
        %4056 = vmatpush1.msra.mxu0 0.0
        %4057 = vmatprep.subr.mxu0 0.0
        %4058 = vmatpush1.msra.mxu0 0.0
        %4059 = vmatprep.subr.mxu0 0.0
        %4060 = vmatpush1.msra.mxu0 0.0
        %4061 = vmatprep.subr.mxu0 0.0
        %4062 = vmatpush1.msra.mxu0 0.0
        %4063 = vmatprep.subr.mxu0 0.0
        %4064 = vmatpush1.msra.mxu0 0.0
        %4065 = vmatprep.subr.mxu0 0.0
        %4066 = vmatpush1.msra.mxu0 0.0
        %4067 = vmatprep.subr.mxu0 0.0
        %4068 = vmatpush1.msra.mxu0 0.0
        %4069 = vmatprep.subr.mxu0 0.0
        %4070 = vmatpush1.msra.mxu0 0.0
        %4071 = vmatprep.subr.mxu0 0.0
        %4072 = vmatpush1.msra.mxu0 0.0
        %4073 = vmatprep.subr.mxu0 0.0
        %4074 = vmatpush1.msra.mxu0 0.0
        %4075 = vmatprep.subr.mxu0 0.0
        %4076 = vmatpush1.msra.mxu0 0.0
        %4077 = vmatprep.subr.mxu0 0.0
        %4078 = vmatpush1.msra.mxu0 0.0
        %4079 = vmatprep.subr.mxu0 0.0
        %4080 = vmatpush1.msra.mxu0 0.0
        %4081 = vmatprep.subr.mxu0 0.0
        %4082 = vmatpush1.msra.mxu0 0.0
        %4083 = vmatprep.subr.mxu0 0.0
        %4084 = vmatpush1.msra.mxu0 0.0
        %4085 = vmatprep.subr.mxu0 0.0
        %4086 = vmatpush1.msra.mxu0 0.0
        %4087 = vmatprep.subr.mxu0 0.0
        %4088 = vmatpush1.msra.mxu0 0.0
        %4089 = vmatprep.subr.mxu0 0.0
        %4090 = vmatpush1.msra.mxu0 0.0
        %4091 = vmatprep.subr.mxu0 0.0
        %4092 = vmatpush1.msra.mxu0 0.0
        %4093 = vmatprep.subr.mxu0 0.0
        %4094 = vmatpush1.msra.mxu0 0.0
        %4095 = vmatprep.subr.mxu0 0.0
        %4096 = vmatpush1.msra.mxu0 0.0
        %4097 = vmatprep.subr.mxu0 0.0
        %4098 = vmatpush1.msra.mxu0 0.0
        %4099 = vmatprep.subr.mxu0 0.0
        %4100 = vmatpush1.msra.mxu0 0.0
        %4101 = vmatprep.subr.mxu0 0.0
        %4102 = vmatpush1.msra.mxu0 0.0
        %4103 = vmatprep.subr.mxu0 0.0
        %4104 = vmatpush1.msra.mxu0 0.0
        %4105 = vmatprep.mubr.f32.mxu0 0.0
        %4106 = vmatmul.mubr.f32.gmra.mrb[0].mxu0 %v4039
        %v4107 = vpop.f32.mrb[0].mxu0
        %v4108 = vadd.f32 0.0, %v4107
        %v4109 = vpop.f32.mrb[0].mxu0
        %4110 = vdwg.mxu0
        %4112 = vrot.lane.b32.xlu0 %v3308, 8
        %v4113 = vpop.permute.xlu0 %4112
        %4116 = vrot.lane.b32.xlu0 %v3708, 16
        %v4117 = vpop.permute.xlu0 %4116
        %4120 = vrot.lane.b32.xlu0 %v4108, 24
        %v4121 = vpop.permute.xlu0 %4120
        %v4123 = vsel %vm827, %v2908, %v4113
        %v4124 = vsel %vm513, %v4123, %v4117
        %v4125 = vsel %vm2203, %v4124, %v4121
        %s4126 = scalar_lea.vmem %s7, 32
        %v4127 = vld [vmem:[%s4126] sm:$0xff]
        %v4128 = vld [vmem:[%s4126 + $0x8] sm:$0xff]
        %v4129 = vld [vmem:[%s4126 + $0x10] sm:$0xff]
        %v4130 = vld [vmem:[%s4126 + $0x18] sm:$0xff]
        %v4131 = vlaneseq
        %v4132 = vshrl.u32 %v4131, 7
        %v4133 = vsub.s32 0, %v4132
        %v4134 = vrot.slane %v2507, %v4133
        %v4136 = vsel %vm597, %v4125, 0
        %4138 = vmatprep.subr.mxu0 0.0
        %4139 = vmatpush1.msra.mxu0 %v4127
        %4140 = vmatprep.subr.mxu0 0.0
        %4141 = vmatpush1.msra.mxu0 %v4128
        %4142 = vmatprep.subr.mxu0 0.0
        %4143 = vmatpush1.msra.mxu0 %v4129
        %4144 = vmatprep.subr.mxu0 0.0
        %4145 = vmatpush1.msra.mxu0 %v4130
        %4146 = vmatprep.subr.mxu0 0.0
        %4147 = vmatpush1.msra.mxu0 0.0
        %4148 = vmatprep.subr.mxu0 0.0
        %4149 = vmatpush1.msra.mxu0 0.0
        %4150 = vmatprep.subr.mxu0 0.0
        %4151 = vmatpush1.msra.mxu0 0.0
        %4152 = vmatprep.subr.mxu0 0.0
        %4153 = vmatpush1.msra.mxu0 0.0
        %4154 = vmatprep.subr.mxu0 0.0
        %4155 = vmatpush1.msra.mxu0 0.0
        %4156 = vmatprep.subr.mxu0 0.0
        %4157 = vmatpush1.msra.mxu0 0.0
        %4158 = vmatprep.subr.mxu0 0.0
        %4159 = vmatpush1.msra.mxu0 0.0
        %4160 = vmatprep.subr.mxu0 0.0
        %4161 = vmatpush1.msra.mxu0 0.0
        %4162 = vmatprep.subr.mxu0 0.0
        %4163 = vmatpush1.msra.mxu0 0.0
        %4164 = vmatprep.subr.mxu0 0.0
        %4165 = vmatpush1.msra.mxu0 0.0
        %4166 = vmatprep.subr.mxu0 0.0
        %4167 = vmatpush1.msra.mxu0 0.0
        %4168 = vmatprep.subr.mxu0 0.0
        %4169 = vmatpush1.msra.mxu0 0.0
        %4170 = vmatprep.subr.mxu0 0.0
        %4171 = vmatpush1.msra.mxu0 0.0
        %4172 = vmatprep.subr.mxu0 0.0
        %4173 = vmatpush1.msra.mxu0 0.0
        %4174 = vmatprep.subr.mxu0 0.0
        %4175 = vmatpush1.msra.mxu0 0.0
        %4176 = vmatprep.subr.mxu0 0.0
        %4177 = vmatpush1.msra.mxu0 0.0
        %4178 = vmatprep.subr.mxu0 0.0
        %4179 = vmatpush1.msra.mxu0 0.0
        %4180 = vmatprep.subr.mxu0 0.0
        %4181 = vmatpush1.msra.mxu0 0.0
        %4182 = vmatprep.subr.mxu0 0.0
        %4183 = vmatpush1.msra.mxu0 0.0
        %4184 = vmatprep.subr.mxu0 0.0
        %4185 = vmatpush1.msra.mxu0 0.0
        %4186 = vmatprep.subr.mxu0 0.0
        %4187 = vmatpush1.msra.mxu0 0.0
        %4188 = vmatprep.subr.mxu0 0.0
        %4189 = vmatpush1.msra.mxu0 0.0
        %4190 = vmatprep.subr.mxu0 0.0
        %4191 = vmatpush1.msra.mxu0 0.0
        %4192 = vmatprep.subr.mxu0 0.0
        %4193 = vmatpush1.msra.mxu0 0.0
        %4194 = vmatprep.subr.mxu0 0.0
        %4195 = vmatpush1.msra.mxu0 0.0
        %4196 = vmatprep.subr.mxu0 0.0
        %4197 = vmatpush1.msra.mxu0 0.0
        %4198 = vmatprep.subr.mxu0 0.0
        %4199 = vmatpush1.msra.mxu0 0.0
        %4200 = vmatprep.subr.mxu0 0.0
        %4201 = vmatpush1.msra.mxu0 0.0
        %4202 = vmatprep.mubr.f32.mxu0 0.0
        %4203 = vmatmul.mubr.f32.gmra.mrb[0].mxu0 %v4136
        %v4204 = vpop.f32.mrb[0].mxu0
        %v4205 = vadd.f32 %v4134, %v4204
        %v4206 = vpop.f32.mrb[0].mxu0
        %4207 = vdwg.mxu0
        %v4208 = vadd.f32 %v2505, %v4205
        %v4209 = vsel %vm597, %v4208, 0.0
        %4210 = vadd.xlane.f32.xlu0 %v4209
        %v4211 = vpop.xlane.xlu0 %4210
        %v4212 = vmul.f32 %v4211, %v2290
        %v4213 = vsub.f32 %v4208, %v4212
        %v4214 = vmul.f32 %v4213, %v4213
        %v4215 = vsel %vm597, %v4214, 0.0
        %4216 = vadd.xlane.f32.xlu0 %v4215
        %v4217 = vpop.xlane.xlu0 %4216
        %v4218 = vmul.f32 %v4217, %v2290
        %v4219 = vadd.f32 %v4218, 1e-05
        %v4220 = vrsqrt.pop %v4219
        %v4221 = vmul.f32 %v4213, %v4220
        %v4222 = vlaneseq
        %v4223 = vshrl.u32 %v4222, 7
        %v4224 = vsub.s32 1, %v4223
        %v4225 = vrot.slane %v2507, %v4224
        %v4226 = vmul.f32 %v4221, %v4225
        %v4227 = vlaneseq
        %v4228 = vshrl.u32 %v4227, 7
        %v4229 = vsub.s32 2, %v4228
        %v4230 = vrot.slane %v2507, %v4229
        %v4231 = vadd.f32 %v4226, %v4230
        %s4232 = scalar_lea.vmem %s8, 32
        %v4233 = vld [vmem:[%s4232] sm:$0xff]
        %v4234 = vld [vmem:[%s4232 + $0x8] sm:$0xff]
        %v4235 = vld [vmem:[%s4232 + $0x10] sm:$0xff]
        %v4236 = vld [vmem:[%s4232 + $0x18] sm:$0xff]
        %s4237 = scalar_lea.vmem %s9, 1
        %v4238 = vld [vmem:[%s4237] sm:$0x1]
        %v4240 = vlaneseq
        %v4241 = vshrl.u32 %v4240, 7
        %v4242 = vsub.s32 0, %v4241
        %v4243 = vrot.slane %v4238, %v4242
        %v4246 = vsel %vm597, %v4231, 0
        %4248 = vmatprep.subr.mxu0 0.0
        %4249 = vmatpush1.msra.mxu0 %v4233
        %4250 = vmatprep.subr.mxu0 0.0
        %4251 = vmatpush1.msra.mxu0 %v4234
        %4252 = vmatprep.subr.mxu0 0.0
        %4253 = vmatpush1.msra.mxu0 %v4235
        %4254 = vmatprep.subr.mxu0 0.0
        %4255 = vmatpush1.msra.mxu0 %v4236
        %4256 = vmatprep.subr.mxu0 0.0
        %4257 = vmatpush1.msra.mxu0 0.0
        %4258 = vmatprep.subr.mxu0 0.0
        %4259 = vmatpush1.msra.mxu0 0.0
        %4260 = vmatprep.subr.mxu0 0.0
        %4261 = vmatpush1.msra.mxu0 0.0
        %4262 = vmatprep.subr.mxu0 0.0
        %4263 = vmatpush1.msra.mxu0 0.0
        %4264 = vmatprep.subr.mxu0 0.0
        %4265 = vmatpush1.msra.mxu0 0.0
        %4266 = vmatprep.subr.mxu0 0.0
        %4267 = vmatpush1.msra.mxu0 0.0
        %4268 = vmatprep.subr.mxu0 0.0
        %4269 = vmatpush1.msra.mxu0 0.0
        %4270 = vmatprep.subr.mxu0 0.0
        %4271 = vmatpush1.msra.mxu0 0.0
        %4272 = vmatprep.subr.mxu0 0.0
        %4273 = vmatpush1.msra.mxu0 0.0
        %4274 = vmatprep.subr.mxu0 0.0
        %4275 = vmatpush1.msra.mxu0 0.0
        %4276 = vmatprep.subr.mxu0 0.0
        %4277 = vmatpush1.msra.mxu0 0.0
        %4278 = vmatprep.subr.mxu0 0.0
        %4279 = vmatpush1.msra.mxu0 0.0
        %4280 = vmatprep.subr.mxu0 0.0
        %4281 = vmatpush1.msra.mxu0 0.0
        %4282 = vmatprep.subr.mxu0 0.0
        %4283 = vmatpush1.msra.mxu0 0.0
        %4284 = vmatprep.subr.mxu0 0.0
        %4285 = vmatpush1.msra.mxu0 0.0
        %4286 = vmatprep.subr.mxu0 0.0
        %4287 = vmatpush1.msra.mxu0 0.0
        %4288 = vmatprep.subr.mxu0 0.0
        %4289 = vmatpush1.msra.mxu0 0.0
        %4290 = vmatprep.subr.mxu0 0.0
        %4291 = vmatpush1.msra.mxu0 0.0
        %4292 = vmatprep.subr.mxu0 0.0
        %4293 = vmatpush1.msra.mxu0 0.0
        %4294 = vmatprep.subr.mxu0 0.0
        %4295 = vmatpush1.msra.mxu0 0.0
        %4296 = vmatprep.subr.mxu0 0.0
        %4297 = vmatpush1.msra.mxu0 0.0
        %4298 = vmatprep.subr.mxu0 0.0
        %4299 = vmatpush1.msra.mxu0 0.0
        %4300 = vmatprep.subr.mxu0 0.0
        %4301 = vmatpush1.msra.mxu0 0.0
        %4302 = vmatprep.subr.mxu0 0.0
        %4303 = vmatpush1.msra.mxu0 0.0
        %4304 = vmatprep.subr.mxu0 0.0
        %4305 = vmatpush1.msra.mxu0 0.0
        %4306 = vmatprep.subr.mxu0 0.0
        %4307 = vmatpush1.msra.mxu0 0.0
        %4308 = vmatprep.subr.mxu0 0.0
        %4309 = vmatpush1.msra.mxu0 0.0
        %4310 = vmatprep.subr.mxu0 0.0
        %4311 = vmatpush1.msra.mxu0 0.0
        %4312 = vmatprep.mubr.f32.mxu0 0.0
        %4313 = vmatmul.mubr.f32.gmra.mrb[0].mxu0 %v4246
        %v4314 = vpop.f32.mrb[0].mxu0
        %v4315 = vadd.f32 %v4243, %v4314
        %v4316 = vpop.f32.mrb[0].mxu0
        %4317 = vdwg.mxu0
        %v4318 = vmax.f32 %v4315, 0.0
        %s4319 = scalar_lea.vmem %s10, 64
        %v4320 = vld [vmem:[%s4319] sm:$0xff]
        %v4321 = vld [vmem:[%s4319 + $0x8] sm:$0xff]
        %v4322 = vld [vmem:[%s4319 + $0x10] sm:$0xff]
        %v4323 = vld [vmem:[%s4319 + $0x18] sm:$0xff]
        %v4324 = vld [vmem:[%s4319 + $0x20] sm:$0xff]
        %v4325 = vld [vmem:[%s4319 + $0x28] sm:$0xff]
        %v4326 = vld [vmem:[%s4319 + $0x30] sm:$0xff]
        %v4327 = vld [vmem:[%s4319 + $0x38] sm:$0xff]
        %v4328 = vlaneseq
        %v4329 = vshrl.u32 %v4328, 7
        %v4330 = vsub.s32 3, %v4329
        %v4331 = vrot.slane %v2507, %v4330
        %v4333 = vsel %vm2408, %v4318, 0
        %4335 = vmatprep.subr.mxu0 0.0
        %4336 = vmatpush1.msra.mxu0 %v4320
        %4337 = vmatprep.subr.mxu0 0.0
        %4338 = vmatpush1.msra.mxu0 %v4321
        %4339 = vmatprep.subr.mxu0 0.0
        %4340 = vmatpush1.msra.mxu0 %v4322
        %4341 = vmatprep.subr.mxu0 0.0
        %4342 = vmatpush1.msra.mxu0 %v4323
        %4343 = vmatprep.subr.mxu0 0.0
        %4344 = vmatpush1.msra.mxu0 %v4324
        %4345 = vmatprep.subr.mxu0 0.0
        %4346 = vmatpush1.msra.mxu0 %v4325
        %4347 = vmatprep.subr.mxu0 0.0
        %4348 = vmatpush1.msra.mxu0 %v4326
        %4349 = vmatprep.subr.mxu0 0.0
        %4350 = vmatpush1.msra.mxu0 %v4327
        %4351 = vmatprep.subr.mxu0 0.0
        %4352 = vmatpush1.msra.mxu0 0.0
        %4353 = vmatprep.subr.mxu0 0.0
        %4354 = vmatpush1.msra.mxu0 0.0
        %4355 = vmatprep.subr.mxu0 0.0
        %4356 = vmatpush1.msra.mxu0 0.0
        %4357 = vmatprep.subr.mxu0 0.0
        %4358 = vmatpush1.msra.mxu0 0.0
        %4359 = vmatprep.subr.mxu0 0.0
        %4360 = vmatpush1.msra.mxu0 0.0
        %4361 = vmatprep.subr.mxu0 0.0
        %4362 = vmatpush1.msra.mxu0 0.0
        %4363 = vmatprep.subr.mxu0 0.0
        %4364 = vmatpush1.msra.mxu0 0.0
        %4365 = vmatprep.subr.mxu0 0.0
        %4366 = vmatpush1.msra.mxu0 0.0
        %4367 = vmatprep.subr.mxu0 0.0
        %4368 = vmatpush1.msra.mxu0 0.0
        %4369 = vmatprep.subr.mxu0 0.0
        %4370 = vmatpush1.msra.mxu0 0.0
        %4371 = vmatprep.subr.mxu0 0.0
        %4372 = vmatpush1.msra.mxu0 0.0
        %4373 = vmatprep.subr.mxu0 0.0
        %4374 = vmatpush1.msra.mxu0 0.0
        %4375 = vmatprep.subr.mxu0 0.0
        %4376 = vmatpush1.msra.mxu0 0.0
        %4377 = vmatprep.subr.mxu0 0.0
        %4378 = vmatpush1.msra.mxu0 0.0
        %4379 = vmatprep.subr.mxu0 0.0
        %4380 = vmatpush1.msra.mxu0 0.0
        %4381 = vmatprep.subr.mxu0 0.0
        %4382 = vmatpush1.msra.mxu0 0.0
        %4383 = vmatprep.subr.mxu0 0.0
        %4384 = vmatpush1.msra.mxu0 0.0
        %4385 = vmatprep.subr.mxu0 0.0
        %4386 = vmatpush1.msra.mxu0 0.0
        %4387 = vmatprep.subr.mxu0 0.0
        %4388 = vmatpush1.msra.mxu0 0.0
        %4389 = vmatprep.subr.mxu0 0.0
        %4390 = vmatpush1.msra.mxu0 0.0
        %4391 = vmatprep.subr.mxu0 0.0
        %4392 = vmatpush1.msra.mxu0 0.0
        %4393 = vmatprep.subr.mxu0 0.0
        %4394 = vmatpush1.msra.mxu0 0.0
        %4395 = vmatprep.subr.mxu0 0.0
        %4396 = vmatpush1.msra.mxu0 0.0
        %4397 = vmatprep.subr.mxu0 0.0
        %4398 = vmatpush1.msra.mxu0 0.0
        %4399 = vmatprep.mubr.f32.mxu0 0.0
        %4400 = vmatmul.mubr.f32.gmra.mrb[0].mxu0 %v4333
        %v4401 = vpop.f32.mrb[0].mxu0
        %v4402 = vadd.f32 %v4331, %v4401
        %v4403 = vpop.f32.mrb[0].mxu0
        %4404 = vdwg.mxu0
        %v4405 = vadd.f32 %v4231, %v4402
        %v4406 = vsel %vm597, %v4405, 0.0
        %4407 = vadd.xlane.f32.xlu0 %v4406
        %v4408 = vpop.xlane.xlu0 %4407
        %v4409 = vmul.f32 %v4408, %v2290
        %v4410 = vsub.f32 %v4405, %v4409
        %v4411 = vmul.f32 %v4410, %v4410
        %v4412 = vsel %vm597, %v4411, 0.0
        %4413 = vadd.xlane.f32.xlu0 %v4412
        %v4414 = vpop.xlane.xlu0 %4413
        %v4415 = vmul.f32 %v4414, %v2290
        %v4416 = vadd.f32 %v4415, 1e-05
        %v4417 = vrsqrt.pop %v4416
        %v4418 = vmul.f32 %v4410, %v4417
        %v4419 = vlaneseq
        %v4420 = vshrl.u32 %v4419, 7
        %v4421 = vsub.s32 4, %v4420
        %v4422 = vrot.slane %v2507, %v4421
        %v4423 = vmul.f32 %v4418, %v4422
        %v4424 = vlaneseq
        %v4425 = vshrl.u32 %v4424, 7
        %v4426 = vsub.s32 5, %v4425
        %v4427 = vrot.slane %v2507, %v4426
        %v4428 = vadd.f32 %v4423, %v4427
        %4429 = vst.msk [vmem:[%s489] sm:$0xff] %vm597, %v4428
        %v4430 = vld [vmem:[%s12] sm:$0x1]
        %v4431 = vld [vmem:[%s12 + $0x1] sm:$0x1]
        %v4432 = vsel %vm597, %v4428, 0.0
        %4433 = vadd.xlane.f32.xlu0 %v4432
        %v4434 = vpop.xlane.xlu0 %4433
        %v4435 = vmul.f32 %v4434, %v2290
        %v4436 = vsub.f32 %v4428, %v4435
        %v4437 = vmul.f32 %v4436, %v4436
        %v4438 = vsel %vm597, %v4437, 0.0
        %4439 = vadd.xlane.f32.xlu0 %v4438
        %v4440 = vpop.xlane.xlu0 %4439
        %v4441 = vmul.f32 %v4440, %v2290
        %v4442 = vadd.f32 %v4441, 1e-05
        %v4443 = vrsqrt.pop %v4442
        %v4444 = vmul.f32 %v4436, %v4443
        %v4445 = vlaneseq
        %v4446 = vshrl.u32 %v4445, 7
        %v4447 = vsub.s32 0, %v4446
        %v4448 = vrot.slane %v4430, %v4447
        %v4449 = vmul.f32 %v4444, %v4448
        %v4450 = vlaneseq
        %v4451 = vshrl.u32 %v4450, 7
        %v4452 = vsub.s32 0, %v4451
        %v4453 = vrot.slane %v4431, %v4452
        %v4454 = vadd.f32 %v4449, %v4453
        %v4455 = vld [vmem:[%s13] sm:$0xff]
        %v4456 = vld [vmem:[%s13 + $0x8] sm:$0xff]
        %v4457 = vld [vmem:[%s13 + $0x10] sm:$0xff]
        %v4458 = vld [vmem:[%s13 + $0x18] sm:$0xff]
        %v4460 = vsel %vm597, %v4454, 0
        %4462 = vmatprep.subr.mxu0 0.0
        %4463 = vmatpush1.msra.mxu0 %v4455
        %4464 = vmatprep.subr.mxu0 0.0
        %4465 = vmatpush1.msra.mxu0 %v4456
        %4466 = vmatprep.subr.mxu0 0.0
        %4467 = vmatpush1.msra.mxu0 %v4457
        %4468 = vmatprep.subr.mxu0 0.0
        %4469 = vmatpush1.msra.mxu0 %v4458
        %4470 = vmatprep.subr.mxu0 0.0
        %4471 = vmatpush1.msra.mxu0 0.0
        %4472 = vmatprep.subr.mxu0 0.0
        %4473 = vmatpush1.msra.mxu0 0.0
        %4474 = vmatprep.subr.mxu0 0.0
        %4475 = vmatpush1.msra.mxu0 0.0
        %4476 = vmatprep.subr.mxu0 0.0
        %4477 = vmatpush1.msra.mxu0 0.0
        %4478 = vmatprep.subr.mxu0 0.0
        %4479 = vmatpush1.msra.mxu0 0.0
        %4480 = vmatprep.subr.mxu0 0.0
        %4481 = vmatpush1.msra.mxu0 0.0
        %4482 = vmatprep.subr.mxu0 0.0
        %4483 = vmatpush1.msra.mxu0 0.0
        %4484 = vmatprep.subr.mxu0 0.0
        %4485 = vmatpush1.msra.mxu0 0.0
        %4486 = vmatprep.subr.mxu0 0.0
        %4487 = vmatpush1.msra.mxu0 0.0
        %4488 = vmatprep.subr.mxu0 0.0
        %4489 = vmatpush1.msra.mxu0 0.0
        %4490 = vmatprep.subr.mxu0 0.0
        %4491 = vmatpush1.msra.mxu0 0.0
        %4492 = vmatprep.subr.mxu0 0.0
        %4493 = vmatpush1.msra.mxu0 0.0
        %4494 = vmatprep.subr.mxu0 0.0
        %4495 = vmatpush1.msra.mxu0 0.0
        %4496 = vmatprep.subr.mxu0 0.0
        %4497 = vmatpush1.msra.mxu0 0.0
        %4498 = vmatprep.subr.mxu0 0.0
        %4499 = vmatpush1.msra.mxu0 0.0
        %4500 = vmatprep.subr.mxu0 0.0
        %4501 = vmatpush1.msra.mxu0 0.0
        %4502 = vmatprep.subr.mxu0 0.0
        %4503 = vmatpush1.msra.mxu0 0.0
        %4504 = vmatprep.subr.mxu0 0.0
        %4505 = vmatpush1.msra.mxu0 0.0
        %4506 = vmatprep.subr.mxu0 0.0
        %4507 = vmatpush1.msra.mxu0 0.0
        %4508 = vmatprep.subr.mxu0 0.0
        %4509 = vmatpush1.msra.mxu0 0.0
        %4510 = vmatprep.subr.mxu0 0.0
        %4511 = vmatpush1.msra.mxu0 0.0
        %4512 = vmatprep.subr.mxu0 0.0
        %4513 = vmatpush1.msra.mxu0 0.0
        %4514 = vmatprep.subr.mxu0 0.0
        %4515 = vmatpush1.msra.mxu0 0.0
        %4516 = vmatprep.subr.mxu0 0.0
        %4517 = vmatpush1.msra.mxu0 0.0
        %4518 = vmatprep.subr.mxu0 0.0
        %4519 = vmatpush1.msra.mxu0 0.0
        %4520 = vmatprep.subr.mxu0 0.0
        %4521 = vmatpush1.msra.mxu0 0.0
        %4522 = vmatprep.subr.mxu0 0.0
        %4523 = vmatpush1.msra.mxu0 0.0
        %4524 = vmatprep.subr.mxu0 0.0
        %4525 = vmatpush1.msra.mxu0 0.0
        %4526 = vmatprep.mubr.f32.mxu0 0.0
        %4527 = vmatmul.mubr.f32.gmra.mrb[0].mxu0 %v4460
        %v4528 = vpop.f32.mrb[0].mxu0
        %v4529 = vadd.f32 0.0, %v4528
        %v4530 = vpop.f32.mrb[0].mxu0
        %4531 = vdwg.mxu0
        %4532 = vst [vmem:[%s496] sm:$0xff] %v4529
        %s4533 = sand.u32 %s340, 1
        %s4534 = scalar_lea.sflag [#allocation3], %s4533
        %s4535 = sand.u32 %s340, 1
        %s4536 = smul.addr %s4535, 8
        %s4537 = scalar_lea.vmem [#allocation2], %s4536
        %s4538 = sand.u32 %s366, 1
        %s4539 = scalar_lea.sflag [#allocation5], %s4538
        %s4540 = sand.u32 %s366, 1
        %s4541 = smul.addr %s4540, 8
        %s4542 = scalar_lea.vmem [#allocation4], %s4541
        // Predicated region
        $region77: #{categorical_transformer_forward.1} parent=75 // pred_check
          %p4543 = pneg %p350
        $region78: #{categorical_transformer_forward.1} parent=75 // pred_check_branch
          %4545 = sbr.rel (%p4543) target = $region80
        $region79: #{categorical_transformer_forward.1} parent=75 // pred_region
          %s4547 = ssub.s32 128, 128
          %4548 = vsyncadd %s4534, %s4547
          %s4549 = smul.addr %s33, 128
          %s4550 = scalar_lea.hbm %s14, %s4549
          %s4552 = sshll.u32 %s4537, 4
          %s4553 = int_to_ptr.vmem [resolvable:$true] %s4552
          %4555 = dma.vmem_to_hbm [thread:$0]  %s4553, 128, %s4550, %s4534
        $region80: #{categorical_transformer_forward.1} parent=75 // pred_fallthru
          _
        // Predicated region
        $region81: #{categorical_transformer_forward.1} parent=75 // pred_check
          %p4556 = pneg %p376
        $region82: #{categorical_transformer_forward.1} parent=75 // pred_check_branch
          %4558 = sbr.rel (%p4556) target = $region84
        $region83: #{categorical_transformer_forward.1} parent=75 // pred_region
          %s4560 = ssub.s32 128, 128
          %4561 = vsyncadd %s4539, %s4560
          %s4562 = smul.addr %s33, 128
          %s4563 = scalar_lea.hbm %s15, %s4562
          %s4565 = sshll.u32 %s4542, 4
          %s4566 = int_to_ptr.vmem [resolvable:$true] %s4565
          %4568 = dma.vmem_to_hbm [thread:$0]  %s4566, 128, %s4563, %s4539
        $region84: #{categorical_transformer_forward.1} parent=75 // pred_fallthru
          _
      $region76: #{categorical_transformer_forward.1} parent=5 // pred_fallthru
        _
      %p4569 = scmp.le.s32.totalorder 2, %s28
      // Predicated region
      $region85: #{categorical_transformer_forward.1} parent=5 // pred_check
        %p4570 = pneg %p4569
      $region86: #{categorical_transformer_forward.1} parent=5 // pred_check_branch
        %4572 = sbr.rel (%p4570) target = $region88
      $region87: #{categorical_transformer_forward.1} parent=5 // pred_region
        %s4573 = ssub.s32 %s28, 2
        // Predicated region
        $region89: #{categorical_transformer_forward.1} parent=87 // pred_check
          %p4574 = pneg %p356
        $region90: #{categorical_transformer_forward.1} parent=87 // pred_check_branch
          %4576 = sbr.rel (%p4574) target = $region92
        $region91: #{categorical_transformer_forward.1} parent=87 // pred_region
          %s4577 = sand.u32 %s341, 1
          %s4578 = scalar_lea.sflag [#allocation3], %s4577
          %s4579 = sand.u32 %s341, 1
          %s4580 = smul.addr %s4579, 8
          %s4581 = scalar_lea.vmem [#allocation2], %s4580
          %4582 = dma.done %s4578, 128
        $region92: #{categorical_transformer_forward.1} parent=87 // pred_fallthru
          _
        // Predicated region
        $region93: #{categorical_transformer_forward.1} parent=87 // pred_check
          %p4583 = pneg %p382
        $region94: #{categorical_transformer_forward.1} parent=87 // pred_check_branch
          %4585 = sbr.rel (%p4583) target = $region96
        $region95: #{categorical_transformer_forward.1} parent=87 // pred_region
          %s4586 = sand.u32 %s367, 1
          %s4587 = scalar_lea.sflag [#allocation5], %s4586
          %s4588 = sand.u32 %s367, 1
          %s4589 = smul.addr %s4588, 8
          %s4590 = scalar_lea.vmem [#allocation4], %s4589
          %4591 = dma.done %s4587, 128
        $region96: #{categorical_transformer_forward.1} parent=87 // pred_fallthru
          _
      $region88: #{categorical_transformer_forward.1} parent=5 // pred_fallthru
        _
    $region6: #{categorical_transformer_forward.1} parent=1 // loop_footer
      %s32 = sadd.s32 1, %s28
    $region7: #{categorical_transformer_forward.1} parent=1 // loop_footer_branch
      %27 = sbr.rel target = $region3
    $region8: #{categorical_transformer_forward.1} parent=1 // loop_exit
      _
    %4592 = vsyncpa [#allocation3], 1
    %s4593 = scalar_lea.sflag [#allocation3], 1
    %4594 = vsyncpa %s4593, 1
    %4595 = vsyncpa [#allocation5], 1
    %s4596 = scalar_lea.sflag [#allocation5], 1
    %4597 = vsyncpa %s4596, 1

</llo_original>
